<compile_context>
chip_gen: v7x
topology: tpu7x:2x2x1
jax: 0.10.0
libtpu: 0.0.40
codegen_flags: <defaults>
</compile_context>

<pallas_src>
import jax
import jax.numpy as jnp
from jax.experimental import pallas as pl
from jax.experimental.pallas import tpu as pltpu


# ------------------------------------------------------------------
# Fused kernel:  upsample(x1) -> pad -> concat(x2, .) -> (conv3x3+ReLU) x 2
# One batch element per grid step; all intermediates live in VMEM.
# ------------------------------------------------------------------
def _make_up_kernel(H1, W1, C1, H2, W2, C2, Cout, mxu_dtype=jnp.float32):
    Cin = C1 + C2
    HW1 = H1 * W1
    HW2 = H2 * W2

    def reflect_pad_1px(x):
        # (H2, W2, c) -> (H2+2, W2+2, c); PyTorch padding_mode='reflect'
        xh = jnp.concatenate([x[1:2], x, x[H2 - 2:H2 - 1]], axis=0)
        return jnp.concatenate([xh[:, 1:2, :], xh, xh[:, W2 - 2:W2 - 1, :]],
                               axis=1)

    def conv3x3_relu(x, w_flat, b, cin):
        # single im2col matmul: (H2*W2, 9*cin) @ (9*cin, Cout)
        xp = reflect_pad_1px(x)
        cols = [xp[ky:ky + H2, kx:kx + W2, :].reshape(HW2, cin)
                for ky in range(3) for kx in range(3)]
        patches = jnp.concatenate(cols, axis=-1)          # (HW2, 9*cin)
        y = jnp.dot(patches.astype(mxu_dtype), w_flat.astype(mxu_dtype),
                    preferred_element_type=jnp.float32)
        return jnp.maximum(y + b, 0.0)                    # (HW2, Cout), f32

    def kernel(x1_ref, x2_ref, up_ref, w1_ref, b1_ref, w2_ref, b2_ref, o_ref):
        # x1_ref: (1, H1, W1, C1)   x2_ref: (1, H2, W2, C2)
        # up_ref: (H2*W2, H1*W1)    w*_ref: flattened conv weights
        x1 = x1_ref[0].reshape(HW1, C1).astype(jnp.float32)
        # bilinear(align_corners=True) upsample + zero-pad == one matmul
        x1u = jnp.dot(up_ref[...], x1, preferred_element_type=jnp.float32)
        x1u = x1u.reshape(H2, W2, C1)
        x2 = x2_ref[0].astype(jnp.float32)
        cat = jnp.concatenate([x2, x1u], axis=-1)         # (H2, W2, Cin)

        y1 = conv3x3_relu(cat, w1_ref[...], b1_ref[0].astype(jnp.float32), Cin)
        y1 = y1.reshape(H2, W2, Cout)
        y2 = conv3x3_relu(y1, w2_ref[...], b2_ref[0].astype(jnp.float32), Cout)
        o_ref[0] = y2.astype(o_ref.dtype)                 # (HW2, Cout)

    return kernel


def _bilinear_matrix(out_size, in_size):
    # 1-D interpolation matrix of nn.Upsample(mode='bilinear', align_corners=True)
    if out_size == 1 or in_size == 1:
        src = jnp.zeros((out_size,), jnp.float32)
    else:
        src = jnp.arange(out_size, dtype=jnp.float32) * ((in_size - 1) / (out_size - 1))
    lo = jnp.clip(jnp.floor(src).astype(jnp.int32), 0, in_size - 1)
    hi = jnp.minimum(lo + 1, in_size - 1)
    w_hi = src - lo.astype(jnp.float32)
    w_lo = 1.0 - w_hi
    return (w_lo[:, None] * jax.nn.one_hot(lo, in_size, dtype=jnp.float32)
            + w_hi[:, None] * jax.nn.one_hot(hi, in_size, dtype=jnp.float32))


def up_forward(x1_nchw, x2_nchw, params, mxu_dtype=jnp.float32):
    """PyTorch `up.forward(x1, x2)`: NCHW in, NCHW out."""
    x1 = jnp.transpose(x1_nchw, (0, 2, 3, 1))             # NHWC
    x2 = jnp.transpose(x2_nchw, (0, 2, 3, 1))
    N, H1, W1, C1 = x1.shape
    _, H2, W2, C2 = x2.shape
    Cin = C1 + C2
    w1, b1, w2, b2 = params["w1"], params["b1"], params["w2"], params["b2"]
    Cout = w1.shape[-1]
    assert w1.shape == (3, 3, Cin, Cout) and w2.shape == (3, 3, Cout, Cout)

    # Fuse Upsample(2x, align_corners=True) and F.pad(zeros) into one matrix.
    Ho, Wo = 2 * H1, 2 * W1
    dY, dX = H2 - Ho, W2 - Wo                # standard UNet usage: dY, dX >= 0
    uh = jnp.pad(_bilinear_matrix(Ho, H1), ((dY // 2, dY - dY // 2), (0, 0)))
    uw = jnp.pad(_bilinear_matrix(Wo, W1), ((dX // 2, dX - dX // 2), (0, 0)))
    up_mat = jnp.kron(uh, uw)                              # (H2*W2, H1*W1)

    w1f = w1.reshape(9 * Cin, Cout)
    w2f = w2.reshape(9 * Cout, Cout)
    b1r = b1.reshape(1, Cout)
    b2r = b2.reshape(1, Cout)

    kernel = _make_up_kernel(H1, W1, C1, H2, W2, C2, Cout, mxu_dtype)
    flops = 2 * N * (H2 * W2) * (H1 * W1 * C1 + 9 * Cin * Cout + 9 * Cout * Cout)
    bytes_acc = 4 * (x1.size + x2.size + up_mat.size + w1f.size + w2f.size
                     + N * H2 * W2 * Cout)

    out = pl.pallas_call(
        kernel,
        out_shape=jax.ShapeDtypeStruct((N, H2 * W2, Cout), x1.dtype),
        grid=(N,),
        in_specs=[
            pl.BlockSpec((1, H1, W1, C1), lambda n: (n, 0, 0, 0)),
            pl.BlockSpec((1, H2, W2, C2), lambda n: (n, 0, 0, 0)),
            pl.BlockSpec((H2 * W2, H1 * W1), lambda n: (0, 0)),
            pl.BlockSpec((9 * Cin, Cout), lambda n: (0, 0)),
            pl.BlockSpec((1, Cout), lambda n: (0, 0)),
            pl.BlockSpec((9 * Cout, Cout), lambda n: (0, 0)),
            pl.BlockSpec((1, Cout), lambda n: (0, 0)),
        ],
        out_specs=pl.BlockSpec((1, H2 * W2, Cout), lambda n: (n, 0, 0)),
        compiler_params=pltpu.CompilerParams(dimension_semantics=("parallel",)),
        cost_estimate=pl.CostEstimate(flops=int(flops), transcendentals=0,
                                      bytes_accessed=int(bytes_acc)),
    )(x1, x2, up_mat, w1f, b1r, w2f, b2r)

    y = out.reshape(N, H2, W2, Cout)
    return jnp.transpose(y, (0, 3, 1, 2))                  # back to NCHW


# ------------------------------------------------------------------
# Parameter init (shapes match nn.Conv2d(in_ch, out_ch, 3), HWIO layout)
# ------------------------------------------------------------------
def init_up_params(key, in_ch, out_ch, dtype=jnp.float32):
    k1, k2, k3, k4 = jax.random.split(key, 4)
    lim1 = 1.0 / (in_ch * 9) ** 0.5
    lim2 = 1.0 / (out_ch * 9) ** 0.5
    return {
        "w1": jax.random.uniform(k1, (3, 3, in_ch, out_ch), dtype, -lim1, lim1),
        "b1": jax.random.uniform(k2, (out_ch,), dtype, -lim1, lim1),
        "w2": jax.random.uniform(k3, (3, 3, out_ch, out_ch), dtype, -lim2, lim2),
        "b2": jax.random.uniform(k4, (out_ch,), dtype, -lim2, lim2),
    }


# ------------------------------------------------------------------
# Pure-JAX reference (independent: gather-based bilinear + lax.conv)
# ------------------------------------------------------------------
def up_forward_ref(x1_nchw, x2_nchw, params):
    x1 = jnp.transpose(x1_nchw, (0, 2, 3, 1))
    x2 = jnp.transpose(x2_nchw, (0, 2, 3, 1))
    N, H1, W1, C1 = x1.shape
    _, H2, W2, C2 = x2.shape
    Ho, Wo = 2 * H1, 2 * W1
    ys = jnp.arange(Ho, dtype=jnp.float32) * ((H1 - 1) / (Ho - 1))
    xs = jnp.arange(Wo, dtype=jnp.float32) * ((W1 - 1) / (Wo - 1))
    y0 = jnp.clip(jnp.floor(ys).astype(jnp.int32), 0, H1 - 1)
    x0 = jnp.clip(jnp.floor(xs).astype(jnp.int32), 0, W1 - 1)
    y1i = jnp.minimum(y0 + 1, H1 - 1)
    x1i = jnp.minimum(x0 + 1, W1 - 1)
    wy = (ys - y0.astype(jnp.float32))[None, :, None, None]
    wx = (xs - x0.astype(jnp.float32))[None, None, :, None]

    def g(yi, xi):
        return x1[:, yi][:, :, xi]

    up = ((1 - wy) * (1 - wx) * g(y0, x0) + (1 - wy) * wx * g(y0, x1i)
          + wy * (1 - wx) * g(y1i, x0) + wy * wx * g(y1i, x1i))
    dY, dX = H2 - Ho, W2 - Wo
    up = jnp.pad(up, ((0, 0), (dY // 2, dY - dY // 2),
                      (dX // 2, dX - dX // 2), (0, 0)))
    x = jnp.concatenate([x2, up], axis=-1)

    def conv(v, w, b):
        vp = jnp.pad(v, ((0, 0), (1, 1), (1, 1), (0, 0)), mode="reflect")
        y = jax.lax.conv_general_dilated(
            vp, w, window_strides=(1, 1), padding="VALID",
            dimension_numbers=("NHWC", "HWIO", "NHWC"))
        return jnp.maximum(y + b, 0.0)

    x = conv(x, params["w1"], params["b1"])
    x = conv(x, params["w2"], params["b2"])
    return jnp.transpose(x, (0, 3, 1, 2))


if __name__ == "__main__":
    key = jax.random.PRNGKey(0)
    k1, k2, kp = jax.random.split(key, 3)
    N, C1, C2, out_ch = 2, 4, 4, 8
    in_ch = C1 + C2                       # channels after concat([x2, up(x1)])
    x1 = jax.random.normal(k1, (N, C1, 8, 8), jnp.float32)    # decoder feature (NCHW)
    x2 = jax.random.normal(k2, (N, C2, 16, 16), jnp.float32)  # skip connection (NCHW)
    params = init_up_params(kp, in_ch, out_ch)

    out = jax.block_until_ready(up_forward(x1, x2, params))
    ref = up_forward_ref(x1, x2, params)
    assert out.shape == (N, out_ch, 16, 16), out.shape
    err = float(jnp.max(jnp.abs(out - ref)))
    assert err < 5e-3, f"mismatch vs reference, max abs err = {err}"
    print("KERNEL_OK")
</pallas_src>

<mosaic_0001>
module attributes {stable_mosaic.version = 11 : i64} {
  func.func @kernel(%arg0: i32, %arg1: memref<1x8x8x4xf32, #tpu.memory_space<vmem>>, %arg2: memref<1x16x16x4xf32, #tpu.memory_space<vmem>>, %arg3: memref<256x64xf32, #tpu.memory_space<vmem>>, %arg4: memref<72x8xf32, #tpu.memory_space<vmem>>, %arg5: memref<1x8xf32, #tpu.memory_space<vmem>>, %arg6: memref<72x8xf32, #tpu.memory_space<vmem>>, %arg7: memref<1x8xf32, #tpu.memory_space<vmem>>, %arg8: memref<1x256x8xf32, #tpu.memory_space<vmem>>) attributes {dimension_semantics = [#tpu.dimension_semantics<parallel>], iteration_bounds = array<i64: 2>, scalar_prefetch = 0 : i64, scratch_operands = 0 : i64, tpu.core_type = #tpu.core_type<tc>, window_params = [{transform_indices = @transform_0, window_bounds = array<i64: 1, 8, 8, 4>}, {transform_indices = @transform_1, window_bounds = array<i64: 1, 16, 16, 4>}, {pipeline_mode = #tpu.pipeline_mode<synchronous>, transform_indices = @transform_2, window_bounds = array<i64: 256, 64>}, {pipeline_mode = #tpu.pipeline_mode<synchronous>, transform_indices = @transform_3, window_bounds = array<i64: 72, 8>}, {pipeline_mode = #tpu.pipeline_mode<synchronous>, transform_indices = @transform_4, window_bounds = array<i64: 1, 8>}, {pipeline_mode = #tpu.pipeline_mode<synchronous>, transform_indices = @transform_5, window_bounds = array<i64: 72, 8>}, {pipeline_mode = #tpu.pipeline_mode<synchronous>, transform_indices = @transform_6, window_bounds = array<i64: 1, 8>}, {transform_indices = @transform_7, window_bounds = array<i64: 1, 256, 8>}]} {
    %c0 = arith.constant 0 : index
    %c0_0 = arith.constant 0 : index
    %c0_1 = arith.constant 0 : index
    %c0_2 = arith.constant 0 : index
    %0 = vector.load %arg1[%c0, %c0_0, %c0_1, %c0_2] : memref<1x8x8x4xf32, #tpu.memory_space<vmem>>, vector<1x8x8x4xf32>
    %1 = vector.shape_cast %0 : vector<1x8x8x4xf32> to vector<8x8x4xf32>
    %2 = vector.shape_cast %1 : vector<8x8x4xf32> to vector<64x4xf32>
    %c0_3 = arith.constant 0 : index
    %c0_4 = arith.constant 0 : index
    %3 = vector.load %arg3[%c0_3, %c0_4] : memref<256x64xf32, #tpu.memory_space<vmem>>, vector<256x64xf32>
    %cst = arith.constant dense<0.000000e+00> : vector<256x4xf32>
    %4 = tpu.matmul %3, %2, %cst {dimension_numbers = #tpu.dot_dimension_numbers<[1], [0], [0], [1], [0, 0, 1, 1], [], []>} : vector<256x64xf32>, vector<64x4xf32>, vector<256x4xf32> -> vector<256x4xf32>
    %5 = vector.shape_cast %4 : vector<256x4xf32> to vector<16x16x4xf32>
    %c0_5 = arith.constant 0 : index
    %c0_6 = arith.constant 0 : index
    %c0_7 = arith.constant 0 : index
    %c0_8 = arith.constant 0 : index
    %6 = vector.load %arg2[%c0_5, %c0_6, %c0_7, %c0_8] : memref<1x16x16x4xf32, #tpu.memory_space<vmem>>, vector<1x16x16x4xf32>
    %7 = vector.shape_cast %6 : vector<1x16x16x4xf32> to vector<16x16x4xf32>
    %8 = tpu.concatenate %7, %5 in 2 : vector<16x16x4xf32>, vector<16x16x4xf32> -> vector<16x16x8xf32>
    %c0_9 = arith.constant 0 : index
    %c0_10 = arith.constant 0 : index
    %9 = vector.load %arg4[%c0_9, %c0_10] : memref<72x8xf32, #tpu.memory_space<vmem>>, vector<72x8xf32>
    %c0_11 = arith.constant 0 : index
    %c0_12 = arith.constant 0 : index
    %10 = vector.load %arg5[%c0_11, %c0_12] : memref<1x8xf32, #tpu.memory_space<vmem>>, vector<1x8xf32>
    %11 = vector.shape_cast %10 : vector<1x8xf32> to vector<8xf32>
    %12 = vector.extract_strided_slice %8 {offsets = [1, 0, 0], sizes = [1, 16, 8], strides = [1, 1, 1]} : vector<16x16x8xf32> to vector<1x16x8xf32>
    %13 = vector.extract_strided_slice %8 {offsets = [14, 0, 0], sizes = [1, 16, 8], strides = [1, 1, 1]} : vector<16x16x8xf32> to vector<1x16x8xf32>
    %14 = tpu.concatenate %12, %8, %13 in 0 : vector<1x16x8xf32>, vector<16x16x8xf32>, vector<1x16x8xf32> -> vector<18x16x8xf32>
    %15 = vector.extract_strided_slice %14 {offsets = [0, 1, 0], sizes = [18, 1, 8], strides = [1, 1, 1]} : vector<18x16x8xf32> to vector<18x1x8xf32>
    %16 = vector.extract_strided_slice %14 {offsets = [0, 14, 0], sizes = [18, 1, 8], strides = [1, 1, 1]} : vector<18x16x8xf32> to vector<18x1x8xf32>
    %17 = tpu.concatenate %15, %14, %16 in 1 : vector<18x1x8xf32>, vector<18x16x8xf32>, vector<18x1x8xf32> -> vector<18x18x8xf32>
    %18 = vector.extract_strided_slice %17 {offsets = [0, 0, 0], sizes = [16, 16, 8], strides = [1, 1, 1]} : vector<18x18x8xf32> to vector<16x16x8xf32>
    %19 = vector.shape_cast %18 : vector<16x16x8xf32> to vector<256x8xf32>
    %20 = vector.extract_strided_slice %17 {offsets = [0, 1, 0], sizes = [16, 16, 8], strides = [1, 1, 1]} : vector<18x18x8xf32> to vector<16x16x8xf32>
    %21 = vector.shape_cast %20 : vector<16x16x8xf32> to vector<256x8xf32>
    %22 = vector.extract_strided_slice %17 {offsets = [0, 2, 0], sizes = [16, 16, 8], strides = [1, 1, 1]} : vector<18x18x8xf32> to vector<16x16x8xf32>
    %23 = vector.shape_cast %22 : vector<16x16x8xf32> to vector<256x8xf32>
    %24 = vector.extract_strided_slice %17 {offsets = [1, 0, 0], sizes = [16, 16, 8], strides = [1, 1, 1]} : vector<18x18x8xf32> to vector<16x16x8xf32>
    %25 = vector.shape_cast %24 : vector<16x16x8xf32> to vector<256x8xf32>
    %26 = vector.extract_strided_slice %17 {offsets = [1, 1, 0], sizes = [16, 16, 8], strides = [1, 1, 1]} : vector<18x18x8xf32> to vector<16x16x8xf32>
    %27 = vector.shape_cast %26 : vector<16x16x8xf32> to vector<256x8xf32>
    %28 = vector.extract_strided_slice %17 {offsets = [1, 2, 0], sizes = [16, 16, 8], strides = [1, 1, 1]} : vector<18x18x8xf32> to vector<16x16x8xf32>
    %29 = vector.shape_cast %28 : vector<16x16x8xf32> to vector<256x8xf32>
    %30 = vector.extract_strided_slice %17 {offsets = [2, 0, 0], sizes = [16, 16, 8], strides = [1, 1, 1]} : vector<18x18x8xf32> to vector<16x16x8xf32>
    %31 = vector.shape_cast %30 : vector<16x16x8xf32> to vector<256x8xf32>
    %32 = vector.extract_strided_slice %17 {offsets = [2, 1, 0], sizes = [16, 16, 8], strides = [1, 1, 1]} : vector<18x18x8xf32> to vector<16x16x8xf32>
    %33 = vector.shape_cast %32 : vector<16x16x8xf32> to vector<256x8xf32>
    %34 = vector.extract_strided_slice %17 {offsets = [2, 2, 0], sizes = [16, 16, 8], strides = [1, 1, 1]} : vector<18x18x8xf32> to vector<16x16x8xf32>
    %35 = vector.shape_cast %34 : vector<16x16x8xf32> to vector<256x8xf32>
    %36 = tpu.concatenate %19, %21, %23, %25, %27, %29, %31, %33, %35 in 1 : vector<256x8xf32>, vector<256x8xf32>, vector<256x8xf32>, vector<256x8xf32>, vector<256x8xf32>, vector<256x8xf32>, vector<256x8xf32>, vector<256x8xf32>, vector<256x8xf32> -> vector<256x72xf32>
    %cst_13 = arith.constant dense<0.000000e+00> : vector<256x8xf32>
    %37 = tpu.matmul %36, %9, %cst_13 {dimension_numbers = #tpu.dot_dimension_numbers<[1], [0], [0], [1], [0, 0, 1, 1], [], []>} : vector<256x72xf32>, vector<72x8xf32>, vector<256x8xf32> -> vector<256x8xf32>
    %38 = vector.shape_cast %11 : vector<8xf32> to vector<1x8xf32>
    %39 = vector.broadcast %38 : vector<1x8xf32> to vector<256x8xf32>
    %40 = arith.addf %37, %39 : vector<256x8xf32>
    %cst_14 = arith.constant 0.000000e+00 : f32
    %41 = vector.broadcast %cst_14 : f32 to vector<256x8xf32>
    %42 = arith.maximumf %40, %41 : vector<256x8xf32>
    %43 = vector.shape_cast %42 : vector<256x8xf32> to vector<16x16x8xf32>
    %c0_15 = arith.constant 0 : index
    %c0_16 = arith.constant 0 : index
    %44 = vector.load %arg6[%c0_15, %c0_16] : memref<72x8xf32, #tpu.memory_space<vmem>>, vector<72x8xf32>
    %c0_17 = arith.constant 0 : index
    %c0_18 = arith.constant 0 : index
    %45 = vector.load %arg7[%c0_17, %c0_18] : memref<1x8xf32, #tpu.memory_space<vmem>>, vector<1x8xf32>
    %46 = vector.shape_cast %45 : vector<1x8xf32> to vector<8xf32>
    %47 = vector.extract_strided_slice %43 {offsets = [1, 0, 0], sizes = [1, 16, 8], strides = [1, 1, 1]} : vector<16x16x8xf32> to vector<1x16x8xf32>
    %48 = vector.extract_strided_slice %43 {offsets = [14, 0, 0], sizes = [1, 16, 8], strides = [1, 1, 1]} : vector<16x16x8xf32> to vector<1x16x8xf32>
    %49 = tpu.concatenate %47, %43, %48 in 0 : vector<1x16x8xf32>, vector<16x16x8xf32>, vector<1x16x8xf32> -> vector<18x16x8xf32>
    %50 = vector.extract_strided_slice %49 {offsets = [0, 1, 0], sizes = [18, 1, 8], strides = [1, 1, 1]} : vector<18x16x8xf32> to vector<18x1x8xf32>
    %51 = vector.extract_strided_slice %49 {offsets = [0, 14, 0], sizes = [18, 1, 8], strides = [1, 1, 1]} : vector<18x16x8xf32> to vector<18x1x8xf32>
    %52 = tpu.concatenate %50, %49, %51 in 1 : vector<18x1x8xf32>, vector<18x16x8xf32>, vector<18x1x8xf32> -> vector<18x18x8xf32>
    %53 = vector.extract_strided_slice %52 {offsets = [0, 0, 0], sizes = [16, 16, 8], strides = [1, 1, 1]} : vector<18x18x8xf32> to vector<16x16x8xf32>
    %54 = vector.shape_cast %53 : vector<16x16x8xf32> to vector<256x8xf32>
    %55 = vector.extract_strided_slice %52 {offsets = [0, 1, 0], sizes = [16, 16, 8], strides = [1, 1, 1]} : vector<18x18x8xf32> to vector<16x16x8xf32>
    %56 = vector.shape_cast %55 : vector<16x16x8xf32> to vector<256x8xf32>
    %57 = vector.extract_strided_slice %52 {offsets = [0, 2, 0], sizes = [16, 16, 8], strides = [1, 1, 1]} : vector<18x18x8xf32> to vector<16x16x8xf32>
    %58 = vector.shape_cast %57 : vector<16x16x8xf32> to vector<256x8xf32>
    %59 = vector.extract_strided_slice %52 {offsets = [1, 0, 0], sizes = [16, 16, 8], strides = [1, 1, 1]} : vector<18x18x8xf32> to vector<16x16x8xf32>
    %60 = vector.shape_cast %59 : vector<16x16x8xf32> to vector<256x8xf32>
    %61 = vector.extract_strided_slice %52 {offsets = [1, 1, 0], sizes = [16, 16, 8], strides = [1, 1, 1]} : vector<18x18x8xf32> to vector<16x16x8xf32>
    %62 = vector.shape_cast %61 : vector<16x16x8xf32> to vector<256x8xf32>
    %63 = vector.extract_strided_slice %52 {offsets = [1, 2, 0], sizes = [16, 16, 8], strides = [1, 1, 1]} : vector<18x18x8xf32> to vector<16x16x8xf32>
    %64 = vector.shape_cast %63 : vector<16x16x8xf32> to vector<256x8xf32>
    %65 = vector.extract_strided_slice %52 {offsets = [2, 0, 0], sizes = [16, 16, 8], strides = [1, 1, 1]} : vector<18x18x8xf32> to vector<16x16x8xf32>
    %66 = vector.shape_cast %65 : vector<16x16x8xf32> to vector<256x8xf32>
    %67 = vector.extract_strided_slice %52 {offsets = [2, 1, 0], sizes = [16, 16, 8], strides = [1, 1, 1]} : vector<18x18x8xf32> to vector<16x16x8xf32>
    %68 = vector.shape_cast %67 : vector<16x16x8xf32> to vector<256x8xf32>
    %69 = vector.extract_strided_slice %52 {offsets = [2, 2, 0], sizes = [16, 16, 8], strides = [1, 1, 1]} : vector<18x18x8xf32> to vector<16x16x8xf32>
    %70 = vector.shape_cast %69 : vector<16x16x8xf32> to vector<256x8xf32>
    %71 = tpu.concatenate %54, %56, %58, %60, %62, %64, %66, %68, %70 in 1 : vector<256x8xf32>, vector<256x8xf32>, vector<256x8xf32>, vector<256x8xf32>, vector<256x8xf32>, vector<256x8xf32>, vector<256x8xf32>, vector<256x8xf32>, vector<256x8xf32> -> vector<256x72xf32>
    %cst_19 = arith.constant dense<0.000000e+00> : vector<256x8xf32>
    %72 = tpu.matmul %71, %44, %cst_19 {dimension_numbers = #tpu.dot_dimension_numbers<[1], [0], [0], [1], [0, 0, 1, 1], [], []>} : vector<256x72xf32>, vector<72x8xf32>, vector<256x8xf32> -> vector<256x8xf32>
    %73 = vector.shape_cast %46 : vector<8xf32> to vector<1x8xf32>
    %74 = vector.broadcast %73 : vector<1x8xf32> to vector<256x8xf32>
    %75 = arith.addf %72, %74 : vector<256x8xf32>
    %cst_20 = arith.constant 0.000000e+00 : f32
    %76 = vector.broadcast %cst_20 : f32 to vector<256x8xf32>
    %77 = arith.maximumf %75, %76 : vector<256x8xf32>
    %c0_21 = arith.constant 0 : index
    %c0_22 = arith.constant 0 : index
    %c0_23 = arith.constant 0 : index
    %78 = vector.load %arg8[%c0_21, %c0_22, %c0_23] : memref<1x256x8xf32, #tpu.memory_space<vmem>>, vector<1x256x8xf32>
    %79 = vector.shape_cast %78 : vector<1x256x8xf32> to vector<256x8xf32>
    %80 = vector.shape_cast %77 : vector<256x8xf32> to vector<1x256x8xf32>
    tpu.vector_store %arg8[%c0_21, %c0_22, %c0_23], %80 {strides = array<i32>} : memref<1x256x8xf32, #tpu.memory_space<vmem>>, vector<1x256x8xf32>,
    return
  }
  func.func @transform_0(%arg0: i32) -> (i32, i32, i32, i32) {
    %c0_i32 = arith.constant 0 : i32
    %c0_i32_0 = arith.constant 0 : i32
    %c0_i32_1 = arith.constant 0 : i32
    %c0_i32_2 = arith.constant 0 : i32
    return %arg0, %c0_i32, %c0_i32_0, %c0_i32_1 : i32, i32, i32, i32
  }
  func.func @transform_1(%arg0: i32) -> (i32, i32, i32, i32) {
    %c0_i32 = arith.constant 0 : i32
    %c0_i32_0 = arith.constant 0 : i32
    %c0_i32_1 = arith.constant 0 : i32
    %c0_i32_2 = arith.constant 0 : i32
    return %arg0, %c0_i32, %c0_i32_0, %c0_i32_1 : i32, i32, i32, i32
  }
  func.func @transform_2(%arg0: i32) -> (i32, i32) {
    %c0_i32 = arith.constant 0 : i32
    %c0_i32_0 = arith.constant 0 : i32
    %c0_i32_1 = arith.constant 0 : i32
    return %c0_i32, %c0_i32_0 : i32, i32
  }
  func.func @transform_3(%arg0: i32) -> (i32, i32) {
    %c0_i32 = arith.constant 0 : i32
    %c0_i32_0 = arith.constant 0 : i32
    %c0_i32_1 = arith.constant 0 : i32
    return %c0_i32, %c0_i32_0 : i32, i32
  }
  func.func @transform_4(%arg0: i32) -> (i32, i32) {
    %c0_i32 = arith.constant 0 : i32
    %c0_i32_0 = arith.constant 0 : i32
    %c0_i32_1 = arith.constant 0 : i32
    return %c0_i32, %c0_i32_0 : i32, i32
  }
  func.func @transform_5(%arg0: i32) -> (i32, i32) {
    %c0_i32 = arith.constant 0 : i32
    %c0_i32_0 = arith.constant 0 : i32
    %c0_i32_1 = arith.constant 0 : i32
    return %c0_i32, %c0_i32_0 : i32, i32
  }
  func.func @transform_6(%arg0: i32) -> (i32, i32) {
    %c0_i32 = arith.constant 0 : i32
    %c0_i32_0 = arith.constant 0 : i32
    %c0_i32_1 = arith.constant 0 : i32
    return %c0_i32, %c0_i32_0 : i32, i32
  }
  func.func @transform_7(%arg0: i32) -> (i32, i32, i32) {
    %c0_i32 = arith.constant 0 : i32
    %c0_i32_0 = arith.constant 0 : i32
    %c0_i32_1 = arith.constant 0 : i32
    return %arg0, %c0_i32, %c0_i32_0 : i32, i32, i32
  }
}

</mosaic_0001>

<llo_original>
// kernel: tpu_custom_call.1
$region0: #{tpu_custom_call.1}
  #allocation0 [shape = 'u32[]', space=smem, size = 0x4, offset = 0x4, fixed_abs, tag = 'smem constant byte address 0x4 - core index']
  #allocation1 [shape = 'u32[144,128]{1,0:T(1,128)}', space=vmem, size = 0x12000, scoped, tag = 'internal scratch']
  %s0 = inlined_call_operand.vmem [shape: f32[2,8,8,4], index: 0, kind: input, shape index: {}]
  %s1 = inlined_call_operand.vmem [shape: f32[2,16,16,4], index: 1, kind: input, shape index: {}]
  %s2 = inlined_call_operand.vmem [shape: f32[256,64], index: 2, kind: input, shape index: {}]
  %s3 = inlined_call_operand.vmem [shape: f32[72,8], index: 3, kind: input, shape index: {}]
  %s4 = inlined_call_operand.vmem [shape: f32[1,8], index: 4, kind: input, shape index: {}]
  %s5 = inlined_call_operand.vmem [shape: f32[72,8], index: 5, kind: input, shape index: {}]
  %s6 = inlined_call_operand.vmem [shape: f32[1,8], index: 6, kind: input, shape index: {}]
  %s7 = inlined_call_operand.vmem [shape: f32[2,256,8], index: 7, kind: output, shape index: {}]
  %s8 = sld [smem:[#allocation0]]
  $region61: #{tpu_custom_call.1} parent=0
    _
  %s10 = ssub.s32 1, %s8
  %s11 = scalar_select 0, %s10, %s8
  loop: start=0, step=1, limit=4
  $region2: #{tpu_custom_call.1} parent=0 // loop_pre_header
    _
  $region3: #{tpu_custom_call.1} parent=0 // loop_header
    %s13 = sphi 0, %s17
    %p14 = scmp.ge.s32.totalorder %s13, 4
    %s23 = sphi 0, %s25
    %s26 = sphi 0, %s23
    %s27 = sphi 0, %s26
    %s43 = sphi 0, %s27
    %s49 = sphi 0, %s51
    %s52 = sphi 0, %s49
    %s53 = sphi 0, %s52
    %s69 = sphi 0, %s53
    %s73 = sphi 0, %s73
    %s75 = sphi 0, %s73
    %s76 = sphi 0, %s75
    %s90 = sphi 0, %s76
    %s94 = sphi 0, %s94
    %s96 = sphi 0, %s94
    %s97 = sphi 0, %s96
    %s111 = sphi 0, %s97
    %s115 = sphi 0, %s115
    %s117 = sphi 0, %s115
    %s118 = sphi 0, %s117
    %s132 = sphi 0, %s118
    %s136 = sphi 0, %s136
    %s138 = sphi 0, %s136
    %s139 = sphi 0, %s138
    %s153 = sphi 0, %s139
    %s157 = sphi 0, %s157
    %s159 = sphi 0, %s157
    %s160 = sphi 0, %s159
    %s174 = sphi 0, %s160
    %s180 = sphi 0, %s182
    %s183 = sphi 0, %s180
    %s184 = sphi 0, %s183
    %s200 = sphi 0, %s184
  $region4: #{tpu_custom_call.1} parent=0 // loop_header_branch
    %16 = sbr.rel (%p14) target = $region8
  $region5: #{tpu_custom_call.1} parent=0 // loop_body
    %s18 = ssub.s32 %s13, 1
    %s19 = ssub.s32 %s13, 2
    %s20 = sadd.s32 %s13, 1
    %s21 = ssub.s32 %s13, %s20
    %p22 = scmp.eq.s32.totalorder %s21, 0
    %s24 = sadd.s32 %s23, 1
    %s25 = scalar_select %p22, %s23, %s24
    %p28 = pneg %p22
    %p29 = scmp.eq.s32.totalorder %s13, 1
    %p30 = por %p28, %p29
    %p31 = scmp.ne.s32.totalorder %s23, %s26
    %p32 = scmp.eq.s32.totalorder %s13, 0
    %p33 = por %p31, %p32
    %p34 = scmp.ne.s32.totalorder %s23, %s26
    %p35 = scmp.eq.s32.totalorder %s18, 1
    %p36 = por %p34, %p35
    %p37 = scmp.ne.s32.totalorder %s26, %s27
    %p38 = scmp.eq.s32.totalorder %s18, 0
    %p39 = por %p37, %p38
    %p40 = scmp.ne.s32.totalorder %s26, %s27
    %p41 = scmp.eq.s32.totalorder %s19, 1
    %p42 = por %p40, %p41
    %p44 = scmp.ne.s32.totalorder %s27, %s43
    %p45 = scmp.eq.s32.totalorder %s19, 0
    %p46 = por %p44, %p45
    %s47 = ssub.s32 %s13, %s20
    %p48 = scmp.eq.s32.totalorder %s47, 0
    %s50 = sadd.s32 %s49, 1
    %s51 = scalar_select %p48, %s49, %s50
    %p54 = pneg %p48
    %p55 = scmp.eq.s32.totalorder %s13, 1
    %p56 = por %p54, %p55
    %p57 = scmp.ne.s32.totalorder %s49, %s52
    %p58 = scmp.eq.s32.totalorder %s13, 0
    %p59 = por %p57, %p58
    %p60 = scmp.ne.s32.totalorder %s49, %s52
    %p61 = scmp.eq.s32.totalorder %s18, 1
    %p62 = por %p60, %p61
    %p63 = scmp.ne.s32.totalorder %s52, %s53
    %p64 = scmp.eq.s32.totalorder %s18, 0
    %p65 = por %p63, %p64
    %p66 = scmp.ne.s32.totalorder %s52, %s53
    %p67 = scmp.eq.s32.totalorder %s19, 1
    %p68 = por %p66, %p67
    %p70 = scmp.ne.s32.totalorder %s53, %s69
    %p71 = scmp.eq.s32.totalorder %s19, 0
    %p72 = por %p70, %p71
    %s74 = sadd.s32 %s73, 1
    %p77 = scmp.eq.s32.totalorder %s13, 1
    %p78 = scmp.ne.s32.totalorder %s73, %s75
    %p79 = scmp.eq.s32.totalorder %s13, 0
    %p80 = por %p78, %p79
    %p81 = scmp.ne.s32.totalorder %s73, %s75
    %p82 = scmp.eq.s32.totalorder %s18, 1
    %p83 = por %p81, %p82
    %p84 = scmp.ne.s32.totalorder %s75, %s76
    %p85 = scmp.eq.s32.totalorder %s18, 0
    %p86 = por %p84, %p85
    %p87 = scmp.ne.s32.totalorder %s75, %s76
    %p88 = scmp.eq.s32.totalorder %s19, 1
    %p89 = por %p87, %p88
    %p91 = scmp.ne.s32.totalorder %s76, %s90
    %p92 = scmp.eq.s32.totalorder %s19, 0
    %p93 = por %p91, %p92
    %s95 = sadd.s32 %s94, 1
    %p98 = scmp.eq.s32.totalorder %s13, 1
    %p99 = scmp.ne.s32.totalorder %s94, %s96
    %p100 = scmp.eq.s32.totalorder %s13, 0
    %p101 = por %p99, %p100
    %p102 = scmp.ne.s32.totalorder %s94, %s96
    %p103 = scmp.eq.s32.totalorder %s18, 1
    %p104 = por %p102, %p103
    %p105 = scmp.ne.s32.totalorder %s96, %s97
    %p106 = scmp.eq.s32.totalorder %s18, 0
    %p107 = por %p105, %p106
    %p108 = scmp.ne.s32.totalorder %s96, %s97
    %p109 = scmp.eq.s32.totalorder %s19, 1
    %p110 = por %p108, %p109
    %p112 = scmp.ne.s32.totalorder %s97, %s111
    %p113 = scmp.eq.s32.totalorder %s19, 0
    %p114 = por %p112, %p113
    %s116 = sadd.s32 %s115, 1
    %p119 = scmp.eq.s32.totalorder %s13, 1
    %p120 = scmp.ne.s32.totalorder %s115, %s117
    %p121 = scmp.eq.s32.totalorder %s13, 0
    %p122 = por %p120, %p121
    %p123 = scmp.ne.s32.totalorder %s115, %s117
    %p124 = scmp.eq.s32.totalorder %s18, 1
    %p125 = por %p123, %p124
    %p126 = scmp.ne.s32.totalorder %s117, %s118
    %p127 = scmp.eq.s32.totalorder %s18, 0
    %p128 = por %p126, %p127
    %p129 = scmp.ne.s32.totalorder %s117, %s118
    %p130 = scmp.eq.s32.totalorder %s19, 1
    %p131 = por %p129, %p130
    %p133 = scmp.ne.s32.totalorder %s118, %s132
    %p134 = scmp.eq.s32.totalorder %s19, 0
    %p135 = por %p133, %p134
    %s137 = sadd.s32 %s136, 1
    %p140 = scmp.eq.s32.totalorder %s13, 1
    %p141 = scmp.ne.s32.totalorder %s136, %s138
    %p142 = scmp.eq.s32.totalorder %s13, 0
    %p143 = por %p141, %p142
    %p144 = scmp.ne.s32.totalorder %s136, %s138
    %p145 = scmp.eq.s32.totalorder %s18, 1
    %p146 = por %p144, %p145
    %p147 = scmp.ne.s32.totalorder %s138, %s139
    %p148 = scmp.eq.s32.totalorder %s18, 0
    %p149 = por %p147, %p148
    %p150 = scmp.ne.s32.totalorder %s138, %s139
    %p151 = scmp.eq.s32.totalorder %s19, 1
    %p152 = por %p150, %p151
    %p154 = scmp.ne.s32.totalorder %s139, %s153
    %p155 = scmp.eq.s32.totalorder %s19, 0
    %p156 = por %p154, %p155
    %s158 = sadd.s32 %s157, 1
    %p161 = scmp.eq.s32.totalorder %s13, 1
    %p162 = scmp.ne.s32.totalorder %s157, %s159
    %p163 = scmp.eq.s32.totalorder %s13, 0
    %p164 = por %p162, %p163
    %p165 = scmp.ne.s32.totalorder %s157, %s159
    %p166 = scmp.eq.s32.totalorder %s18, 1
    %p167 = por %p165, %p166
    %p168 = scmp.ne.s32.totalorder %s159, %s160
    %p169 = scmp.eq.s32.totalorder %s18, 0
    %p170 = por %p168, %p169
    %p171 = scmp.ne.s32.totalorder %s159, %s160
    %p172 = scmp.eq.s32.totalorder %s19, 1
    %p173 = por %p171, %p172
    %p175 = scmp.ne.s32.totalorder %s160, %s174
    %p176 = scmp.eq.s32.totalorder %s19, 0
    %p177 = por %p175, %p176
    %s178 = ssub.s32 %s13, %s20
    %p179 = scmp.eq.s32.totalorder %s178, 0
    %s181 = sadd.s32 %s180, 1
    %s182 = scalar_select %p179, %s180, %s181
    %p185 = pneg %p179
    %p186 = scmp.eq.s32.totalorder %s13, 1
    %p187 = por %p185, %p186
    %p188 = scmp.ne.s32.totalorder %s180, %s183
    %p189 = scmp.eq.s32.totalorder %s13, 0
    %p190 = por %p188, %p189
    %p191 = scmp.ne.s32.totalorder %s180, %s183
    %p192 = scmp.eq.s32.totalorder %s18, 1
    %p193 = por %p191, %p192
    %p194 = scmp.ne.s32.totalorder %s183, %s184
    %p195 = scmp.eq.s32.totalorder %s18, 0
    %p196 = por %p194, %p195
    %p197 = scmp.ne.s32.totalorder %s183, %s184
    %p198 = scmp.eq.s32.totalorder %s19, 1
    %p199 = por %p197, %p198
    %p201 = scmp.ne.s32.totalorder %s184, %s200
    %p202 = scmp.eq.s32.totalorder %s19, 0
    %p203 = por %p201, %p202
    %p204 = scmp.le.s32.totalorder 1, %s13
    %p205 = scmp.lt.s32.totalorder %s13, 3
    %p206 = pnand %p204, %p205
    %p207 = pneg %p206
    // Predicated region
    $region9: #{tpu_custom_call.1} parent=5 // pred_check
      _
    $region10: #{tpu_custom_call.1} parent=5 // pred_check_branch
      %209 = sbr.rel (%p206) target = $region12
    $region11: #{tpu_custom_call.1} parent=5 // pred_region
      %s210 = ssub.s32 %s13, 1
      // Predicated region
      $region13: #{tpu_custom_call.1} parent=11 // pred_check
        %p211 = pneg %p86
      $region14: #{tpu_custom_call.1} parent=11 // pred_check_branch
        %213 = sbr.rel (%p211) target = $region16
      $region15: #{tpu_custom_call.1} parent=11 // pred_region
        _
      $region16: #{tpu_custom_call.1} parent=11 // pred_fallthru
        _
      // Predicated region
      $region17: #{tpu_custom_call.1} parent=11 // pred_check
        %p214 = pneg %p107
      $region18: #{tpu_custom_call.1} parent=11 // pred_check_branch
        %216 = sbr.rel (%p214) target = $region20
      $region19: #{tpu_custom_call.1} parent=11 // pred_region
        _
      $region20: #{tpu_custom_call.1} parent=11 // pred_fallthru
        _
      // Predicated region
      $region21: #{tpu_custom_call.1} parent=11 // pred_check
        %p217 = pneg %p128
      $region22: #{tpu_custom_call.1} parent=11 // pred_check_branch
        %219 = sbr.rel (%p217) target = $region24
      $region23: #{tpu_custom_call.1} parent=11 // pred_region
        _
      $region24: #{tpu_custom_call.1} parent=11 // pred_fallthru
        _
      // Predicated region
      $region25: #{tpu_custom_call.1} parent=11 // pred_check
        %p220 = pneg %p149
      $region26: #{tpu_custom_call.1} parent=11 // pred_check_branch
        %222 = sbr.rel (%p220) target = $region28
      $region27: #{tpu_custom_call.1} parent=11 // pred_region
        _
      $region28: #{tpu_custom_call.1} parent=11 // pred_fallthru
        _
      // Predicated region
      $region29: #{tpu_custom_call.1} parent=11 // pred_check
        %p223 = pneg %p170
      $region30: #{tpu_custom_call.1} parent=11 // pred_check_branch
        %225 = sbr.rel (%p223) target = $region32
      $region31: #{tpu_custom_call.1} parent=11 // pred_region
        _
      $region32: #{tpu_custom_call.1} parent=11 // pred_fallthru
        _
    $region12: #{tpu_custom_call.1} parent=5 // pred_fallthru
      _
    %p226 = scmp.lt.s32.totalorder %s13, 2
    // Predicated region
    $region33: #{tpu_custom_call.1} parent=5 // pred_check
      %p227 = pneg %p226
    $region34: #{tpu_custom_call.1} parent=5 // pred_check_branch
      %229 = sbr.rel (%p227) target = $region36
    $region35: #{tpu_custom_call.1} parent=5 // pred_region
      // Predicated region
      $region37: #{tpu_custom_call.1} parent=35 // pred_check
        %p230 = pneg %p33
      $region38: #{tpu_custom_call.1} parent=35 // pred_check_branch
        %232 = sbr.rel (%p230) target = $region40
      $region39: #{tpu_custom_call.1} parent=35 // pred_region
        %p233 = scmp.lt.s32.totalorder %s13, 1
        %s234 = scalar_select %p233, %s13, 1
        %s235 = smul.addr %s234, 8
        %s236 = smul.addr %s235, 8
        %s237 = scalar_lea.vmem %s0, %s236
      $region40: #{tpu_custom_call.1} parent=35 // pred_fallthru
        _
      // Predicated region
      $region41: #{tpu_custom_call.1} parent=35 // pred_check
        %p238 = pneg %p59
      $region42: #{tpu_custom_call.1} parent=35 // pred_check_branch
        %240 = sbr.rel (%p238) target = $region44
      $region43: #{tpu_custom_call.1} parent=35 // pred_region
        %p241 = scmp.lt.s32.totalorder %s13, 1
        %s242 = scalar_select %p241, %s13, 1
        %s243 = smul.addr %s242, 32
        %s244 = smul.addr %s243, 8
        %s245 = scalar_lea.vmem %s1, %s244
      $region44: #{tpu_custom_call.1} parent=35 // pred_fallthru
        _
    $region36: #{tpu_custom_call.1} parent=5 // pred_fallthru
      _
    %p246 = scmp.le.s32.totalorder 1, %s13
    %p247 = scmp.lt.s32.totalorder %s13, 3
    %p248 = pnand %p246, %p247
    %p249 = pneg %p248
    // Predicated region
    $region45: #{tpu_custom_call.1} parent=5 // pred_check
      _
    $region46: #{tpu_custom_call.1} parent=5 // pred_check_branch
      %251 = sbr.rel (%p248) target = $region48
    $region47: #{tpu_custom_call.1} parent=5 // pred_region
      %s252 = ssub.s32 %s13, 1
      %p253 = scmp.lt.s32.totalorder %s18, 1
      %s254 = scalar_select %p253, %s18, 1
      %s255 = smul.addr %s254, 8
      %s256 = smul.addr %s255, 8
      %s257 = scalar_lea.vmem %s0, %s256
      %p258 = pneg %p39
      %p259 = pneg %p36
      %p260 = scmp.lt.s32.totalorder %s18, 1
      %s261 = scalar_select %p260, %s18, 1
      %s262 = smul.addr %s261, 32
      %s263 = smul.addr %s262, 8
      %s264 = scalar_lea.vmem %s1, %s263
      %p265 = pneg %p65
      %p266 = pneg %p62
      %p267 = pneg %p86
      %p268 = pneg %p83
      %p269 = pneg %p107
      %p270 = pneg %p104
      %p271 = pneg %p128
      %p272 = pneg %p125
      %p273 = pneg %p149
      %p274 = pneg %p146
      %p275 = pneg %p170
      %p276 = pneg %p167
      %p277 = pneg %p196
      %p278 = pneg %p193
      %p279 = scmp.lt.s32.totalorder %s18, 1
      %s280 = scalar_select %p279, %s18, 1
      %s281 = smul.addr %s280, 32
      %s282 = smul.addr %s281, 8
      %s283 = scalar_lea.vmem %s7, %s282
      %p284 = scmp.lt.s32.totalorder %s18, 1
      %s285 = scalar_select %p284, %s18, 1
      %s286 = smul.addr %s285, 8
      %s287 = smul.addr %s286, 8
      %s288 = scalar_lea.vmem %s0, %s287
      %p289 = scmp.lt.s32.totalorder %s18, 1
      %s290 = scalar_select %p289, %s18, 1
      %s291 = smul.addr %s290, 32
      %s292 = smul.addr %s291, 8
      %s293 = scalar_lea.vmem %s1, %s292
      %p294 = scmp.lt.s32.totalorder %s18, 1
      %s295 = scalar_select %p294, %s18, 1
      %s296 = smul.addr %s295, 32
      %s297 = smul.addr %s296, 8
      %s298 = scalar_lea.vmem %s7, %s297
      %v299 = vld [vmem:[%s288] sm:$0xff]
      %v300 = vld [vmem:[%s288 + $0x8] sm:$0xff]
      %v301 = vld [vmem:[%s288 + $0x10] sm:$0xff]
      %v302 = vld [vmem:[%s288 + $0x18] sm:$0xff]
      %v303 = vld [vmem:[%s288 + $0x20] sm:$0xff]
      %v304 = vld [vmem:[%s288 + $0x28] sm:$0xff]
      %v305 = vld [vmem:[%s288 + $0x30] sm:$0xff]
      %v306 = vld [vmem:[%s288 + $0x38] sm:$0xff]
      %v307 = vld [vmem:[%s2] sm:$0xff]
      %v308 = vld [vmem:[%s2 + $0x8] sm:$0xff]
      %v309 = vld [vmem:[%s2 + $0x10] sm:$0xff]
      %v310 = vld [vmem:[%s2 + $0x18] sm:$0xff]
      %v311 = vld [vmem:[%s2 + $0x20] sm:$0xff]
      %v312 = vld [vmem:[%s2 + $0x28] sm:$0xff]
      %v313 = vld [vmem:[%s2 + $0x30] sm:$0xff]
      %v314 = vld [vmem:[%s2 + $0x38] sm:$0xff]
      %v315 = vld [vmem:[%s2 + $0x40] sm:$0xff]
      %v316 = vld [vmem:[%s2 + $0x48] sm:$0xff]
      %v317 = vld [vmem:[%s2 + $0x50] sm:$0xff]
      %v318 = vld [vmem:[%s2 + $0x58] sm:$0xff]
      %v319 = vld [vmem:[%s2 + $0x60] sm:$0xff]
      %v320 = vld [vmem:[%s2 + $0x68] sm:$0xff]
      %v321 = vld [vmem:[%s2 + $0x70] sm:$0xff]
      %v322 = vld [vmem:[%s2 + $0x78] sm:$0xff]
      %v323 = vld [vmem:[%s2 + $0x80] sm:$0xff]
      %v324 = vld [vmem:[%s2 + $0x88] sm:$0xff]
      %v325 = vld [vmem:[%s2 + $0x90] sm:$0xff]
      %v326 = vld [vmem:[%s2 + $0x98] sm:$0xff]
      %v327 = vld [vmem:[%s2 + $0xa0] sm:$0xff]
      %v328 = vld [vmem:[%s2 + $0xa8] sm:$0xff]
      %v329 = vld [vmem:[%s2 + $0xb0] sm:$0xff]
      %v330 = vld [vmem:[%s2 + $0xb8] sm:$0xff]
      %v331 = vld [vmem:[%s2 + $0xc0] sm:$0xff]
      %v332 = vld [vmem:[%s2 + $0xc8] sm:$0xff]
      %v333 = vld [vmem:[%s2 + $0xd0] sm:$0xff]
      %v334 = vld [vmem:[%s2 + $0xd8] sm:$0xff]
      %v335 = vld [vmem:[%s2 + $0xe0] sm:$0xff]
      %v336 = vld [vmem:[%s2 + $0xe8] sm:$0xff]
      %v337 = vld [vmem:[%s2 + $0xf0] sm:$0xff]
      %v338 = vld [vmem:[%s2 + $0xf8] sm:$0xff]
      %vm339 = vcmask 523264
      %v341 = vsel %vm339, %v307, 0
      %v344 = vsel %vm339, %v308, 0
      %v347 = vsel %vm339, %v309, 0
      %v350 = vsel %vm339, %v310, 0
      %v353 = vsel %vm339, %v311, 0
      %v356 = vsel %vm339, %v312, 0
      %v359 = vsel %vm339, %v313, 0
      %v362 = vsel %vm339, %v314, 0
      %v365 = vsel %vm339, %v315, 0
      %v368 = vsel %vm339, %v316, 0
      %v371 = vsel %vm339, %v317, 0
      %v374 = vsel %vm339, %v318, 0
      %v377 = vsel %vm339, %v319, 0
      %v380 = vsel %vm339, %v320, 0
      %v383 = vsel %vm339, %v321, 0
      %v386 = vsel %vm339, %v322, 0
      %v389 = vsel %vm339, %v323, 0
      %v392 = vsel %vm339, %v324, 0
      %v395 = vsel %vm339, %v325, 0
      %v398 = vsel %vm339, %v326, 0
      %v401 = vsel %vm339, %v327, 0
      %v404 = vsel %vm339, %v328, 0
      %v407 = vsel %vm339, %v329, 0
      %v410 = vsel %vm339, %v330, 0
      %v413 = vsel %vm339, %v331, 0
      %v416 = vsel %vm339, %v332, 0
      %v419 = vsel %vm339, %v333, 0
      %v422 = vsel %vm339, %v334, 0
      %v425 = vsel %vm339, %v335, 0
      %v428 = vsel %vm339, %v336, 0
      %v431 = vsel %vm339, %v337, 0
      %v434 = vsel %vm339, %v338, 0
      %436 = vmatprep.subr.mxu0 0.0
      %437 = vmatpush1.msra.mxu0 %v299
      %438 = vmatprep.subr.mxu0 0.0
      %439 = vmatpush1.msra.mxu0 %v300
      %440 = vmatprep.subr.mxu0 0.0
      %441 = vmatpush1.msra.mxu0 %v301
      %442 = vmatprep.subr.mxu0 0.0
      %443 = vmatpush1.msra.mxu0 %v302
      %444 = vmatprep.subr.mxu0 0.0
      %445 = vmatpush1.msra.mxu0 %v303
      %446 = vmatprep.subr.mxu0 0.0
      %447 = vmatpush1.msra.mxu0 %v304
      %448 = vmatprep.subr.mxu0 0.0
      %449 = vmatpush1.msra.mxu0 %v305
      %450 = vmatprep.subr.mxu0 0.0
      %451 = vmatpush1.msra.mxu0 %v306
      %452 = vmatprep.subr.mxu0 0.0
      %453 = vmatpush1.msra.mxu0 0.0
      %454 = vmatprep.subr.mxu0 0.0
      %455 = vmatpush1.msra.mxu0 0.0
      %456 = vmatprep.subr.mxu0 0.0
      %457 = vmatpush1.msra.mxu0 0.0
      %458 = vmatprep.subr.mxu0 0.0
      %459 = vmatpush1.msra.mxu0 0.0
      %460 = vmatprep.subr.mxu0 0.0
      %461 = vmatpush1.msra.mxu0 0.0
      %462 = vmatprep.subr.mxu0 0.0
      %463 = vmatpush1.msra.mxu0 0.0
      %464 = vmatprep.subr.mxu0 0.0
      %465 = vmatpush1.msra.mxu0 0.0
      %466 = vmatprep.subr.mxu0 0.0
      %467 = vmatpush1.msra.mxu0 0.0
      %468 = vmatprep.subr.mxu0 0.0
      %469 = vmatpush1.msra.mxu0 0.0
      %470 = vmatprep.subr.mxu0 0.0
      %471 = vmatpush1.msra.mxu0 0.0
      %472 = vmatprep.subr.mxu0 0.0
      %473 = vmatpush1.msra.mxu0 0.0
      %474 = vmatprep.subr.mxu0 0.0
      %475 = vmatpush1.msra.mxu0 0.0
      %476 = vmatprep.subr.mxu0 0.0
      %477 = vmatpush1.msra.mxu0 0.0
      %478 = vmatprep.subr.mxu0 0.0
      %479 = vmatpush1.msra.mxu0 0.0
      %480 = vmatprep.subr.mxu0 0.0
      %481 = vmatpush1.msra.mxu0 0.0
      %482 = vmatprep.subr.mxu0 0.0
      %483 = vmatpush1.msra.mxu0 0.0
      %484 = vmatprep.subr.mxu0 0.0
      %485 = vmatpush1.msra.mxu0 0.0
      %486 = vmatprep.subr.mxu0 0.0
      %487 = vmatpush1.msra.mxu0 0.0
      %488 = vmatprep.subr.mxu0 0.0
      %489 = vmatpush1.msra.mxu0 0.0
      %490 = vmatprep.subr.mxu0 0.0
      %491 = vmatpush1.msra.mxu0 0.0
      %492 = vmatprep.subr.mxu0 0.0
      %493 = vmatpush1.msra.mxu0 0.0
      %494 = vmatprep.subr.mxu0 0.0
      %495 = vmatpush1.msra.mxu0 0.0
      %496 = vmatprep.subr.mxu0 0.0
      %497 = vmatpush1.msra.mxu0 0.0
      %498 = vmatprep.subr.mxu0 0.0
      %499 = vmatpush1.msra.mxu0 0.0
      %500 = vmatprep.mubr.f32.mxu0 0.0
      %501 = vmatmul.mubr.f32.gmra.mrb[0].mxu0 %v341
      %v502 = vpop.f32.mrb[0].mxu0
      %v503 = vadd.f32 0.0, %v502
      %v504 = vpop.f32.mrb[0].mxu0
      %505 = vmatprep.mubr.f32.mxu0 0.0
      %506 = vmatmul.mubr.f32.gmra.mrb[0].mxu0 %v344
      %v507 = vpop.f32.mrb[0].mxu0
      %v508 = vadd.f32 0.0, %v507
      %v509 = vpop.f32.mrb[0].mxu0
      %510 = vmatprep.mubr.f32.mxu0 0.0
      %511 = vmatmul.mubr.f32.gmra.mrb[0].mxu0 %v347
      %v512 = vpop.f32.mrb[0].mxu0
      %v513 = vadd.f32 0.0, %v512
      %v514 = vpop.f32.mrb[0].mxu0
      %515 = vmatprep.mubr.f32.mxu0 0.0
      %516 = vmatmul.mubr.f32.gmra.mrb[0].mxu0 %v350
      %v517 = vpop.f32.mrb[0].mxu0
      %v518 = vadd.f32 0.0, %v517
      %v519 = vpop.f32.mrb[0].mxu0
      %520 = vmatprep.mubr.f32.mxu0 0.0
      %521 = vmatmul.mubr.f32.gmra.mrb[0].mxu0 %v353
      %v522 = vpop.f32.mrb[0].mxu0
      %v523 = vadd.f32 0.0, %v522
      %v524 = vpop.f32.mrb[0].mxu0
      %525 = vmatprep.mubr.f32.mxu0 0.0
      %526 = vmatmul.mubr.f32.gmra.mrb[0].mxu0 %v356
      %v527 = vpop.f32.mrb[0].mxu0
      %v528 = vadd.f32 0.0, %v527
      %v529 = vpop.f32.mrb[0].mxu0
      %530 = vmatprep.mubr.f32.mxu0 0.0
      %531 = vmatmul.mubr.f32.gmra.mrb[0].mxu0 %v359
      %v532 = vpop.f32.mrb[0].mxu0
      %v533 = vadd.f32 0.0, %v532
      %v534 = vpop.f32.mrb[0].mxu0
      %535 = vmatprep.mubr.f32.mxu0 0.0
      %536 = vmatmul.mubr.f32.gmra.mrb[0].mxu0 %v362
      %v537 = vpop.f32.mrb[0].mxu0
      %v538 = vadd.f32 0.0, %v537
      %v539 = vpop.f32.mrb[0].mxu0
      %540 = vmatprep.mubr.f32.mxu0 0.0
      %541 = vmatmul.mubr.f32.gmra.mrb[0].mxu0 %v365
      %v542 = vpop.f32.mrb[0].mxu0
      %v543 = vadd.f32 0.0, %v542
      %v544 = vpop.f32.mrb[0].mxu0
      %545 = vmatprep.mubr.f32.mxu0 0.0
      %546 = vmatmul.mubr.f32.gmra.mrb[0].mxu0 %v368
      %v547 = vpop.f32.mrb[0].mxu0
      %v548 = vadd.f32 0.0, %v547
      %v549 = vpop.f32.mrb[0].mxu0
      %550 = vmatprep.mubr.f32.mxu0 0.0
      %551 = vmatmul.mubr.f32.gmra.mrb[0].mxu0 %v371
      %v552 = vpop.f32.mrb[0].mxu0
      %v553 = vadd.f32 0.0, %v552
      %v554 = vpop.f32.mrb[0].mxu0
      %555 = vmatprep.mubr.f32.mxu0 0.0
      %556 = vmatmul.mubr.f32.gmra.mrb[0].mxu0 %v374
      %v557 = vpop.f32.mrb[0].mxu0
      %v558 = vadd.f32 0.0, %v557
      %v559 = vpop.f32.mrb[0].mxu0
      %560 = vmatprep.mubr.f32.mxu0 0.0
      %561 = vmatmul.mubr.f32.gmra.mrb[0].mxu0 %v377
      %v562 = vpop.f32.mrb[0].mxu0
      %v563 = vadd.f32 0.0, %v562
      %v564 = vpop.f32.mrb[0].mxu0
      %565 = vmatprep.mubr.f32.mxu0 0.0
      %566 = vmatmul.mubr.f32.gmra.mrb[0].mxu0 %v380
      %v567 = vpop.f32.mrb[0].mxu0
      %v568 = vadd.f32 0.0, %v567
      %v569 = vpop.f32.mrb[0].mxu0
      %570 = vmatprep.mubr.f32.mxu0 0.0
      %571 = vmatmul.mubr.f32.gmra.mrb[0].mxu0 %v383
      %v572 = vpop.f32.mrb[0].mxu0
      %v573 = vadd.f32 0.0, %v572
      %v574 = vpop.f32.mrb[0].mxu0
      %575 = vmatprep.mubr.f32.mxu0 0.0
      %576 = vmatmul.mubr.f32.gmra.mrb[0].mxu0 %v386
      %v577 = vpop.f32.mrb[0].mxu0
      %v578 = vadd.f32 0.0, %v577
      %v579 = vpop.f32.mrb[0].mxu0
      %580 = vmatprep.mubr.f32.mxu0 0.0
      %581 = vmatmul.mubr.f32.gmra.mrb[0].mxu0 %v389
      %v582 = vpop.f32.mrb[0].mxu0
      %v583 = vadd.f32 0.0, %v582
      %v584 = vpop.f32.mrb[0].mxu0
      %585 = vmatprep.mubr.f32.mxu0 0.0
      %586 = vmatmul.mubr.f32.gmra.mrb[0].mxu0 %v392
      %v587 = vpop.f32.mrb[0].mxu0
      %v588 = vadd.f32 0.0, %v587
      %v589 = vpop.f32.mrb[0].mxu0
      %590 = vmatprep.mubr.f32.mxu0 0.0
      %591 = vmatmul.mubr.f32.gmra.mrb[0].mxu0 %v395
      %v592 = vpop.f32.mrb[0].mxu0
      %v593 = vadd.f32 0.0, %v592
      %v594 = vpop.f32.mrb[0].mxu0
      %595 = vmatprep.mubr.f32.mxu0 0.0
      %596 = vmatmul.mubr.f32.gmra.mrb[0].mxu0 %v398
      %v597 = vpop.f32.mrb[0].mxu0
      %v598 = vadd.f32 0.0, %v597
      %v599 = vpop.f32.mrb[0].mxu0
      %600 = vmatprep.mubr.f32.mxu0 0.0
      %601 = vmatmul.mubr.f32.gmra.mrb[0].mxu0 %v401
      %v602 = vpop.f32.mrb[0].mxu0
      %v603 = vadd.f32 0.0, %v602
      %v604 = vpop.f32.mrb[0].mxu0
      %605 = vmatprep.mubr.f32.mxu0 0.0
      %606 = vmatmul.mubr.f32.gmra.mrb[0].mxu0 %v404
      %v607 = vpop.f32.mrb[0].mxu0
      %v608 = vadd.f32 0.0, %v607
      %v609 = vpop.f32.mrb[0].mxu0
      %610 = vmatprep.mubr.f32.mxu0 0.0
      %611 = vmatmul.mubr.f32.gmra.mrb[0].mxu0 %v407
      %v612 = vpop.f32.mrb[0].mxu0
      %v613 = vadd.f32 0.0, %v612
      %v614 = vpop.f32.mrb[0].mxu0
      %615 = vmatprep.mubr.f32.mxu0 0.0
      %616 = vmatmul.mubr.f32.gmra.mrb[0].mxu0 %v410
      %v617 = vpop.f32.mrb[0].mxu0
      %v618 = vadd.f32 0.0, %v617
      %v619 = vpop.f32.mrb[0].mxu0
      %620 = vmatprep.mubr.f32.mxu0 0.0
      %621 = vmatmul.mubr.f32.gmra.mrb[0].mxu0 %v413
      %v622 = vpop.f32.mrb[0].mxu0
      %v623 = vadd.f32 0.0, %v622
      %v624 = vpop.f32.mrb[0].mxu0
      %625 = vmatprep.mubr.f32.mxu0 0.0
      %626 = vmatmul.mubr.f32.gmra.mrb[0].mxu0 %v416
      %v627 = vpop.f32.mrb[0].mxu0
      %v628 = vadd.f32 0.0, %v627
      %v629 = vpop.f32.mrb[0].mxu0
      %630 = vmatprep.mubr.f32.mxu0 0.0
      %631 = vmatmul.mubr.f32.gmra.mrb[0].mxu0 %v419
      %v632 = vpop.f32.mrb[0].mxu0
      %v633 = vadd.f32 0.0, %v632
      %v634 = vpop.f32.mrb[0].mxu0
      %635 = vmatprep.mubr.f32.mxu0 0.0
      %636 = vmatmul.mubr.f32.gmra.mrb[0].mxu0 %v422
      %v637 = vpop.f32.mrb[0].mxu0
      %v638 = vadd.f32 0.0, %v637
      %v639 = vpop.f32.mrb[0].mxu0
      %640 = vmatprep.mubr.f32.mxu0 0.0
      %641 = vmatmul.mubr.f32.gmra.mrb[0].mxu0 %v425
      %v642 = vpop.f32.mrb[0].mxu0
      %v643 = vadd.f32 0.0, %v642
      %v644 = vpop.f32.mrb[0].mxu0
      %645 = vmatprep.mubr.f32.mxu0 0.0
      %646 = vmatmul.mubr.f32.gmra.mrb[0].mxu0 %v428
      %v647 = vpop.f32.mrb[0].mxu0
      %v648 = vadd.f32 0.0, %v647
      %v649 = vpop.f32.mrb[0].mxu0
      %650 = vmatprep.mubr.f32.mxu0 0.0
      %651 = vmatmul.mubr.f32.gmra.mrb[0].mxu0 %v431
      %v652 = vpop.f32.mrb[0].mxu0
      %v653 = vadd.f32 0.0, %v652
      %v654 = vpop.f32.mrb[0].mxu0
      %655 = vmatprep.mubr.f32.mxu0 0.0
      %656 = vmatmul.mubr.f32.gmra.mrb[0].mxu0 %v434
      %v657 = vpop.f32.mrb[0].mxu0
      %v658 = vadd.f32 0.0, %v657
      %v659 = vpop.f32.mrb[0].mxu0
      %660 = vdwg.mxu0
      %v661 = vld [vmem:[%s293] sm:$0xff]
      %v662 = vld [vmem:[%s293 + $0x8] sm:$0xff]
      %v663 = vld [vmem:[%s293 + $0x10] sm:$0xff]
      %v664 = vld [vmem:[%s293 + $0x18] sm:$0xff]
      %v665 = vld [vmem:[%s293 + $0x20] sm:$0xff]
      %v666 = vld [vmem:[%s293 + $0x28] sm:$0xff]
      %v667 = vld [vmem:[%s293 + $0x30] sm:$0xff]
      %v668 = vld [vmem:[%s293 + $0x38] sm:$0xff]
      %v669 = vld [vmem:[%s293 + $0x40] sm:$0xff]
      %v670 = vld [vmem:[%s293 + $0x48] sm:$0xff]
      %v671 = vld [vmem:[%s293 + $0x50] sm:$0xff]
      %v672 = vld [vmem:[%s293 + $0x58] sm:$0xff]
      %v673 = vld [vmem:[%s293 + $0x60] sm:$0xff]
      %v674 = vld [vmem:[%s293 + $0x68] sm:$0xff]
      %v675 = vld [vmem:[%s293 + $0x70] sm:$0xff]
      %v676 = vld [vmem:[%s293 + $0x78] sm:$0xff]
      %v677 = vld [vmem:[%s293 + $0x80] sm:$0xff]
      %v678 = vld [vmem:[%s293 + $0x88] sm:$0xff]
      %v679 = vld [vmem:[%s293 + $0x90] sm:$0xff]
      %v680 = vld [vmem:[%s293 + $0x98] sm:$0xff]
      %v681 = vld [vmem:[%s293 + $0xa0] sm:$0xff]
      %v682 = vld [vmem:[%s293 + $0xa8] sm:$0xff]
      %v683 = vld [vmem:[%s293 + $0xb0] sm:$0xff]
      %v684 = vld [vmem:[%s293 + $0xb8] sm:$0xff]
      %v685 = vld [vmem:[%s293 + $0xc0] sm:$0xff]
      %v686 = vld [vmem:[%s293 + $0xc8] sm:$0xff]
      %v687 = vld [vmem:[%s293 + $0xd0] sm:$0xff]
      %v688 = vld [vmem:[%s293 + $0xd8] sm:$0xff]
      %v689 = vld [vmem:[%s293 + $0xe0] sm:$0xff]
      %v690 = vld [vmem:[%s293 + $0xe8] sm:$0xff]
      %v691 = vld [vmem:[%s293 + $0xf0] sm:$0xff]
      %v692 = vld [vmem:[%s293 + $0xf8] sm:$0xff]
      %725 = vrot.lane.b32.xlu0 %v503, 4
      %v726 = vpop.permute.xlu0 %725
      %727 = vrot.lane.b32.xlu0 %v508, 4
      %v728 = vpop.permute.xlu0 %727
      %729 = vrot.lane.b32.xlu0 %v513, 4
      %v730 = vpop.permute.xlu0 %729
      %731 = vrot.lane.b32.xlu0 %v518, 4
      %v732 = vpop.permute.xlu0 %731
      %733 = vrot.lane.b32.xlu0 %v523, 4
      %v734 = vpop.permute.xlu0 %733
      %735 = vrot.lane.b32.xlu0 %v528, 4
      %v736 = vpop.permute.xlu0 %735
      %737 = vrot.lane.b32.xlu0 %v533, 4
      %v738 = vpop.permute.xlu0 %737
      %739 = vrot.lane.b32.xlu0 %v538, 4
      %v740 = vpop.permute.xlu0 %739
      %741 = vrot.lane.b32.xlu0 %v543, 4
      %v742 = vpop.permute.xlu0 %741
      %743 = vrot.lane.b32.xlu0 %v548, 4
      %v744 = vpop.permute.xlu0 %743
      %745 = vrot.lane.b32.xlu0 %v553, 4
      %v746 = vpop.permute.xlu0 %745
      %747 = vrot.lane.b32.xlu0 %v558, 4
      %v748 = vpop.permute.xlu0 %747
      %749 = vrot.lane.b32.xlu0 %v563, 4
      %v750 = vpop.permute.xlu0 %749
      %751 = vrot.lane.b32.xlu0 %v568, 4
      %v752 = vpop.permute.xlu0 %751
      %753 = vrot.lane.b32.xlu0 %v573, 4
      %v754 = vpop.permute.xlu0 %753
      %755 = vrot.lane.b32.xlu0 %v578, 4
      %v756 = vpop.permute.xlu0 %755
      %757 = vrot.lane.b32.xlu0 %v583, 4
      %v758 = vpop.permute.xlu0 %757
      %759 = vrot.lane.b32.xlu0 %v588, 4
      %v760 = vpop.permute.xlu0 %759
      %761 = vrot.lane.b32.xlu0 %v593, 4
      %v762 = vpop.permute.xlu0 %761
      %763 = vrot.lane.b32.xlu0 %v598, 4
      %v764 = vpop.permute.xlu0 %763
      %765 = vrot.lane.b32.xlu0 %v603, 4
      %v766 = vpop.permute.xlu0 %765
      %767 = vrot.lane.b32.xlu0 %v608, 4
      %v768 = vpop.permute.xlu0 %767
      %769 = vrot.lane.b32.xlu0 %v613, 4
      %v770 = vpop.permute.xlu0 %769
      %771 = vrot.lane.b32.xlu0 %v618, 4
      %v772 = vpop.permute.xlu0 %771
      %773 = vrot.lane.b32.xlu0 %v623, 4
      %v774 = vpop.permute.xlu0 %773
      %775 = vrot.lane.b32.xlu0 %v628, 4
      %v776 = vpop.permute.xlu0 %775
      %777 = vrot.lane.b32.xlu0 %v633, 4
      %v778 = vpop.permute.xlu0 %777
      %779 = vrot.lane.b32.xlu0 %v638, 4
      %v780 = vpop.permute.xlu0 %779
      %781 = vrot.lane.b32.xlu0 %v643, 4
      %v782 = vpop.permute.xlu0 %781
      %783 = vrot.lane.b32.xlu0 %v648, 4
      %v784 = vpop.permute.xlu0 %783
      %785 = vrot.lane.b32.xlu0 %v653, 4
      %v786 = vpop.permute.xlu0 %785
      %787 = vrot.lane.b32.xlu0 %v658, 4
      %v788 = vpop.permute.xlu0 %787
      %vm821 = vcmask 31744
      %v822 = vsel %vm821, %v661, %v726
      %v823 = vsel %vm821, %v662, %v728
      %v824 = vsel %vm821, %v663, %v730
      %v825 = vsel %vm821, %v664, %v732
      %v826 = vsel %vm821, %v665, %v734
      %v827 = vsel %vm821, %v666, %v736
      %v828 = vsel %vm821, %v667, %v738
      %v829 = vsel %vm821, %v668, %v740
      %v830 = vsel %vm821, %v669, %v742
      %v831 = vsel %vm821, %v670, %v744
      %v832 = vsel %vm821, %v671, %v746
      %v833 = vsel %vm821, %v672, %v748
      %v834 = vsel %vm821, %v673, %v750
      %v835 = vsel %vm821, %v674, %v752
      %v836 = vsel %vm821, %v675, %v754
      %v837 = vsel %vm821, %v676, %v756
      %v838 = vsel %vm821, %v677, %v758
      %v839 = vsel %vm821, %v678, %v760
      %v840 = vsel %vm821, %v679, %v762
      %v841 = vsel %vm821, %v680, %v764
      %v842 = vsel %vm821, %v681, %v766
      %v843 = vsel %vm821, %v682, %v768
      %v844 = vsel %vm821, %v683, %v770
      %v845 = vsel %vm821, %v684, %v772
      %v846 = vsel %vm821, %v685, %v774
      %v847 = vsel %vm821, %v686, %v776
      %v848 = vsel %vm821, %v687, %v778
      %v849 = vsel %vm821, %v688, %v780
      %v850 = vsel %vm821, %v689, %v782
      %v851 = vsel %vm821, %v690, %v784
      %v852 = vsel %vm821, %v691, %v786
      %v853 = vsel %vm821, %v692, %v788
      %v854 = vld [vmem:[%s3] sm:$0xff]
      %v855 = vld [vmem:[%s3 + $0x8] sm:$0xff]
      %v856 = vld [vmem:[%s3 + $0x10] sm:$0xff]
      %v857 = vld [vmem:[%s3 + $0x18] sm:$0xff]
      %v858 = vld [vmem:[%s3 + $0x20] sm:$0xff]
      %v859 = vld [vmem:[%s3 + $0x28] sm:$0xff]
      %v860 = vld [vmem:[%s3 + $0x30] sm:$0xff]
      %v861 = vld [vmem:[%s3 + $0x38] sm:$0xff]
      %v862 = vld [vmem:[%s3 + $0x40] sm:$0xff]
      %v863 = vld [vmem:[%s4] sm:$0x1]
      %v880 = vrot.slane %v824, 1
      %v881 = vrot.slane %v822, 1
      %v882 = vrot.slane %v826, 1
      %v883 = vrot.slane %v828, 1
      %v884 = vrot.slane %v830, 1
      %v885 = vrot.slane %v832, 1
      %v886 = vrot.slane %v834, 1
      %v887 = vrot.slane %v836, 1
      %v888 = vrot.slane %v838, 1
      %v889 = vrot.slane %v840, 1
      %v890 = vrot.slane %v842, 1
      %v891 = vrot.slane %v844, 1
      %v892 = vrot.slane %v846, 1
      %v893 = vrot.slane %v848, 1
      %v894 = vrot.slane %v850, 1
      %v895 = vrot.slane %v852, 1
      %vm928 = vcmask 1040384
      %v929 = vrot.slane %v824, 7
      %v930 = vrot.slane %v825, 7
      %v931 = vsel %vm928, %v929, %v930
      %v932 = vrot.slane %v822, 7
      %v933 = vrot.slane %v823, 7
      %v934 = vsel %vm928, %v932, %v933
      %v935 = vrot.slane %v826, 7
      %v936 = vrot.slane %v827, 7
      %v937 = vsel %vm928, %v935, %v936
      %v938 = vrot.slane %v828, 7
      %v939 = vrot.slane %v829, 7
      %v940 = vsel %vm928, %v938, %v939
      %v941 = vrot.slane %v830, 7
      %v942 = vrot.slane %v831, 7
      %v943 = vsel %vm928, %v941, %v942
      %v944 = vrot.slane %v832, 7
      %v945 = vrot.slane %v833, 7
      %v946 = vsel %vm928, %v944, %v945
      %v947 = vrot.slane %v834, 7
      %v948 = vrot.slane %v835, 7
      %v949 = vsel %vm928, %v947, %v948
      %v950 = vrot.slane %v836, 7
      %v951 = vrot.slane %v837, 7
      %v952 = vsel %vm928, %v950, %v951
      %v953 = vrot.slane %v838, 7
      %v954 = vrot.slane %v839, 7
      %v955 = vsel %vm928, %v953, %v954
      %v956 = vrot.slane %v840, 7
      %v957 = vrot.slane %v841, 7
      %v958 = vsel %vm928, %v956, %v957
      %v959 = vrot.slane %v842, 7
      %v960 = vrot.slane %v843, 7
      %v961 = vsel %vm928, %v959, %v960
      %v962 = vrot.slane %v844, 7
      %v963 = vrot.slane %v845, 7
      %v964 = vsel %vm928, %v962, %v963
      %v965 = vrot.slane %v846, 7
      %v966 = vrot.slane %v847, 7
      %v967 = vsel %vm928, %v965, %v966
      %v968 = vrot.slane %v848, 7
      %v969 = vrot.slane %v849, 7
      %v970 = vsel %vm928, %v968, %v969
      %v971 = vrot.slane %v850, 7
      %v972 = vrot.slane %v851, 7
      %v973 = vsel %vm928, %v971, %v972
      %v974 = vrot.slane %v852, 7
      %v975 = vrot.slane %v853, 7
      %v976 = vsel %vm928, %v974, %v975
      %v1024 = vrot.slane %v825, 5
      %v1025 = vrot.slane %v823, 5
      %v1026 = vrot.slane %v827, 5
      %v1027 = vrot.slane %v829, 5
      %v1028 = vrot.slane %v831, 5
      %v1029 = vrot.slane %v833, 5
      %v1030 = vrot.slane %v835, 5
      %v1031 = vrot.slane %v837, 5
      %v1032 = vrot.slane %v839, 5
      %v1033 = vrot.slane %v841, 5
      %v1034 = vrot.slane %v843, 5
      %v1035 = vrot.slane %v845, 5
      %v1036 = vrot.slane %v847, 5
      %v1037 = vrot.slane %v849, 5
      %v1038 = vrot.slane %v851, 5
      %v1039 = vrot.slane %v853, 5
      %v1056 = vsel %vm928, %v880, %v929
      %v1057 = vsel %vm928, %v881, %v932
      %v1058 = vsel %vm928, %v882, %v935
      %v1059 = vsel %vm928, %v883, %v938
      %v1060 = vsel %vm928, %v884, %v941
      %v1061 = vsel %vm928, %v885, %v944
      %v1062 = vsel %vm928, %v886, %v947
      %v1063 = vsel %vm928, %v887, %v950
      %v1064 = vsel %vm928, %v888, %v953
      %v1065 = vsel %vm928, %v889, %v956
      %v1066 = vsel %vm928, %v890, %v959
      %v1067 = vsel %vm928, %v891, %v962
      %v1068 = vsel %vm928, %v892, %v965
      %v1069 = vsel %vm928, %v893, %v968
      %v1070 = vsel %vm928, %v894, %v971
      %v1071 = vsel %vm928, %v895, %v974
      %v1072 = vsel %vm928, %v930, %v1024
      %v1073 = vsel %vm928, %v933, %v1025
      %v1074 = vsel %vm928, %v936, %v1026
      %v1075 = vsel %vm928, %v939, %v1027
      %v1076 = vsel %vm928, %v942, %v1028
      %v1077 = vsel %vm928, %v945, %v1029
      %v1078 = vsel %vm928, %v948, %v1030
      %v1079 = vsel %vm928, %v951, %v1031
      %v1080 = vsel %vm928, %v954, %v1032
      %v1081 = vsel %vm928, %v957, %v1033
      %v1082 = vsel %vm928, %v960, %v1034
      %v1083 = vsel %vm928, %v963, %v1035
      %v1084 = vsel %vm928, %v966, %v1036
      %v1085 = vsel %vm928, %v969, %v1037
      %v1086 = vsel %vm928, %v972, %v1038
      %v1087 = vsel %vm928, %v975, %v1039
      %vm1118 = vcmask 1046528
      %v1119 = vrot.slane %v1056, 1
      %v1120 = vrot.slane %v931, 1
      %v1121 = vsel %vm1118, %v1119, %v1120
      %v1122 = vrot.slane %v1072, 1
      %v1123 = vsel %vm1118, %v1120, %v1122
      %v1124 = vrot.slane %v1057, 1
      %v1125 = vrot.slane %v934, 1
      %v1126 = vsel %vm1118, %v1124, %v1125
      %v1127 = vrot.slane %v1073, 1
      %v1128 = vsel %vm1118, %v1125, %v1127
      %v1129 = vrot.slane %v1058, 1
      %v1130 = vrot.slane %v937, 1
      %v1131 = vsel %vm1118, %v1129, %v1130
      %v1132 = vrot.slane %v1074, 1
      %v1133 = vsel %vm1118, %v1130, %v1132
      %v1134 = vrot.slane %v1059, 1
      %v1135 = vrot.slane %v940, 1
      %v1136 = vsel %vm1118, %v1134, %v1135
      %v1137 = vrot.slane %v1075, 1
      %v1138 = vsel %vm1118, %v1135, %v1137
      %v1139 = vrot.slane %v1060, 1
      %v1140 = vrot.slane %v943, 1
      %v1141 = vsel %vm1118, %v1139, %v1140
      %v1142 = vrot.slane %v1076, 1
      %v1143 = vsel %vm1118, %v1140, %v1142
      %v1144 = vrot.slane %v1061, 1
      %v1145 = vrot.slane %v946, 1
      %v1146 = vsel %vm1118, %v1144, %v1145
      %v1147 = vrot.slane %v1077, 1
      %v1148 = vsel %vm1118, %v1145, %v1147
      %v1149 = vrot.slane %v1062, 1
      %v1150 = vrot.slane %v949, 1
      %v1151 = vsel %vm1118, %v1149, %v1150
      %v1152 = vrot.slane %v1078, 1
      %v1153 = vsel %vm1118, %v1150, %v1152
      %v1154 = vrot.slane %v1063, 1
      %v1155 = vrot.slane %v952, 1
      %v1156 = vsel %vm1118, %v1154, %v1155
      %v1157 = vrot.slane %v1079, 1
      %v1158 = vsel %vm1118, %v1155, %v1157
      %v1159 = vrot.slane %v1064, 1
      %v1160 = vrot.slane %v955, 1
      %v1161 = vsel %vm1118, %v1159, %v1160
      %v1162 = vrot.slane %v1080, 1
      %v1163 = vsel %vm1118, %v1160, %v1162
      %v1164 = vrot.slane %v1065, 1
      %v1165 = vrot.slane %v958, 1
      %v1166 = vsel %vm1118, %v1164, %v1165
      %v1167 = vrot.slane %v1081, 1
      %v1168 = vsel %vm1118, %v1165, %v1167
      %v1169 = vrot.slane %v1066, 1
      %v1170 = vrot.slane %v961, 1
      %v1171 = vsel %vm1118, %v1169, %v1170
      %v1172 = vrot.slane %v1082, 1
      %v1173 = vsel %vm1118, %v1170, %v1172
      %v1174 = vrot.slane %v1067, 1
      %v1175 = vrot.slane %v964, 1
      %v1176 = vsel %vm1118, %v1174, %v1175
      %v1177 = vrot.slane %v1083, 1
      %v1178 = vsel %vm1118, %v1175, %v1177
      %v1179 = vrot.slane %v1068, 1
      %v1180 = vrot.slane %v967, 1
      %v1181 = vsel %vm1118, %v1179, %v1180
      %v1182 = vrot.slane %v1084, 1
      %v1183 = vsel %vm1118, %v1180, %v1182
      %v1184 = vrot.slane %v1069, 1
      %v1185 = vrot.slane %v970, 1
      %v1186 = vsel %vm1118, %v1184, %v1185
      %v1187 = vrot.slane %v1085, 1
      %v1188 = vsel %vm1118, %v1185, %v1187
      %v1189 = vrot.slane %v1070, 1
      %v1190 = vrot.slane %v973, 1
      %v1191 = vsel %vm1118, %v1189, %v1190
      %v1192 = vrot.slane %v1086, 1
      %v1193 = vsel %vm1118, %v1190, %v1192
      %vm1194 = vcmask 1045504
      %v1195 = vrot.slane %v1056, 2
      %v1196 = vrot.slane %v931, 2
      %v1197 = vsel %vm1194, %v1195, %v1196
      %v1198 = vrot.slane %v1072, 2
      %v1199 = vsel %vm1194, %v1196, %v1198
      %v1200 = vrot.slane %v1057, 2
      %v1201 = vrot.slane %v934, 2
      %v1202 = vsel %vm1194, %v1200, %v1201
      %v1203 = vrot.slane %v1073, 2
      %v1204 = vsel %vm1194, %v1201, %v1203
      %v1205 = vrot.slane %v1058, 2
      %v1206 = vrot.slane %v937, 2
      %v1207 = vsel %vm1194, %v1205, %v1206
      %v1208 = vrot.slane %v1074, 2
      %v1209 = vsel %vm1194, %v1206, %v1208
      %v1210 = vrot.slane %v1059, 2
      %v1211 = vrot.slane %v940, 2
      %v1212 = vsel %vm1194, %v1210, %v1211
      %v1213 = vrot.slane %v1075, 2
      %v1214 = vsel %vm1194, %v1211, %v1213
      %v1215 = vrot.slane %v1060, 2
      %v1216 = vrot.slane %v943, 2
      %v1217 = vsel %vm1194, %v1215, %v1216
      %v1218 = vrot.slane %v1076, 2
      %v1219 = vsel %vm1194, %v1216, %v1218
      %v1220 = vrot.slane %v1061, 2
      %v1221 = vrot.slane %v946, 2
      %v1222 = vsel %vm1194, %v1220, %v1221
      %v1223 = vrot.slane %v1077, 2
      %v1224 = vsel %vm1194, %v1221, %v1223
      %v1225 = vrot.slane %v1062, 2
      %v1226 = vrot.slane %v949, 2
      %v1227 = vsel %vm1194, %v1225, %v1226
      %v1228 = vrot.slane %v1078, 2
      %v1229 = vsel %vm1194, %v1226, %v1228
      %v1230 = vrot.slane %v1063, 2
      %v1231 = vrot.slane %v952, 2
      %v1232 = vsel %vm1194, %v1230, %v1231
      %v1233 = vrot.slane %v1079, 2
      %v1234 = vsel %vm1194, %v1231, %v1233
      %v1235 = vrot.slane %v1064, 2
      %v1236 = vrot.slane %v955, 2
      %v1237 = vsel %vm1194, %v1235, %v1236
      %v1238 = vrot.slane %v1080, 2
      %v1239 = vsel %vm1194, %v1236, %v1238
      %v1240 = vrot.slane %v1065, 2
      %v1241 = vrot.slane %v958, 2
      %v1242 = vsel %vm1194, %v1240, %v1241
      %v1243 = vrot.slane %v1081, 2
      %v1244 = vsel %vm1194, %v1241, %v1243
      %v1245 = vrot.slane %v1066, 2
      %v1246 = vrot.slane %v961, 2
      %v1247 = vsel %vm1194, %v1245, %v1246
      %v1248 = vrot.slane %v1082, 2
      %v1249 = vsel %vm1194, %v1246, %v1248
      %v1250 = vrot.slane %v1067, 2
      %v1251 = vrot.slane %v964, 2
      %v1252 = vsel %vm1194, %v1250, %v1251
      %v1253 = vrot.slane %v1083, 2
      %v1254 = vsel %vm1194, %v1251, %v1253
      %v1255 = vrot.slane %v1068, 2
      %v1256 = vrot.slane %v967, 2
      %v1257 = vsel %vm1194, %v1255, %v1256
      %v1258 = vrot.slane %v1084, 2
      %v1259 = vsel %vm1194, %v1256, %v1258
      %v1260 = vrot.slane %v1069, 2
      %v1261 = vrot.slane %v970, 2
      %v1262 = vsel %vm1194, %v1260, %v1261
      %v1263 = vrot.slane %v1085, 2
      %v1264 = vsel %vm1194, %v1261, %v1263
      %v1265 = vrot.slane %v1070, 2
      %v1266 = vrot.slane %v973, 2
      %v1267 = vsel %vm1194, %v1265, %v1266
      %v1268 = vrot.slane %v1086, 2
      %v1269 = vsel %vm1194, %v1266, %v1268
      %v1272 = vrot.slane %v1071, 1
      %v1273 = vrot.slane %v976, 1
      %v1274 = vsel %vm1118, %v1272, %v1273
      %v1275 = vrot.slane %v1087, 1
      %v1276 = vsel %vm1118, %v1273, %v1275
      %v1277 = vrot.slane %v1071, 2
      %v1278 = vrot.slane %v976, 2
      %v1279 = vsel %vm1194, %v1277, %v1278
      %v1280 = vrot.slane %v1087, 2
      %v1281 = vsel %vm1194, %v1278, %v1280
      %1282 = vrot.lane.b32.xlu0 %v1121, 8
      %v1283 = vpop.permute.xlu0 %1282
      %1284 = vrot.lane.b32.xlu0 %v1123, 8
      %v1285 = vpop.permute.xlu0 %1284
      %1286 = vrot.lane.b32.xlu0 %v1126, 8
      %v1287 = vpop.permute.xlu0 %1286
      %1288 = vrot.lane.b32.xlu0 %v1128, 8
      %v1289 = vpop.permute.xlu0 %1288
      %1290 = vrot.lane.b32.xlu0 %v1131, 8
      %v1291 = vpop.permute.xlu0 %1290
      %1292 = vrot.lane.b32.xlu0 %v1133, 8
      %v1293 = vpop.permute.xlu0 %1292
      %1294 = vrot.lane.b32.xlu0 %v1136, 8
      %v1295 = vpop.permute.xlu0 %1294
      %1296 = vrot.lane.b32.xlu0 %v1138, 8
      %v1297 = vpop.permute.xlu0 %1296
      %1298 = vrot.lane.b32.xlu0 %v1141, 8
      %v1299 = vpop.permute.xlu0 %1298
      %1300 = vrot.lane.b32.xlu0 %v1143, 8
      %v1301 = vpop.permute.xlu0 %1300
      %1302 = vrot.lane.b32.xlu0 %v1146, 8
      %v1303 = vpop.permute.xlu0 %1302
      %1304 = vrot.lane.b32.xlu0 %v1148, 8
      %v1305 = vpop.permute.xlu0 %1304
      %1306 = vrot.lane.b32.xlu0 %v1151, 8
      %v1307 = vpop.permute.xlu0 %1306
      %1308 = vrot.lane.b32.xlu0 %v1153, 8
      %v1309 = vpop.permute.xlu0 %1308
      %1310 = vrot.lane.b32.xlu0 %v1156, 8
      %v1311 = vpop.permute.xlu0 %1310
      %1312 = vrot.lane.b32.xlu0 %v1158, 8
      %v1313 = vpop.permute.xlu0 %1312
      %1314 = vrot.lane.b32.xlu0 %v1161, 8
      %v1315 = vpop.permute.xlu0 %1314
      %1316 = vrot.lane.b32.xlu0 %v1163, 8
      %v1317 = vpop.permute.xlu0 %1316
      %1318 = vrot.lane.b32.xlu0 %v1166, 8
      %v1319 = vpop.permute.xlu0 %1318
      %1320 = vrot.lane.b32.xlu0 %v1168, 8
      %v1321 = vpop.permute.xlu0 %1320
      %1322 = vrot.lane.b32.xlu0 %v1171, 8
      %v1323 = vpop.permute.xlu0 %1322
      %1324 = vrot.lane.b32.xlu0 %v1173, 8
      %v1325 = vpop.permute.xlu0 %1324
      %1326 = vrot.lane.b32.xlu0 %v1176, 8
      %v1327 = vpop.permute.xlu0 %1326
      %1328 = vrot.lane.b32.xlu0 %v1178, 8
      %v1329 = vpop.permute.xlu0 %1328
      %1330 = vrot.lane.b32.xlu0 %v1181, 8
      %v1331 = vpop.permute.xlu0 %1330
      %1332 = vrot.lane.b32.xlu0 %v1183, 8
      %v1333 = vpop.permute.xlu0 %1332
      %1334 = vrot.lane.b32.xlu0 %v1186, 8
      %v1335 = vpop.permute.xlu0 %1334
      %1336 = vrot.lane.b32.xlu0 %v1188, 8
      %v1337 = vpop.permute.xlu0 %1336
      %1338 = vrot.lane.b32.xlu0 %v1191, 8
      %v1339 = vpop.permute.xlu0 %1338
      %1340 = vrot.lane.b32.xlu0 %v1193, 8
      %v1341 = vpop.permute.xlu0 %1340
      %1372 = vrot.lane.b32.xlu0 %v1197, 16
      %v1373 = vpop.permute.xlu0 %1372
      %1374 = vrot.lane.b32.xlu0 %v1199, 16
      %v1375 = vpop.permute.xlu0 %1374
      %1376 = vrot.lane.b32.xlu0 %v1202, 16
      %v1377 = vpop.permute.xlu0 %1376
      %1378 = vrot.lane.b32.xlu0 %v1204, 16
      %v1379 = vpop.permute.xlu0 %1378
      %1380 = vrot.lane.b32.xlu0 %v1207, 16
      %v1381 = vpop.permute.xlu0 %1380
      %1382 = vrot.lane.b32.xlu0 %v1209, 16
      %v1383 = vpop.permute.xlu0 %1382
      %1384 = vrot.lane.b32.xlu0 %v1212, 16
      %v1385 = vpop.permute.xlu0 %1384
      %1386 = vrot.lane.b32.xlu0 %v1214, 16
      %v1387 = vpop.permute.xlu0 %1386
      %1388 = vrot.lane.b32.xlu0 %v1217, 16
      %v1389 = vpop.permute.xlu0 %1388
      %1390 = vrot.lane.b32.xlu0 %v1219, 16
      %v1391 = vpop.permute.xlu0 %1390
      %1392 = vrot.lane.b32.xlu0 %v1222, 16
      %v1393 = vpop.permute.xlu0 %1392
      %1394 = vrot.lane.b32.xlu0 %v1224, 16
      %v1395 = vpop.permute.xlu0 %1394
      %1396 = vrot.lane.b32.xlu0 %v1227, 16
      %v1397 = vpop.permute.xlu0 %1396
      %1398 = vrot.lane.b32.xlu0 %v1229, 16
      %v1399 = vpop.permute.xlu0 %1398
      %1400 = vrot.lane.b32.xlu0 %v1232, 16
      %v1401 = vpop.permute.xlu0 %1400
      %1402 = vrot.lane.b32.xlu0 %v1234, 16
      %v1403 = vpop.permute.xlu0 %1402
      %1404 = vrot.lane.b32.xlu0 %v1237, 16
      %v1405 = vpop.permute.xlu0 %1404
      %1406 = vrot.lane.b32.xlu0 %v1239, 16
      %v1407 = vpop.permute.xlu0 %1406
      %1408 = vrot.lane.b32.xlu0 %v1242, 16
      %v1409 = vpop.permute.xlu0 %1408
      %1410 = vrot.lane.b32.xlu0 %v1244, 16
      %v1411 = vpop.permute.xlu0 %1410
      %1412 = vrot.lane.b32.xlu0 %v1247, 16
      %v1413 = vpop.permute.xlu0 %1412
      %1414 = vrot.lane.b32.xlu0 %v1249, 16
      %v1415 = vpop.permute.xlu0 %1414
      %1416 = vrot.lane.b32.xlu0 %v1252, 16
      %v1417 = vpop.permute.xlu0 %1416
      %1418 = vrot.lane.b32.xlu0 %v1254, 16
      %v1419 = vpop.permute.xlu0 %1418
      %1420 = vrot.lane.b32.xlu0 %v1257, 16
      %v1421 = vpop.permute.xlu0 %1420
      %1422 = vrot.lane.b32.xlu0 %v1259, 16
      %v1423 = vpop.permute.xlu0 %1422
      %1424 = vrot.lane.b32.xlu0 %v1262, 16
      %v1425 = vpop.permute.xlu0 %1424
      %1426 = vrot.lane.b32.xlu0 %v1264, 16
      %v1427 = vpop.permute.xlu0 %1426
      %1428 = vrot.lane.b32.xlu0 %v1267, 16
      %v1429 = vpop.permute.xlu0 %1428
      %1430 = vrot.lane.b32.xlu0 %v1269, 16
      %v1431 = vpop.permute.xlu0 %1430
      %1462 = vrot.lane.b32.xlu0 %v1057, 24
      %v1463 = vpop.permute.xlu0 %1462
      %1464 = vrot.lane.b32.xlu0 %v934, 24
      %v1465 = vpop.permute.xlu0 %1464
      %1466 = vrot.lane.b32.xlu0 %v1056, 24
      %v1467 = vpop.permute.xlu0 %1466
      %1468 = vrot.lane.b32.xlu0 %v931, 24
      %v1469 = vpop.permute.xlu0 %1468
      %1470 = vrot.lane.b32.xlu0 %v1058, 24
      %v1471 = vpop.permute.xlu0 %1470
      %1472 = vrot.lane.b32.xlu0 %v937, 24
      %v1473 = vpop.permute.xlu0 %1472
      %1474 = vrot.lane.b32.xlu0 %v1059, 24
      %v1475 = vpop.permute.xlu0 %1474
      %1476 = vrot.lane.b32.xlu0 %v940, 24
      %v1477 = vpop.permute.xlu0 %1476
      %1478 = vrot.lane.b32.xlu0 %v1060, 24
      %v1479 = vpop.permute.xlu0 %1478
      %1480 = vrot.lane.b32.xlu0 %v943, 24
      %v1481 = vpop.permute.xlu0 %1480
      %1482 = vrot.lane.b32.xlu0 %v1061, 24
      %v1483 = vpop.permute.xlu0 %1482
      %1484 = vrot.lane.b32.xlu0 %v946, 24
      %v1485 = vpop.permute.xlu0 %1484
      %1486 = vrot.lane.b32.xlu0 %v1062, 24
      %v1487 = vpop.permute.xlu0 %1486
      %1488 = vrot.lane.b32.xlu0 %v949, 24
      %v1489 = vpop.permute.xlu0 %1488
      %1490 = vrot.lane.b32.xlu0 %v1063, 24
      %v1491 = vpop.permute.xlu0 %1490
      %1492 = vrot.lane.b32.xlu0 %v952, 24
      %v1493 = vpop.permute.xlu0 %1492
      %1494 = vrot.lane.b32.xlu0 %v1064, 24
      %v1495 = vpop.permute.xlu0 %1494
      %1496 = vrot.lane.b32.xlu0 %v955, 24
      %v1497 = vpop.permute.xlu0 %1496
      %1498 = vrot.lane.b32.xlu0 %v1065, 24
      %v1499 = vpop.permute.xlu0 %1498
      %1500 = vrot.lane.b32.xlu0 %v958, 24
      %v1501 = vpop.permute.xlu0 %1500
      %1502 = vrot.lane.b32.xlu0 %v1066, 24
      %v1503 = vpop.permute.xlu0 %1502
      %1504 = vrot.lane.b32.xlu0 %v961, 24
      %v1505 = vpop.permute.xlu0 %1504
      %1506 = vrot.lane.b32.xlu0 %v1067, 24
      %v1507 = vpop.permute.xlu0 %1506
      %1508 = vrot.lane.b32.xlu0 %v964, 24
      %v1509 = vpop.permute.xlu0 %1508
      %1510 = vrot.lane.b32.xlu0 %v1068, 24
      %v1511 = vpop.permute.xlu0 %1510
      %1512 = vrot.lane.b32.xlu0 %v967, 24
      %v1513 = vpop.permute.xlu0 %1512
      %1514 = vrot.lane.b32.xlu0 %v1069, 24
      %v1515 = vpop.permute.xlu0 %1514
      %1516 = vrot.lane.b32.xlu0 %v970, 24
      %v1517 = vpop.permute.xlu0 %1516
      %1518 = vrot.lane.b32.xlu0 %v1070, 24
      %v1519 = vpop.permute.xlu0 %1518
      %1520 = vrot.lane.b32.xlu0 %v973, 24
      %v1521 = vpop.permute.xlu0 %1520
      %1522 = vrot.lane.b32.xlu0 %v1071, 24
      %v1523 = vpop.permute.xlu0 %1522
      %1524 = vrot.lane.b32.xlu0 %v976, 24
      %v1525 = vpop.permute.xlu0 %1524
      %1558 = vrot.lane.b32.xlu0 %v1126, 32
      %v1559 = vpop.permute.xlu0 %1558
      %1560 = vrot.lane.b32.xlu0 %v1128, 32
      %v1561 = vpop.permute.xlu0 %1560
      %1562 = vrot.lane.b32.xlu0 %v1121, 32
      %v1563 = vpop.permute.xlu0 %1562
      %1564 = vrot.lane.b32.xlu0 %v1123, 32
      %v1565 = vpop.permute.xlu0 %1564
      %1566 = vrot.lane.b32.xlu0 %v1131, 32
      %v1567 = vpop.permute.xlu0 %1566
      %1568 = vrot.lane.b32.xlu0 %v1133, 32
      %v1569 = vpop.permute.xlu0 %1568
      %1570 = vrot.lane.b32.xlu0 %v1136, 32
      %v1571 = vpop.permute.xlu0 %1570
      %1572 = vrot.lane.b32.xlu0 %v1138, 32
      %v1573 = vpop.permute.xlu0 %1572
      %1574 = vrot.lane.b32.xlu0 %v1141, 32
      %v1575 = vpop.permute.xlu0 %1574
      %1576 = vrot.lane.b32.xlu0 %v1143, 32
      %v1577 = vpop.permute.xlu0 %1576
      %1578 = vrot.lane.b32.xlu0 %v1146, 32
      %v1579 = vpop.permute.xlu0 %1578
      %1580 = vrot.lane.b32.xlu0 %v1148, 32
      %v1581 = vpop.permute.xlu0 %1580
      %1582 = vrot.lane.b32.xlu0 %v1151, 32
      %v1583 = vpop.permute.xlu0 %1582
      %1584 = vrot.lane.b32.xlu0 %v1153, 32
      %v1585 = vpop.permute.xlu0 %1584
      %1586 = vrot.lane.b32.xlu0 %v1156, 32
      %v1587 = vpop.permute.xlu0 %1586
      %1588 = vrot.lane.b32.xlu0 %v1158, 32
      %v1589 = vpop.permute.xlu0 %1588
      %1590 = vrot.lane.b32.xlu0 %v1161, 32
      %v1591 = vpop.permute.xlu0 %1590
      %1592 = vrot.lane.b32.xlu0 %v1163, 32
      %v1593 = vpop.permute.xlu0 %1592
      %1594 = vrot.lane.b32.xlu0 %v1166, 32
      %v1595 = vpop.permute.xlu0 %1594
      %1596 = vrot.lane.b32.xlu0 %v1168, 32
      %v1597 = vpop.permute.xlu0 %1596
      %1598 = vrot.lane.b32.xlu0 %v1171, 32
      %v1599 = vpop.permute.xlu0 %1598
      %1600 = vrot.lane.b32.xlu0 %v1173, 32
      %v1601 = vpop.permute.xlu0 %1600
      %1602 = vrot.lane.b32.xlu0 %v1176, 32
      %v1603 = vpop.permute.xlu0 %1602
      %1604 = vrot.lane.b32.xlu0 %v1178, 32
      %v1605 = vpop.permute.xlu0 %1604
      %1606 = vrot.lane.b32.xlu0 %v1181, 32
      %v1607 = vpop.permute.xlu0 %1606
      %1608 = vrot.lane.b32.xlu0 %v1183, 32
      %v1609 = vpop.permute.xlu0 %1608
      %1610 = vrot.lane.b32.xlu0 %v1186, 32
      %v1611 = vpop.permute.xlu0 %1610
      %1612 = vrot.lane.b32.xlu0 %v1188, 32
      %v1613 = vpop.permute.xlu0 %1612
      %1614 = vrot.lane.b32.xlu0 %v1191, 32
      %v1615 = vpop.permute.xlu0 %1614
      %1616 = vrot.lane.b32.xlu0 %v1193, 32
      %v1617 = vpop.permute.xlu0 %1616
      %1618 = vrot.lane.b32.xlu0 %v1274, 32
      %v1619 = vpop.permute.xlu0 %1618
      %1620 = vrot.lane.b32.xlu0 %v1276, 32
      %v1621 = vpop.permute.xlu0 %1620
      %1654 = vrot.lane.b32.xlu0 %v1202, 40
      %v1655 = vpop.permute.xlu0 %1654
      %1656 = vrot.lane.b32.xlu0 %v1204, 40
      %v1657 = vpop.permute.xlu0 %1656
      %1658 = vrot.lane.b32.xlu0 %v1197, 40
      %v1659 = vpop.permute.xlu0 %1658
      %1660 = vrot.lane.b32.xlu0 %v1199, 40
      %v1661 = vpop.permute.xlu0 %1660
      %1662 = vrot.lane.b32.xlu0 %v1207, 40
      %v1663 = vpop.permute.xlu0 %1662
      %1664 = vrot.lane.b32.xlu0 %v1209, 40
      %v1665 = vpop.permute.xlu0 %1664
      %1666 = vrot.lane.b32.xlu0 %v1212, 40
      %v1667 = vpop.permute.xlu0 %1666
      %1668 = vrot.lane.b32.xlu0 %v1214, 40
      %v1669 = vpop.permute.xlu0 %1668
      %1670 = vrot.lane.b32.xlu0 %v1217, 40
      %v1671 = vpop.permute.xlu0 %1670
      %1672 = vrot.lane.b32.xlu0 %v1219, 40
      %v1673 = vpop.permute.xlu0 %1672
      %1674 = vrot.lane.b32.xlu0 %v1222, 40
      %v1675 = vpop.permute.xlu0 %1674
      %1676 = vrot.lane.b32.xlu0 %v1224, 40
      %v1677 = vpop.permute.xlu0 %1676
      %1678 = vrot.lane.b32.xlu0 %v1227, 40
      %v1679 = vpop.permute.xlu0 %1678
      %1680 = vrot.lane.b32.xlu0 %v1229, 40
      %v1681 = vpop.permute.xlu0 %1680
      %1682 = vrot.lane.b32.xlu0 %v1232, 40
      %v1683 = vpop.permute.xlu0 %1682
      %1684 = vrot.lane.b32.xlu0 %v1234, 40
      %v1685 = vpop.permute.xlu0 %1684
      %1686 = vrot.lane.b32.xlu0 %v1237, 40
      %v1687 = vpop.permute.xlu0 %1686
      %1688 = vrot.lane.b32.xlu0 %v1239, 40
      %v1689 = vpop.permute.xlu0 %1688
      %1690 = vrot.lane.b32.xlu0 %v1242, 40
      %v1691 = vpop.permute.xlu0 %1690
      %1692 = vrot.lane.b32.xlu0 %v1244, 40
      %v1693 = vpop.permute.xlu0 %1692
      %1694 = vrot.lane.b32.xlu0 %v1247, 40
      %v1695 = vpop.permute.xlu0 %1694
      %1696 = vrot.lane.b32.xlu0 %v1249, 40
      %v1697 = vpop.permute.xlu0 %1696
      %1698 = vrot.lane.b32.xlu0 %v1252, 40
      %v1699 = vpop.permute.xlu0 %1698
      %1700 = vrot.lane.b32.xlu0 %v1254, 40
      %v1701 = vpop.permute.xlu0 %1700
      %1702 = vrot.lane.b32.xlu0 %v1257, 40
      %v1703 = vpop.permute.xlu0 %1702
      %1704 = vrot.lane.b32.xlu0 %v1259, 40
      %v1705 = vpop.permute.xlu0 %1704
      %1706 = vrot.lane.b32.xlu0 %v1262, 40
      %v1707 = vpop.permute.xlu0 %1706
      %1708 = vrot.lane.b32.xlu0 %v1264, 40
      %v1709 = vpop.permute.xlu0 %1708
      %1710 = vrot.lane.b32.xlu0 %v1267, 40
      %v1711 = vpop.permute.xlu0 %1710
      %1712 = vrot.lane.b32.xlu0 %v1269, 40
      %v1713 = vpop.permute.xlu0 %1712
      %1714 = vrot.lane.b32.xlu0 %v1279, 40
      %v1715 = vpop.permute.xlu0 %1714
      %1716 = vrot.lane.b32.xlu0 %v1281, 40
      %v1717 = vpop.permute.xlu0 %1716
      %1750 = vrot.lane.b32.xlu0 %v1056, 48
      %v1751 = vpop.permute.xlu0 %1750
      %1752 = vrot.lane.b32.xlu0 %v931, 48
      %v1753 = vpop.permute.xlu0 %1752
      %1754 = vrot.lane.b32.xlu0 %v1058, 48
      %v1755 = vpop.permute.xlu0 %1754
      %1756 = vrot.lane.b32.xlu0 %v937, 48
      %v1757 = vpop.permute.xlu0 %1756
      %1758 = vrot.lane.b32.xlu0 %v1059, 48
      %v1759 = vpop.permute.xlu0 %1758
      %1760 = vrot.lane.b32.xlu0 %v940, 48
      %v1761 = vpop.permute.xlu0 %1760
      %1762 = vrot.lane.b32.xlu0 %v1060, 48
      %v1763 = vpop.permute.xlu0 %1762
      %1764 = vrot.lane.b32.xlu0 %v943, 48
      %v1765 = vpop.permute.xlu0 %1764
      %1766 = vrot.lane.b32.xlu0 %v1061, 48
      %v1767 = vpop.permute.xlu0 %1766
      %1768 = vrot.lane.b32.xlu0 %v946, 48
      %v1769 = vpop.permute.xlu0 %1768
      %1770 = vrot.lane.b32.xlu0 %v1062, 48
      %v1771 = vpop.permute.xlu0 %1770
      %1772 = vrot.lane.b32.xlu0 %v949, 48
      %v1773 = vpop.permute.xlu0 %1772
      %1774 = vrot.lane.b32.xlu0 %v1063, 48
      %v1775 = vpop.permute.xlu0 %1774
      %1776 = vrot.lane.b32.xlu0 %v952, 48
      %v1777 = vpop.permute.xlu0 %1776
      %1778 = vrot.lane.b32.xlu0 %v1064, 48
      %v1779 = vpop.permute.xlu0 %1778
      %1780 = vrot.lane.b32.xlu0 %v955, 48
      %v1781 = vpop.permute.xlu0 %1780
      %1782 = vrot.lane.b32.xlu0 %v1065, 48
      %v1783 = vpop.permute.xlu0 %1782
      %1784 = vrot.lane.b32.xlu0 %v958, 48
      %v1785 = vpop.permute.xlu0 %1784
      %1786 = vrot.lane.b32.xlu0 %v1066, 48
      %v1787 = vpop.permute.xlu0 %1786
      %1788 = vrot.lane.b32.xlu0 %v961, 48
      %v1789 = vpop.permute.xlu0 %1788
      %1790 = vrot.lane.b32.xlu0 %v1067, 48
      %v1791 = vpop.permute.xlu0 %1790
      %1792 = vrot.lane.b32.xlu0 %v964, 48
      %v1793 = vpop.permute.xlu0 %1792
      %1794 = vrot.lane.b32.xlu0 %v1068, 48
      %v1795 = vpop.permute.xlu0 %1794
      %1796 = vrot.lane.b32.xlu0 %v967, 48
      %v1797 = vpop.permute.xlu0 %1796
      %1798 = vrot.lane.b32.xlu0 %v1069, 48
      %v1799 = vpop.permute.xlu0 %1798
      %1800 = vrot.lane.b32.xlu0 %v970, 48
      %v1801 = vpop.permute.xlu0 %1800
      %1802 = vrot.lane.b32.xlu0 %v1070, 48
      %v1803 = vpop.permute.xlu0 %1802
      %1804 = vrot.lane.b32.xlu0 %v973, 48
      %v1805 = vpop.permute.xlu0 %1804
      %1806 = vrot.lane.b32.xlu0 %v1071, 48
      %v1807 = vpop.permute.xlu0 %1806
      %1808 = vrot.lane.b32.xlu0 %v976, 48
      %v1809 = vpop.permute.xlu0 %1808
      %1840 = vrot.lane.b32.xlu0 %v1121, 56
      %v1841 = vpop.permute.xlu0 %1840
      %1842 = vrot.lane.b32.xlu0 %v1123, 56
      %v1843 = vpop.permute.xlu0 %1842
      %1844 = vrot.lane.b32.xlu0 %v1131, 56
      %v1845 = vpop.permute.xlu0 %1844
      %1846 = vrot.lane.b32.xlu0 %v1133, 56
      %v1847 = vpop.permute.xlu0 %1846
      %1848 = vrot.lane.b32.xlu0 %v1136, 56
      %v1849 = vpop.permute.xlu0 %1848
      %1850 = vrot.lane.b32.xlu0 %v1138, 56
      %v1851 = vpop.permute.xlu0 %1850
      %1852 = vrot.lane.b32.xlu0 %v1141, 56
      %v1853 = vpop.permute.xlu0 %1852
      %1854 = vrot.lane.b32.xlu0 %v1143, 56
      %v1855 = vpop.permute.xlu0 %1854
      %1856 = vrot.lane.b32.xlu0 %v1146, 56
      %v1857 = vpop.permute.xlu0 %1856
      %1858 = vrot.lane.b32.xlu0 %v1148, 56
      %v1859 = vpop.permute.xlu0 %1858
      %1860 = vrot.lane.b32.xlu0 %v1151, 56
      %v1861 = vpop.permute.xlu0 %1860
      %1862 = vrot.lane.b32.xlu0 %v1153, 56
      %v1863 = vpop.permute.xlu0 %1862
      %1864 = vrot.lane.b32.xlu0 %v1156, 56
      %v1865 = vpop.permute.xlu0 %1864
      %1866 = vrot.lane.b32.xlu0 %v1158, 56
      %v1867 = vpop.permute.xlu0 %1866
      %1868 = vrot.lane.b32.xlu0 %v1161, 56
      %v1869 = vpop.permute.xlu0 %1868
      %1870 = vrot.lane.b32.xlu0 %v1163, 56
      %v1871 = vpop.permute.xlu0 %1870
      %1872 = vrot.lane.b32.xlu0 %v1166, 56
      %v1873 = vpop.permute.xlu0 %1872
      %1874 = vrot.lane.b32.xlu0 %v1168, 56
      %v1875 = vpop.permute.xlu0 %1874
      %1876 = vrot.lane.b32.xlu0 %v1171, 56
      %v1877 = vpop.permute.xlu0 %1876
      %1878 = vrot.lane.b32.xlu0 %v1173, 56
      %v1879 = vpop.permute.xlu0 %1878
      %1880 = vrot.lane.b32.xlu0 %v1176, 56
      %v1881 = vpop.permute.xlu0 %1880
      %1882 = vrot.lane.b32.xlu0 %v1178, 56
      %v1883 = vpop.permute.xlu0 %1882
      %1884 = vrot.lane.b32.xlu0 %v1181, 56
      %v1885 = vpop.permute.xlu0 %1884
      %1886 = vrot.lane.b32.xlu0 %v1183, 56
      %v1887 = vpop.permute.xlu0 %1886
      %1888 = vrot.lane.b32.xlu0 %v1186, 56
      %v1889 = vpop.permute.xlu0 %1888
      %1890 = vrot.lane.b32.xlu0 %v1188, 56
      %v1891 = vpop.permute.xlu0 %1890
      %1892 = vrot.lane.b32.xlu0 %v1191, 56
      %v1893 = vpop.permute.xlu0 %1892
      %1894 = vrot.lane.b32.xlu0 %v1193, 56
      %v1895 = vpop.permute.xlu0 %1894
      %1896 = vrot.lane.b32.xlu0 %v1274, 56
      %v1897 = vpop.permute.xlu0 %1896
      %1898 = vrot.lane.b32.xlu0 %v1276, 56
      %v1899 = vpop.permute.xlu0 %1898
      %1930 = vrot.lane.b32.xlu0 %v1197, 64
      %v1931 = vpop.permute.xlu0 %1930
      %1932 = vrot.lane.b32.xlu0 %v1199, 64
      %v1933 = vpop.permute.xlu0 %1932
      %1934 = vrot.lane.b32.xlu0 %v1207, 64
      %v1935 = vpop.permute.xlu0 %1934
      %1936 = vrot.lane.b32.xlu0 %v1209, 64
      %v1937 = vpop.permute.xlu0 %1936
      %1938 = vrot.lane.b32.xlu0 %v1212, 64
      %v1939 = vpop.permute.xlu0 %1938
      %1940 = vrot.lane.b32.xlu0 %v1214, 64
      %v1941 = vpop.permute.xlu0 %1940
      %1942 = vrot.lane.b32.xlu0 %v1217, 64
      %v1943 = vpop.permute.xlu0 %1942
      %1944 = vrot.lane.b32.xlu0 %v1219, 64
      %v1945 = vpop.permute.xlu0 %1944
      %1946 = vrot.lane.b32.xlu0 %v1222, 64
      %v1947 = vpop.permute.xlu0 %1946
      %1948 = vrot.lane.b32.xlu0 %v1224, 64
      %v1949 = vpop.permute.xlu0 %1948
      %1950 = vrot.lane.b32.xlu0 %v1227, 64
      %v1951 = vpop.permute.xlu0 %1950
      %1952 = vrot.lane.b32.xlu0 %v1229, 64
      %v1953 = vpop.permute.xlu0 %1952
      %1954 = vrot.lane.b32.xlu0 %v1232, 64
      %v1955 = vpop.permute.xlu0 %1954
      %1956 = vrot.lane.b32.xlu0 %v1234, 64
      %v1957 = vpop.permute.xlu0 %1956
      %1958 = vrot.lane.b32.xlu0 %v1237, 64
      %v1959 = vpop.permute.xlu0 %1958
      %1960 = vrot.lane.b32.xlu0 %v1239, 64
      %v1961 = vpop.permute.xlu0 %1960
      %1962 = vrot.lane.b32.xlu0 %v1242, 64
      %v1963 = vpop.permute.xlu0 %1962
      %1964 = vrot.lane.b32.xlu0 %v1244, 64
      %v1965 = vpop.permute.xlu0 %1964
      %1966 = vrot.lane.b32.xlu0 %v1247, 64
      %v1967 = vpop.permute.xlu0 %1966
      %1968 = vrot.lane.b32.xlu0 %v1249, 64
      %v1969 = vpop.permute.xlu0 %1968
      %1970 = vrot.lane.b32.xlu0 %v1252, 64
      %v1971 = vpop.permute.xlu0 %1970
      %1972 = vrot.lane.b32.xlu0 %v1254, 64
      %v1973 = vpop.permute.xlu0 %1972
      %1974 = vrot.lane.b32.xlu0 %v1257, 64
      %v1975 = vpop.permute.xlu0 %1974
      %1976 = vrot.lane.b32.xlu0 %v1259, 64
      %v1977 = vpop.permute.xlu0 %1976
      %1978 = vrot.lane.b32.xlu0 %v1262, 64
      %v1979 = vpop.permute.xlu0 %1978
      %1980 = vrot.lane.b32.xlu0 %v1264, 64
      %v1981 = vpop.permute.xlu0 %1980
      %1982 = vrot.lane.b32.xlu0 %v1267, 64
      %v1983 = vpop.permute.xlu0 %1982
      %1984 = vrot.lane.b32.xlu0 %v1269, 64
      %v1985 = vpop.permute.xlu0 %1984
      %1986 = vrot.lane.b32.xlu0 %v1279, 64
      %v1987 = vpop.permute.xlu0 %1986
      %1988 = vrot.lane.b32.xlu0 %v1281, 64
      %v1989 = vpop.permute.xlu0 %1988
      %vm2020 = vcmask 64512
      %v2021 = vsel %vm2020, %v1056, %v1283
      %v2022 = vsel %vm2020, %v931, %v1285
      %v2023 = vsel %vm2020, %v1057, %v1287
      %v2024 = vsel %vm2020, %v934, %v1289
      %v2025 = vsel %vm2020, %v1058, %v1291
      %v2026 = vsel %vm2020, %v937, %v1293
      %v2027 = vsel %vm2020, %v1059, %v1295
      %v2028 = vsel %vm2020, %v940, %v1297
      %v2029 = vsel %vm2020, %v1060, %v1299
      %v2030 = vsel %vm2020, %v943, %v1301
      %v2031 = vsel %vm2020, %v1061, %v1303
      %v2032 = vsel %vm2020, %v946, %v1305
      %v2033 = vsel %vm2020, %v1062, %v1307
      %v2034 = vsel %vm2020, %v949, %v1309
      %v2035 = vsel %vm2020, %v1063, %v1311
      %v2036 = vsel %vm2020, %v952, %v1313
      %v2037 = vsel %vm2020, %v1064, %v1315
      %v2038 = vsel %vm2020, %v955, %v1317
      %v2039 = vsel %vm2020, %v1065, %v1319
      %v2040 = vsel %vm2020, %v958, %v1321
      %v2041 = vsel %vm2020, %v1066, %v1323
      %v2042 = vsel %vm2020, %v961, %v1325
      %v2043 = vsel %vm2020, %v1067, %v1327
      %v2044 = vsel %vm2020, %v964, %v1329
      %v2045 = vsel %vm2020, %v1068, %v1331
      %v2046 = vsel %vm2020, %v967, %v1333
      %v2047 = vsel %vm2020, %v1069, %v1335
      %v2048 = vsel %vm2020, %v970, %v1337
      %v2049 = vsel %vm2020, %v1070, %v1339
      %v2050 = vsel %vm2020, %v973, %v1341
      %vm2051 = vcmask 130048
      %v2052 = vsel %vm2051, %v2021, %v1373
      %v2053 = vsel %vm2051, %v2022, %v1375
      %v2054 = vsel %vm2051, %v2023, %v1377
      %v2055 = vsel %vm2051, %v2024, %v1379
      %v2056 = vsel %vm2051, %v2025, %v1381
      %v2057 = vsel %vm2051, %v2026, %v1383
      %v2058 = vsel %vm2051, %v2027, %v1385
      %v2059 = vsel %vm2051, %v2028, %v1387
      %v2060 = vsel %vm2051, %v2029, %v1389
      %v2061 = vsel %vm2051, %v2030, %v1391
      %v2062 = vsel %vm2051, %v2031, %v1393
      %v2063 = vsel %vm2051, %v2032, %v1395
      %v2064 = vsel %vm2051, %v2033, %v1397
      %v2065 = vsel %vm2051, %v2034, %v1399
      %v2066 = vsel %vm2051, %v2035, %v1401
      %v2067 = vsel %vm2051, %v2036, %v1403
      %v2068 = vsel %vm2051, %v2037, %v1405
      %v2069 = vsel %vm2051, %v2038, %v1407
      %v2070 = vsel %vm2051, %v2039, %v1409
      %v2071 = vsel %vm2051, %v2040, %v1411
      %v2072 = vsel %vm2051, %v2041, %v1413
      %v2073 = vsel %vm2051, %v2042, %v1415
      %v2074 = vsel %vm2051, %v2043, %v1417
      %v2075 = vsel %vm2051, %v2044, %v1419
      %v2076 = vsel %vm2051, %v2045, %v1421
      %v2077 = vsel %vm2051, %v2046, %v1423
      %v2078 = vsel %vm2051, %v2047, %v1425
      %v2079 = vsel %vm2051, %v2048, %v1427
      %v2080 = vsel %vm2051, %v2049, %v1429
      %v2081 = vsel %vm2051, %v2050, %v1431
      %vm2082 = vcmask 195584
      %v2083 = vsel %vm2082, %v2052, %v1463
      %v2084 = vsel %vm2082, %v2053, %v1465
      %v2085 = vsel %vm2082, %v2054, %v1467
      %v2086 = vsel %vm2082, %v2055, %v1469
      %v2087 = vsel %vm2082, %v2052, %v1471
      %v2088 = vsel %vm2082, %v2053, %v1473
      %v2089 = vsel %vm2082, %v2056, %v1475
      %v2090 = vsel %vm2082, %v2057, %v1477
      %v2091 = vsel %vm2082, %v2058, %v1479
      %v2092 = vsel %vm2082, %v2059, %v1481
      %v2093 = vsel %vm2082, %v2060, %v1483
      %v2094 = vsel %vm2082, %v2061, %v1485
      %v2095 = vsel %vm2082, %v2062, %v1487
      %v2096 = vsel %vm2082, %v2063, %v1489
      %v2097 = vsel %vm2082, %v2064, %v1491
      %v2098 = vsel %vm2082, %v2065, %v1493
      %v2099 = vsel %vm2082, %v2066, %v1495
      %v2100 = vsel %vm2082, %v2067, %v1497
      %v2101 = vsel %vm2082, %v2068, %v1499
      %v2102 = vsel %vm2082, %v2069, %v1501
      %v2103 = vsel %vm2082, %v2070, %v1503
      %v2104 = vsel %vm2082, %v2071, %v1505
      %v2105 = vsel %vm2082, %v2072, %v1507
      %v2106 = vsel %vm2082, %v2073, %v1509
      %v2107 = vsel %vm2082, %v2074, %v1511
      %v2108 = vsel %vm2082, %v2075, %v1513
      %v2109 = vsel %vm2082, %v2076, %v1515
      %v2110 = vsel %vm2082, %v2077, %v1517
      %v2111 = vsel %vm2082, %v2078, %v1519
      %v2112 = vsel %vm2082, %v2079, %v1521
      %v2113 = vsel %vm2082, %v2080, %v1523
      %v2114 = vsel %vm2082, %v2081, %v1525
      %vm2115 = vcmask 261120
      %v2116 = vsel %vm2115, %v2083, %v1559
      %v2117 = vsel %vm2115, %v2084, %v1561
      %v2118 = vsel %vm2115, %v2085, %v1563
      %v2119 = vsel %vm2115, %v2086, %v1565
      %v2120 = vsel %vm2115, %v2087, %v1567
      %v2121 = vsel %vm2115, %v2088, %v1569
      %v2122 = vsel %vm2115, %v2089, %v1571
      %v2123 = vsel %vm2115, %v2090, %v1573
      %v2124 = vsel %vm2115, %v2091, %v1575
      %v2125 = vsel %vm2115, %v2092, %v1577
      %v2126 = vsel %vm2115, %v2093, %v1579
      %v2127 = vsel %vm2115, %v2094, %v1581
      %v2128 = vsel %vm2115, %v2095, %v1583
      %v2129 = vsel %vm2115, %v2096, %v1585
      %v2130 = vsel %vm2115, %v2097, %v1587
      %v2131 = vsel %vm2115, %v2098, %v1589
      %v2132 = vsel %vm2115, %v2099, %v1591
      %v2133 = vsel %vm2115, %v2100, %v1593
      %v2134 = vsel %vm2115, %v2101, %v1595
      %v2135 = vsel %vm2115, %v2102, %v1597
      %v2136 = vsel %vm2115, %v2103, %v1599
      %v2137 = vsel %vm2115, %v2104, %v1601
      %v2138 = vsel %vm2115, %v2105, %v1603
      %v2139 = vsel %vm2115, %v2106, %v1605
      %v2140 = vsel %vm2115, %v2107, %v1607
      %v2141 = vsel %vm2115, %v2108, %v1609
      %v2142 = vsel %vm2115, %v2109, %v1611
      %v2143 = vsel %vm2115, %v2110, %v1613
      %v2144 = vsel %vm2115, %v2111, %v1615
      %v2145 = vsel %vm2115, %v2112, %v1617
      %v2146 = vsel %vm2115, %v2113, %v1619
      %v2147 = vsel %vm2115, %v2114, %v1621
      %vm2148 = vcmask 326656
      %v2149 = vsel %vm2148, %v2116, %v1655
      %v2150 = vsel %vm2148, %v2117, %v1657
      %v2151 = vsel %vm2148, %v2118, %v1659
      %v2152 = vsel %vm2148, %v2119, %v1661
      %v2153 = vsel %vm2148, %v2120, %v1663
      %v2154 = vsel %vm2148, %v2121, %v1665
      %v2155 = vsel %vm2148, %v2122, %v1667
      %v2156 = vsel %vm2148, %v2123, %v1669
      %v2157 = vsel %vm2148, %v2124, %v1671
      %v2158 = vsel %vm2148, %v2125, %v1673
      %v2159 = vsel %vm2148, %v2126, %v1675
      %v2160 = vsel %vm2148, %v2127, %v1677
      %v2161 = vsel %vm2148, %v2128, %v1679
      %v2162 = vsel %vm2148, %v2129, %v1681
      %v2163 = vsel %vm2148, %v2130, %v1683
      %v2164 = vsel %vm2148, %v2131, %v1685
      %v2165 = vsel %vm2148, %v2132, %v1687
      %v2166 = vsel %vm2148, %v2133, %v1689
      %v2167 = vsel %vm2148, %v2134, %v1691
      %v2168 = vsel %vm2148, %v2135, %v1693
      %v2169 = vsel %vm2148, %v2136, %v1695
      %v2170 = vsel %vm2148, %v2137, %v1697
      %v2171 = vsel %vm2148, %v2138, %v1699
      %v2172 = vsel %vm2148, %v2139, %v1701
      %v2173 = vsel %vm2148, %v2140, %v1703
      %v2174 = vsel %vm2148, %v2141, %v1705
      %v2175 = vsel %vm2148, %v2142, %v1707
      %v2176 = vsel %vm2148, %v2143, %v1709
      %v2177 = vsel %vm2148, %v2144, %v1711
      %v2178 = vsel %vm2148, %v2145, %v1713
      %v2179 = vsel %vm2148, %v2146, %v1715
      %v2180 = vsel %vm2148, %v2147, %v1717
      %vm2181 = vcmask 392192
      %v2182 = vsel %vm2181, %v2149, %v1751
      %v2183 = vsel %vm2181, %v2150, %v1753
      %v2184 = vsel %vm2181, %v2151, %v1755
      %v2185 = vsel %vm2181, %v2152, %v1757
      %v2186 = vsel %vm2181, %v2153, %v1759
      %v2187 = vsel %vm2181, %v2154, %v1761
      %v2188 = vsel %vm2181, %v2155, %v1763
      %v2189 = vsel %vm2181, %v2156, %v1765
      %v2190 = vsel %vm2181, %v2157, %v1767
      %v2191 = vsel %vm2181, %v2158, %v1769
      %v2192 = vsel %vm2181, %v2159, %v1771
      %v2193 = vsel %vm2181, %v2160, %v1773
      %v2194 = vsel %vm2181, %v2161, %v1775
      %v2195 = vsel %vm2181, %v2162, %v1777
      %v2196 = vsel %vm2181, %v2163, %v1779
      %v2197 = vsel %vm2181, %v2164, %v1781
      %v2198 = vsel %vm2181, %v2165, %v1783
      %v2199 = vsel %vm2181, %v2166, %v1785
      %v2200 = vsel %vm2181, %v2167, %v1787
      %v2201 = vsel %vm2181, %v2168, %v1789
      %v2202 = vsel %vm2181, %v2169, %v1791
      %v2203 = vsel %vm2181, %v2170, %v1793
      %v2204 = vsel %vm2181, %v2171, %v1795
      %v2205 = vsel %vm2181, %v2172, %v1797
      %v2206 = vsel %vm2181, %v2173, %v1799
      %v2207 = vsel %vm2181, %v2174, %v1801
      %v2208 = vsel %vm2181, %v2175, %v1803
      %v2209 = vsel %vm2181, %v2176, %v1805
      %v2210 = vsel %vm2181, %v2177, %v1807
      %v2211 = vsel %vm2181, %v2178, %v1809
      %v2212 = vsel %vm2181, %v2179, %v1803
      %v2213 = vsel %vm2181, %v2180, %v1805
      %vm2214 = vcmask 457728
      %v2215 = vsel %vm2214, %v2182, %v1841
      %v2216 = vsel %vm2214, %v2183, %v1843
      %v2217 = vsel %vm2214, %v2184, %v1845
      %v2218 = vsel %vm2214, %v2185, %v1847
      %v2219 = vsel %vm2214, %v2186, %v1849
      %v2220 = vsel %vm2214, %v2187, %v1851
      %v2221 = vsel %vm2214, %v2188, %v1853
      %v2222 = vsel %vm2214, %v2189, %v1855
      %v2223 = vsel %vm2214, %v2190, %v1857
      %v2224 = vsel %vm2214, %v2191, %v1859
      %v2225 = vsel %vm2214, %v2192, %v1861
      %v2226 = vsel %vm2214, %v2193, %v1863
      %v2227 = vsel %vm2214, %v2194, %v1865
      %v2228 = vsel %vm2214, %v2195, %v1867
      %v2229 = vsel %vm2214, %v2196, %v1869
      %v2230 = vsel %vm2214, %v2197, %v1871
      %v2231 = vsel %vm2214, %v2198, %v1873
      %v2232 = vsel %vm2214, %v2199, %v1875
      %v2233 = vsel %vm2214, %v2200, %v1877
      %v2234 = vsel %vm2214, %v2201, %v1879
      %v2235 = vsel %vm2214, %v2202, %v1881
      %v2236 = vsel %vm2214, %v2203, %v1883
      %v2237 = vsel %vm2214, %v2204, %v1885
      %v2238 = vsel %vm2214, %v2205, %v1887
      %v2239 = vsel %vm2214, %v2206, %v1889
      %v2240 = vsel %vm2214, %v2207, %v1891
      %v2241 = vsel %vm2214, %v2208, %v1893
      %v2242 = vsel %vm2214, %v2209, %v1895
      %v2243 = vsel %vm2214, %v2210, %v1897
      %v2244 = vsel %vm2214, %v2211, %v1899
      %v2245 = vsel %vm2214, %v2212, %v1893
      %v2246 = vsel %vm2214, %v2213, %v1895
      %v2247 = vsel %vm339, %v2215, %v1931
      %v2248 = vsel %vm339, %v2216, %v1933
      %v2249 = vsel %vm339, %v2217, %v1935
      %v2250 = vsel %vm339, %v2218, %v1937
      %v2251 = vsel %vm339, %v2219, %v1939
      %v2252 = vsel %vm339, %v2220, %v1941
      %v2253 = vsel %vm339, %v2221, %v1943
      %v2254 = vsel %vm339, %v2222, %v1945
      %v2255 = vsel %vm339, %v2223, %v1947
      %v2256 = vsel %vm339, %v2224, %v1949
      %v2257 = vsel %vm339, %v2225, %v1951
      %v2258 = vsel %vm339, %v2226, %v1953
      %v2259 = vsel %vm339, %v2227, %v1955
      %v2260 = vsel %vm339, %v2228, %v1957
      %v2261 = vsel %vm339, %v2229, %v1959
      %v2262 = vsel %vm339, %v2230, %v1961
      %v2263 = vsel %vm339, %v2231, %v1963
      %v2264 = vsel %vm339, %v2232, %v1965
      %v2265 = vsel %vm339, %v2233, %v1967
      %v2266 = vsel %vm339, %v2234, %v1969
      %v2267 = vsel %vm339, %v2235, %v1971
      %v2268 = vsel %vm339, %v2236, %v1973
      %v2269 = vsel %vm339, %v2237, %v1975
      %v2270 = vsel %vm339, %v2238, %v1977
      %v2271 = vsel %vm339, %v2239, %v1979
      %v2272 = vsel %vm339, %v2240, %v1981
      %v2273 = vsel %vm339, %v2241, %v1983
      %v2274 = vsel %vm339, %v2242, %v1985
      %v2275 = vsel %vm339, %v2243, %v1987
      %v2276 = vsel %vm339, %v2244, %v1989
      %v2277 = vsel %vm339, %v2245, %v1983
      %v2278 = vsel %vm339, %v2246, %v1985
      %v2280 = vlaneseq
      %v2281 = vshrl.u32 %v2280, 7
      %v2282 = vsub.s32 0, %v2281
      %v2283 = vrot.slane %v863, %v2282
      %vm2285 = vcmask 588800
      %v2287 = vsel %vm2285, %v2247, 0
      %v2290 = vsel %vm2285, %v2248, 0
      %v2293 = vsel %vm2285, %v2249, 0
      %v2296 = vsel %vm2285, %v2250, 0
      %v2299 = vsel %vm2285, %v2251, 0
      %v2302 = vsel %vm2285, %v2252, 0
      %v2305 = vsel %vm2285, %v2253, 0
      %v2308 = vsel %vm2285, %v2254, 0
      %v2311 = vsel %vm2285, %v2255, 0
      %v2314 = vsel %vm2285, %v2256, 0
      %v2317 = vsel %vm2285, %v2257, 0
      %v2320 = vsel %vm2285, %v2258, 0
      %v2323 = vsel %vm2285, %v2259, 0
      %v2326 = vsel %vm2285, %v2260, 0
      %v2329 = vsel %vm2285, %v2261, 0
      %v2332 = vsel %vm2285, %v2262, 0
      %v2335 = vsel %vm2285, %v2263, 0
      %v2338 = vsel %vm2285, %v2264, 0
      %v2341 = vsel %vm2285, %v2265, 0
      %v2344 = vsel %vm2285, %v2266, 0
      %v2347 = vsel %vm2285, %v2267, 0
      %v2350 = vsel %vm2285, %v2268, 0
      %v2353 = vsel %vm2285, %v2269, 0
      %v2356 = vsel %vm2285, %v2270, 0
      %v2359 = vsel %vm2285, %v2271, 0
      %v2362 = vsel %vm2285, %v2272, 0
      %v2365 = vsel %vm2285, %v2273, 0
      %v2368 = vsel %vm2285, %v2274, 0
      %v2371 = vsel %vm2285, %v2275, 0
      %v2374 = vsel %vm2285, %v2276, 0
      %v2377 = vsel %vm2285, %v2277, 0
      %v2380 = vsel %vm2285, %v2278, 0
      %2382 = vmatprep.subr.mxu0 0.0
      %2383 = vmatpush1.msra.mxu0 %v854
      %2384 = vmatprep.subr.mxu0 0.0
      %2385 = vmatpush1.msra.mxu0 %v855
      %2386 = vmatprep.subr.mxu0 0.0
      %2387 = vmatpush1.msra.mxu0 %v856
      %2388 = vmatprep.subr.mxu0 0.0
      %2389 = vmatpush1.msra.mxu0 %v857
      %2390 = vmatprep.subr.mxu0 0.0
      %2391 = vmatpush1.msra.mxu0 %v858
      %2392 = vmatprep.subr.mxu0 0.0
      %2393 = vmatpush1.msra.mxu0 %v859
      %2394 = vmatprep.subr.mxu0 0.0
      %2395 = vmatpush1.msra.mxu0 %v860
      %2396 = vmatprep.subr.mxu0 0.0
      %2397 = vmatpush1.msra.mxu0 %v861
      %2398 = vmatprep.subr.mxu0 0.0
      %2399 = vmatpush1.msra.mxu0 %v862
      %2400 = vmatprep.subr.mxu0 0.0
      %2401 = vmatpush1.msra.mxu0 0.0
      %2402 = vmatprep.subr.mxu0 0.0
      %2403 = vmatpush1.msra.mxu0 0.0
      %2404 = vmatprep.subr.mxu0 0.0
      %2405 = vmatpush1.msra.mxu0 0.0
      %2406 = vmatprep.subr.mxu0 0.0
      %2407 = vmatpush1.msra.mxu0 0.0
      %2408 = vmatprep.subr.mxu0 0.0
      %2409 = vmatpush1.msra.mxu0 0.0
      %2410 = vmatprep.subr.mxu0 0.0
      %2411 = vmatpush1.msra.mxu0 0.0
      %2412 = vmatprep.subr.mxu0 0.0
      %2413 = vmatpush1.msra.mxu0 0.0
      %2414 = vmatprep.subr.mxu0 0.0
      %2415 = vmatpush1.msra.mxu0 0.0
      %2416 = vmatprep.subr.mxu0 0.0
      %2417 = vmatpush1.msra.mxu0 0.0
      %2418 = vmatprep.subr.mxu0 0.0
      %2419 = vmatpush1.msra.mxu0 0.0
      %2420 = vmatprep.subr.mxu0 0.0
      %2421 = vmatpush1.msra.mxu0 0.0
      %2422 = vmatprep.subr.mxu0 0.0
      %2423 = vmatpush1.msra.mxu0 0.0
      %2424 = vmatprep.subr.mxu0 0.0
      %2425 = vmatpush1.msra.mxu0 0.0
      %2426 = vmatprep.subr.mxu0 0.0
      %2427 = vmatpush1.msra.mxu0 0.0
      %2428 = vmatprep.subr.mxu0 0.0
      %2429 = vmatpush1.msra.mxu0 0.0
      %2430 = vmatprep.subr.mxu0 0.0
      %2431 = vmatpush1.msra.mxu0 0.0
      %2432 = vmatprep.subr.mxu0 0.0
      %2433 = vmatpush1.msra.mxu0 0.0
      %2434 = vmatprep.subr.mxu0 0.0
      %2435 = vmatpush1.msra.mxu0 0.0
      %2436 = vmatprep.subr.mxu0 0.0
      %2437 = vmatpush1.msra.mxu0 0.0
      %2438 = vmatprep.subr.mxu0 0.0
      %2439 = vmatpush1.msra.mxu0 0.0
      %2440 = vmatprep.subr.mxu0 0.0
      %2441 = vmatpush1.msra.mxu0 0.0
      %2442 = vmatprep.subr.mxu0 0.0
      %2443 = vmatpush1.msra.mxu0 0.0
      %2444 = vmatprep.subr.mxu0 0.0
      %2445 = vmatpush1.msra.mxu0 0.0
      %2446 = vmatprep.mubr.f32.mxu0 0.0
      %2447 = vmatmul.mubr.f32.gmra.mrb[0].mxu0 %v2287
      %v2448 = vpop.f32.mrb[0].mxu0
      %v2449 = vadd.f32 %v2283, %v2448
      %v2450 = vpop.f32.mrb[0].mxu0
      %2451 = vmatprep.mubr.f32.mxu0 0.0
      %2452 = vmatmul.mubr.f32.gmra.mrb[0].mxu0 %v2290
      %v2453 = vpop.f32.mrb[0].mxu0
      %v2454 = vadd.f32 %v2283, %v2453
      %v2455 = vpop.f32.mrb[0].mxu0
      %2456 = vmatprep.mubr.f32.mxu0 0.0
      %2457 = vmatmul.mubr.f32.gmra.mrb[0].mxu0 %v2293
      %v2458 = vpop.f32.mrb[0].mxu0
      %v2459 = vadd.f32 %v2283, %v2458
      %v2460 = vpop.f32.mrb[0].mxu0
      %2461 = vmatprep.mubr.f32.mxu0 0.0
      %2462 = vmatmul.mubr.f32.gmra.mrb[0].mxu0 %v2296
      %v2463 = vpop.f32.mrb[0].mxu0
      %v2464 = vadd.f32 %v2283, %v2463
      %v2465 = vpop.f32.mrb[0].mxu0
      %2466 = vmatprep.mubr.f32.mxu0 0.0
      %2467 = vmatmul.mubr.f32.gmra.mrb[0].mxu0 %v2299
      %v2468 = vpop.f32.mrb[0].mxu0
      %v2469 = vadd.f32 %v2283, %v2468
      %v2470 = vpop.f32.mrb[0].mxu0
      %2471 = vmatprep.mubr.f32.mxu0 0.0
      %2472 = vmatmul.mubr.f32.gmra.mrb[0].mxu0 %v2302
      %v2473 = vpop.f32.mrb[0].mxu0
      %v2474 = vadd.f32 %v2283, %v2473
      %v2475 = vpop.f32.mrb[0].mxu0
      %2476 = vmatprep.mubr.f32.mxu0 0.0
      %2477 = vmatmul.mubr.f32.gmra.mrb[0].mxu0 %v2305
      %v2478 = vpop.f32.mrb[0].mxu0
      %v2479 = vadd.f32 %v2283, %v2478
      %v2480 = vpop.f32.mrb[0].mxu0
      %2481 = vmatprep.mubr.f32.mxu0 0.0
      %2482 = vmatmul.mubr.f32.gmra.mrb[0].mxu0 %v2308
      %v2483 = vpop.f32.mrb[0].mxu0
      %v2484 = vadd.f32 %v2283, %v2483
      %v2485 = vpop.f32.mrb[0].mxu0
      %2486 = vmatprep.mubr.f32.mxu0 0.0
      %2487 = vmatmul.mubr.f32.gmra.mrb[0].mxu0 %v2311
      %v2488 = vpop.f32.mrb[0].mxu0
      %v2489 = vadd.f32 %v2283, %v2488
      %v2490 = vpop.f32.mrb[0].mxu0
      %2491 = vmatprep.mubr.f32.mxu0 0.0
      %2492 = vmatmul.mubr.f32.gmra.mrb[0].mxu0 %v2314
      %v2493 = vpop.f32.mrb[0].mxu0
      %v2494 = vadd.f32 %v2283, %v2493
      %v2495 = vpop.f32.mrb[0].mxu0
      %2496 = vmatprep.mubr.f32.mxu0 0.0
      %2497 = vmatmul.mubr.f32.gmra.mrb[0].mxu0 %v2317
      %v2498 = vpop.f32.mrb[0].mxu0
      %v2499 = vadd.f32 %v2283, %v2498
      %v2500 = vpop.f32.mrb[0].mxu0
      %2501 = vmatprep.mubr.f32.mxu0 0.0
      %2502 = vmatmul.mubr.f32.gmra.mrb[0].mxu0 %v2320
      %v2503 = vpop.f32.mrb[0].mxu0
      %v2504 = vadd.f32 %v2283, %v2503
      %v2505 = vpop.f32.mrb[0].mxu0
      %2506 = vmatprep.mubr.f32.mxu0 0.0
      %2507 = vmatmul.mubr.f32.gmra.mrb[0].mxu0 %v2323
      %v2508 = vpop.f32.mrb[0].mxu0
      %v2509 = vadd.f32 %v2283, %v2508
      %v2510 = vpop.f32.mrb[0].mxu0
      %2511 = vmatprep.mubr.f32.mxu0 0.0
      %2512 = vmatmul.mubr.f32.gmra.mrb[0].mxu0 %v2326
      %v2513 = vpop.f32.mrb[0].mxu0
      %v2514 = vadd.f32 %v2283, %v2513
      %v2515 = vpop.f32.mrb[0].mxu0
      %2516 = vmatprep.mubr.f32.mxu0 0.0
      %2517 = vmatmul.mubr.f32.gmra.mrb[0].mxu0 %v2329
      %v2518 = vpop.f32.mrb[0].mxu0
      %v2519 = vadd.f32 %v2283, %v2518
      %v2520 = vpop.f32.mrb[0].mxu0
      %2521 = vmatprep.mubr.f32.mxu0 0.0
      %2522 = vmatmul.mubr.f32.gmra.mrb[0].mxu0 %v2332
      %v2523 = vpop.f32.mrb[0].mxu0
      %v2524 = vadd.f32 %v2283, %v2523
      %v2525 = vpop.f32.mrb[0].mxu0
      %2526 = vmatprep.mubr.f32.mxu0 0.0
      %2527 = vmatmul.mubr.f32.gmra.mrb[0].mxu0 %v2335
      %v2528 = vpop.f32.mrb[0].mxu0
      %v2529 = vadd.f32 %v2283, %v2528
      %v2530 = vpop.f32.mrb[0].mxu0
      %2531 = vmatprep.mubr.f32.mxu0 0.0
      %2532 = vmatmul.mubr.f32.gmra.mrb[0].mxu0 %v2338
      %v2533 = vpop.f32.mrb[0].mxu0
      %v2534 = vadd.f32 %v2283, %v2533
      %v2535 = vpop.f32.mrb[0].mxu0
      %2536 = vmatprep.mubr.f32.mxu0 0.0
      %2537 = vmatmul.mubr.f32.gmra.mrb[0].mxu0 %v2341
      %v2538 = vpop.f32.mrb[0].mxu0
      %v2539 = vadd.f32 %v2283, %v2538
      %v2540 = vpop.f32.mrb[0].mxu0
      %2541 = vmatprep.mubr.f32.mxu0 0.0
      %2542 = vmatmul.mubr.f32.gmra.mrb[0].mxu0 %v2344
      %v2543 = vpop.f32.mrb[0].mxu0
      %v2544 = vadd.f32 %v2283, %v2543
      %v2545 = vpop.f32.mrb[0].mxu0
      %2546 = vmatprep.mubr.f32.mxu0 0.0
      %2547 = vmatmul.mubr.f32.gmra.mrb[0].mxu0 %v2347
      %v2548 = vpop.f32.mrb[0].mxu0
      %v2549 = vadd.f32 %v2283, %v2548
      %v2550 = vpop.f32.mrb[0].mxu0
      %2551 = vmatprep.mubr.f32.mxu0 0.0
      %2552 = vmatmul.mubr.f32.gmra.mrb[0].mxu0 %v2350
      %v2553 = vpop.f32.mrb[0].mxu0
      %v2554 = vadd.f32 %v2283, %v2553
      %v2555 = vpop.f32.mrb[0].mxu0
      %2556 = vmatprep.mubr.f32.mxu0 0.0
      %2557 = vmatmul.mubr.f32.gmra.mrb[0].mxu0 %v2353
      %v2558 = vpop.f32.mrb[0].mxu0
      %v2559 = vadd.f32 %v2283, %v2558
      %v2560 = vpop.f32.mrb[0].mxu0
      %2561 = vmatprep.mubr.f32.mxu0 0.0
      %2562 = vmatmul.mubr.f32.gmra.mrb[0].mxu0 %v2356
      %v2563 = vpop.f32.mrb[0].mxu0
      %v2564 = vadd.f32 %v2283, %v2563
      %v2565 = vpop.f32.mrb[0].mxu0
      %2566 = vmatprep.mubr.f32.mxu0 0.0
      %2567 = vmatmul.mubr.f32.gmra.mrb[0].mxu0 %v2359
      %v2568 = vpop.f32.mrb[0].mxu0
      %v2569 = vadd.f32 %v2283, %v2568
      %v2570 = vpop.f32.mrb[0].mxu0
      %2571 = vmatprep.mubr.f32.mxu0 0.0
      %2572 = vmatmul.mubr.f32.gmra.mrb[0].mxu0 %v2362
      %v2573 = vpop.f32.mrb[0].mxu0
      %v2574 = vadd.f32 %v2283, %v2573
      %v2575 = vpop.f32.mrb[0].mxu0
      %2576 = vmatprep.mubr.f32.mxu0 0.0
      %2577 = vmatmul.mubr.f32.gmra.mrb[0].mxu0 %v2365
      %v2578 = vpop.f32.mrb[0].mxu0
      %v2579 = vadd.f32 %v2283, %v2578
      %v2580 = vpop.f32.mrb[0].mxu0
      %2581 = vmatprep.mubr.f32.mxu0 0.0
      %2582 = vmatmul.mubr.f32.gmra.mrb[0].mxu0 %v2368
      %v2583 = vpop.f32.mrb[0].mxu0
      %v2584 = vadd.f32 %v2283, %v2583
      %v2585 = vpop.f32.mrb[0].mxu0
      %2586 = vmatprep.mubr.f32.mxu0 0.0
      %2587 = vmatmul.mubr.f32.gmra.mrb[0].mxu0 %v2371
      %v2588 = vpop.f32.mrb[0].mxu0
      %v2589 = vadd.f32 %v2283, %v2588
      %v2590 = vpop.f32.mrb[0].mxu0
      %2591 = vmatprep.mubr.f32.mxu0 0.0
      %2592 = vmatmul.mubr.f32.gmra.mrb[0].mxu0 %v2374
      %v2593 = vpop.f32.mrb[0].mxu0
      %v2594 = vadd.f32 %v2283, %v2593
      %v2595 = vpop.f32.mrb[0].mxu0
      %2596 = vmatprep.mubr.f32.mxu0 0.0
      %2597 = vmatmul.mubr.f32.gmra.mrb[0].mxu0 %v2377
      %v2598 = vpop.f32.mrb[0].mxu0
      %v2599 = vadd.f32 %v2283, %v2598
      %v2600 = vpop.f32.mrb[0].mxu0
      %2601 = vmatprep.mubr.f32.mxu0 0.0
      %2602 = vmatmul.mubr.f32.gmra.mrb[0].mxu0 %v2380
      %v2603 = vpop.f32.mrb[0].mxu0
      %v2604 = vadd.f32 %v2283, %v2603
      %v2605 = vpop.f32.mrb[0].mxu0
      %2606 = vdwg.mxu0
      %v2607 = vmax.f32 %v2449, 0.0
      %v2608 = vmax.f32 %v2454, 0.0
      %v2609 = vmax.f32 %v2459, 0.0
      %v2610 = vmax.f32 %v2464, 0.0
      %v2611 = vmax.f32 %v2469, 0.0
      %v2612 = vmax.f32 %v2474, 0.0
      %v2613 = vmax.f32 %v2479, 0.0
      %v2614 = vmax.f32 %v2484, 0.0
      %v2615 = vmax.f32 %v2489, 0.0
      %v2616 = vmax.f32 %v2494, 0.0
      %v2617 = vmax.f32 %v2499, 0.0
      %v2618 = vmax.f32 %v2504, 0.0
      %v2619 = vmax.f32 %v2509, 0.0
      %v2620 = vmax.f32 %v2514, 0.0
      %v2621 = vmax.f32 %v2519, 0.0
      %v2622 = vmax.f32 %v2524, 0.0
      %v2623 = vmax.f32 %v2529, 0.0
      %v2624 = vmax.f32 %v2534, 0.0
      %v2625 = vmax.f32 %v2539, 0.0
      %v2626 = vmax.f32 %v2544, 0.0
      %v2627 = vmax.f32 %v2549, 0.0
      %v2628 = vmax.f32 %v2554, 0.0
      %v2629 = vmax.f32 %v2559, 0.0
      %v2630 = vmax.f32 %v2564, 0.0
      %v2631 = vmax.f32 %v2569, 0.0
      %v2632 = vmax.f32 %v2574, 0.0
      %v2633 = vmax.f32 %v2579, 0.0
      %v2634 = vmax.f32 %v2584, 0.0
      %v2635 = vmax.f32 %v2589, 0.0
      %v2636 = vmax.f32 %v2594, 0.0
      %v2637 = vmax.f32 %v2599, 0.0
      %v2638 = vmax.f32 %v2604, 0.0
      %v2639 = vld [vmem:[%s5] sm:$0xff]
      %v2640 = vld [vmem:[%s5 + $0x8] sm:$0xff]
      %v2641 = vld [vmem:[%s5 + $0x10] sm:$0xff]
      %v2642 = vld [vmem:[%s5 + $0x18] sm:$0xff]
      %v2643 = vld [vmem:[%s5 + $0x20] sm:$0xff]
      %v2644 = vld [vmem:[%s5 + $0x28] sm:$0xff]
      %v2645 = vld [vmem:[%s5 + $0x30] sm:$0xff]
      %v2646 = vld [vmem:[%s5 + $0x38] sm:$0xff]
      %v2647 = vld [vmem:[%s5 + $0x40] sm:$0xff]
      %v2648 = vld [vmem:[%s6] sm:$0x1]
      %v2665 = vrot.slane %v2609, 1
      %v2666 = vrot.slane %v2607, 1
      %v2667 = vrot.slane %v2611, 1
      %v2668 = vrot.slane %v2613, 1
      %v2669 = vrot.slane %v2615, 1
      %v2670 = vrot.slane %v2617, 1
      %v2671 = vrot.slane %v2619, 1
      %v2672 = vrot.slane %v2621, 1
      %v2673 = vrot.slane %v2623, 1
      %v2674 = vrot.slane %v2625, 1
      %v2675 = vrot.slane %v2627, 1
      %v2676 = vrot.slane %v2629, 1
      %v2677 = vrot.slane %v2631, 1
      %v2678 = vrot.slane %v2633, 1
      %v2679 = vrot.slane %v2635, 1
      %v2680 = vrot.slane %v2637, 1
      %v2713 = vrot.slane %v2609, 7
      %v2714 = vrot.slane %v2610, 7
      %v2715 = vsel %vm928, %v2713, %v2714
      %v2716 = vrot.slane %v2607, 7
      %v2717 = vrot.slane %v2608, 7
      %v2718 = vsel %vm928, %v2716, %v2717
      %v2719 = vrot.slane %v2611, 7
      %v2720 = vrot.slane %v2612, 7
      %v2721 = vsel %vm928, %v2719, %v2720
      %v2722 = vrot.slane %v2613, 7
      %v2723 = vrot.slane %v2614, 7
      %v2724 = vsel %vm928, %v2722, %v2723
      %v2725 = vrot.slane %v2615, 7
      %v2726 = vrot.slane %v2616, 7
      %v2727 = vsel %vm928, %v2725, %v2726
      %v2728 = vrot.slane %v2617, 7
      %v2729 = vrot.slane %v2618, 7
      %v2730 = vsel %vm928, %v2728, %v2729
      %v2731 = vrot.slane %v2619, 7
      %v2732 = vrot.slane %v2620, 7
      %v2733 = vsel %vm928, %v2731, %v2732
      %v2734 = vrot.slane %v2621, 7
      %v2735 = vrot.slane %v2622, 7
      %v2736 = vsel %vm928, %v2734, %v2735
      %v2737 = vrot.slane %v2623, 7
      %v2738 = vrot.slane %v2624, 7
      %v2739 = vsel %vm928, %v2737, %v2738
      %v2740 = vrot.slane %v2625, 7
      %v2741 = vrot.slane %v2626, 7
      %v2742 = vsel %vm928, %v2740, %v2741
      %v2743 = vrot.slane %v2627, 7
      %v2744 = vrot.slane %v2628, 7
      %v2745 = vsel %vm928, %v2743, %v2744
      %v2746 = vrot.slane %v2629, 7
      %v2747 = vrot.slane %v2630, 7
      %v2748 = vsel %vm928, %v2746, %v2747
      %v2749 = vrot.slane %v2631, 7
      %v2750 = vrot.slane %v2632, 7
      %v2751 = vsel %vm928, %v2749, %v2750
      %v2752 = vrot.slane %v2633, 7
      %v2753 = vrot.slane %v2634, 7
      %v2754 = vsel %vm928, %v2752, %v2753
      %v2755 = vrot.slane %v2635, 7
      %v2756 = vrot.slane %v2636, 7
      %v2757 = vsel %vm928, %v2755, %v2756
      %v2758 = vrot.slane %v2637, 7
      %v2759 = vrot.slane %v2638, 7
      %v2760 = vsel %vm928, %v2758, %v2759
      %v2808 = vrot.slane %v2610, 5
      %v2809 = vrot.slane %v2608, 5
      %v2810 = vrot.slane %v2612, 5
      %v2811 = vrot.slane %v2614, 5
      %v2812 = vrot.slane %v2616, 5
      %v2813 = vrot.slane %v2618, 5
      %v2814 = vrot.slane %v2620, 5
      %v2815 = vrot.slane %v2622, 5
      %v2816 = vrot.slane %v2624, 5
      %v2817 = vrot.slane %v2626, 5
      %v2818 = vrot.slane %v2628, 5
      %v2819 = vrot.slane %v2630, 5
      %v2820 = vrot.slane %v2632, 5
      %v2821 = vrot.slane %v2634, 5
      %v2822 = vrot.slane %v2636, 5
      %v2823 = vrot.slane %v2638, 5
      %v2840 = vsel %vm928, %v2665, %v2713
      %v2841 = vsel %vm928, %v2666, %v2716
      %v2842 = vsel %vm928, %v2667, %v2719
      %v2843 = vsel %vm928, %v2668, %v2722
      %v2844 = vsel %vm928, %v2669, %v2725
      %v2845 = vsel %vm928, %v2670, %v2728
      %v2846 = vsel %vm928, %v2671, %v2731
      %v2847 = vsel %vm928, %v2672, %v2734
      %v2848 = vsel %vm928, %v2673, %v2737
      %v2849 = vsel %vm928, %v2674, %v2740
      %v2850 = vsel %vm928, %v2675, %v2743
      %v2851 = vsel %vm928, %v2676, %v2746
      %v2852 = vsel %vm928, %v2677, %v2749
      %v2853 = vsel %vm928, %v2678, %v2752
      %v2854 = vsel %vm928, %v2679, %v2755
      %v2855 = vsel %vm928, %v2680, %v2758
      %v2856 = vsel %vm928, %v2714, %v2808
      %v2857 = vsel %vm928, %v2717, %v2809
      %v2858 = vsel %vm928, %v2720, %v2810
      %v2859 = vsel %vm928, %v2723, %v2811
      %v2860 = vsel %vm928, %v2726, %v2812
      %v2861 = vsel %vm928, %v2729, %v2813
      %v2862 = vsel %vm928, %v2732, %v2814
      %v2863 = vsel %vm928, %v2735, %v2815
      %v2864 = vsel %vm928, %v2738, %v2816
      %v2865 = vsel %vm928, %v2741, %v2817
      %v2866 = vsel %vm928, %v2744, %v2818
      %v2867 = vsel %vm928, %v2747, %v2819
      %v2868 = vsel %vm928, %v2750, %v2820
      %v2869 = vsel %vm928, %v2753, %v2821
      %v2870 = vsel %vm928, %v2756, %v2822
      %v2871 = vsel %vm928, %v2759, %v2823
      %v2902 = vrot.slane %v2840, 1
      %v2903 = vrot.slane %v2715, 1
      %v2904 = vsel %vm1118, %v2902, %v2903
      %v2905 = vrot.slane %v2856, 1
      %v2906 = vsel %vm1118, %v2903, %v2905
      %v2907 = vrot.slane %v2841, 1
      %v2908 = vrot.slane %v2718, 1
      %v2909 = vsel %vm1118, %v2907, %v2908
      %v2910 = vrot.slane %v2857, 1
      %v2911 = vsel %vm1118, %v2908, %v2910
      %v2912 = vrot.slane %v2842, 1
      %v2913 = vrot.slane %v2721, 1
      %v2914 = vsel %vm1118, %v2912, %v2913
      %v2915 = vrot.slane %v2858, 1
      %v2916 = vsel %vm1118, %v2913, %v2915
      %v2917 = vrot.slane %v2843, 1
      %v2918 = vrot.slane %v2724, 1
      %v2919 = vsel %vm1118, %v2917, %v2918
      %v2920 = vrot.slane %v2859, 1
      %v2921 = vsel %vm1118, %v2918, %v2920
      %v2922 = vrot.slane %v2844, 1
      %v2923 = vrot.slane %v2727, 1
      %v2924 = vsel %vm1118, %v2922, %v2923
      %v2925 = vrot.slane %v2860, 1
      %v2926 = vsel %vm1118, %v2923, %v2925
      %v2927 = vrot.slane %v2845, 1
      %v2928 = vrot.slane %v2730, 1
      %v2929 = vsel %vm1118, %v2927, %v2928
      %v2930 = vrot.slane %v2861, 1
      %v2931 = vsel %vm1118, %v2928, %v2930
      %v2932 = vrot.slane %v2846, 1
      %v2933 = vrot.slane %v2733, 1
      %v2934 = vsel %vm1118, %v2932, %v2933
      %v2935 = vrot.slane %v2862, 1
      %v2936 = vsel %vm1118, %v2933, %v2935
      %v2937 = vrot.slane %v2847, 1
      %v2938 = vrot.slane %v2736, 1
      %v2939 = vsel %vm1118, %v2937, %v2938
      %v2940 = vrot.slane %v2863, 1
      %v2941 = vsel %vm1118, %v2938, %v2940
      %v2942 = vrot.slane %v2848, 1
      %v2943 = vrot.slane %v2739, 1
      %v2944 = vsel %vm1118, %v2942, %v2943
      %v2945 = vrot.slane %v2864, 1
      %v2946 = vsel %vm1118, %v2943, %v2945
      %v2947 = vrot.slane %v2849, 1
      %v2948 = vrot.slane %v2742, 1
      %v2949 = vsel %vm1118, %v2947, %v2948
      %v2950 = vrot.slane %v2865, 1
      %v2951 = vsel %vm1118, %v2948, %v2950
      %v2952 = vrot.slane %v2850, 1
      %v2953 = vrot.slane %v2745, 1
      %v2954 = vsel %vm1118, %v2952, %v2953
      %v2955 = vrot.slane %v2866, 1
      %v2956 = vsel %vm1118, %v2953, %v2955
      %v2957 = vrot.slane %v2851, 1
      %v2958 = vrot.slane %v2748, 1
      %v2959 = vsel %vm1118, %v2957, %v2958
      %v2960 = vrot.slane %v2867, 1
      %v2961 = vsel %vm1118, %v2958, %v2960
      %v2962 = vrot.slane %v2852, 1
      %v2963 = vrot.slane %v2751, 1
      %v2964 = vsel %vm1118, %v2962, %v2963
      %v2965 = vrot.slane %v2868, 1
      %v2966 = vsel %vm1118, %v2963, %v2965
      %v2967 = vrot.slane %v2853, 1
      %v2968 = vrot.slane %v2754, 1
      %v2969 = vsel %vm1118, %v2967, %v2968
      %v2970 = vrot.slane %v2869, 1
      %v2971 = vsel %vm1118, %v2968, %v2970
      %v2972 = vrot.slane %v2854, 1
      %v2973 = vrot.slane %v2757, 1
      %v2974 = vsel %vm1118, %v2972, %v2973
      %v2975 = vrot.slane %v2870, 1
      %v2976 = vsel %vm1118, %v2973, %v2975
      %v2977 = vrot.slane %v2840, 2
      %v2978 = vrot.slane %v2715, 2
      %v2979 = vsel %vm1194, %v2977, %v2978
      %v2980 = vrot.slane %v2856, 2
      %v2981 = vsel %vm1194, %v2978, %v2980
      %v2982 = vrot.slane %v2841, 2
      %v2983 = vrot.slane %v2718, 2
      %v2984 = vsel %vm1194, %v2982, %v2983
      %v2985 = vrot.slane %v2857, 2
      %v2986 = vsel %vm1194, %v2983, %v2985
      %v2987 = vrot.slane %v2842, 2
      %v2988 = vrot.slane %v2721, 2
      %v2989 = vsel %vm1194, %v2987, %v2988
      %v2990 = vrot.slane %v2858, 2
      %v2991 = vsel %vm1194, %v2988, %v2990
      %v2992 = vrot.slane %v2843, 2
      %v2993 = vrot.slane %v2724, 2
      %v2994 = vsel %vm1194, %v2992, %v2993
      %v2995 = vrot.slane %v2859, 2
      %v2996 = vsel %vm1194, %v2993, %v2995
      %v2997 = vrot.slane %v2844, 2
      %v2998 = vrot.slane %v2727, 2
      %v2999 = vsel %vm1194, %v2997, %v2998
      %v3000 = vrot.slane %v2860, 2
      %v3001 = vsel %vm1194, %v2998, %v3000
      %v3002 = vrot.slane %v2845, 2
      %v3003 = vrot.slane %v2730, 2
      %v3004 = vsel %vm1194, %v3002, %v3003
      %v3005 = vrot.slane %v2861, 2
      %v3006 = vsel %vm1194, %v3003, %v3005
      %v3007 = vrot.slane %v2846, 2
      %v3008 = vrot.slane %v2733, 2
      %v3009 = vsel %vm1194, %v3007, %v3008
      %v3010 = vrot.slane %v2862, 2
      %v3011 = vsel %vm1194, %v3008, %v3010
      %v3012 = vrot.slane %v2847, 2
      %v3013 = vrot.slane %v2736, 2
      %v3014 = vsel %vm1194, %v3012, %v3013
      %v3015 = vrot.slane %v2863, 2
      %v3016 = vsel %vm1194, %v3013, %v3015
      %v3017 = vrot.slane %v2848, 2
      %v3018 = vrot.slane %v2739, 2
      %v3019 = vsel %vm1194, %v3017, %v3018
      %v3020 = vrot.slane %v2864, 2
      %v3021 = vsel %vm1194, %v3018, %v3020
      %v3022 = vrot.slane %v2849, 2
      %v3023 = vrot.slane %v2742, 2
      %v3024 = vsel %vm1194, %v3022, %v3023
      %v3025 = vrot.slane %v2865, 2
      %v3026 = vsel %vm1194, %v3023, %v3025
      %v3027 = vrot.slane %v2850, 2
      %v3028 = vrot.slane %v2745, 2
      %v3029 = vsel %vm1194, %v3027, %v3028
      %v3030 = vrot.slane %v2866, 2
      %v3031 = vsel %vm1194, %v3028, %v3030
      %v3032 = vrot.slane %v2851, 2
      %v3033 = vrot.slane %v2748, 2
      %v3034 = vsel %vm1194, %v3032, %v3033
      %v3035 = vrot.slane %v2867, 2
      %v3036 = vsel %vm1194, %v3033, %v3035
      %v3037 = vrot.slane %v2852, 2
      %v3038 = vrot.slane %v2751, 2
      %v3039 = vsel %vm1194, %v3037, %v3038
      %v3040 = vrot.slane %v2868, 2
      %v3041 = vsel %vm1194, %v3038, %v3040
      %v3042 = vrot.slane %v2853, 2
      %v3043 = vrot.slane %v2754, 2
      %v3044 = vsel %vm1194, %v3042, %v3043
      %v3045 = vrot.slane %v2869, 2
      %v3046 = vsel %vm1194, %v3043, %v3045
      %v3047 = vrot.slane %v2854, 2
      %v3048 = vrot.slane %v2757, 2
      %v3049 = vsel %vm1194, %v3047, %v3048
      %v3050 = vrot.slane %v2870, 2
      %v3051 = vsel %vm1194, %v3048, %v3050
      %v3054 = vrot.slane %v2855, 1
      %v3055 = vrot.slane %v2760, 1
      %v3056 = vsel %vm1118, %v3054, %v3055
      %v3057 = vrot.slane %v2871, 1
      %v3058 = vsel %vm1118, %v3055, %v3057
      %v3059 = vrot.slane %v2855, 2
      %v3060 = vrot.slane %v2760, 2
      %v3061 = vsel %vm1194, %v3059, %v3060
      %v3062 = vrot.slane %v2871, 2
      %v3063 = vsel %vm1194, %v3060, %v3062
      %3064 = vrot.lane.b32.xlu0 %v2904, 8
      %v3065 = vpop.permute.xlu0 %3064
      %3066 = vrot.lane.b32.xlu0 %v2906, 8
      %v3067 = vpop.permute.xlu0 %3066
      %3068 = vrot.lane.b32.xlu0 %v2909, 8
      %v3069 = vpop.permute.xlu0 %3068
      %3070 = vrot.lane.b32.xlu0 %v2911, 8
      %v3071 = vpop.permute.xlu0 %3070
      %3072 = vrot.lane.b32.xlu0 %v2914, 8
      %v3073 = vpop.permute.xlu0 %3072
      %3074 = vrot.lane.b32.xlu0 %v2916, 8
      %v3075 = vpop.permute.xlu0 %3074
      %3076 = vrot.lane.b32.xlu0 %v2919, 8
      %v3077 = vpop.permute.xlu0 %3076
      %3078 = vrot.lane.b32.xlu0 %v2921, 8
      %v3079 = vpop.permute.xlu0 %3078
      %3080 = vrot.lane.b32.xlu0 %v2924, 8
      %v3081 = vpop.permute.xlu0 %3080
      %3082 = vrot.lane.b32.xlu0 %v2926, 8
      %v3083 = vpop.permute.xlu0 %3082
      %3084 = vrot.lane.b32.xlu0 %v2929, 8
      %v3085 = vpop.permute.xlu0 %3084
      %3086 = vrot.lane.b32.xlu0 %v2931, 8
      %v3087 = vpop.permute.xlu0 %3086
      %3088 = vrot.lane.b32.xlu0 %v2934, 8
      %v3089 = vpop.permute.xlu0 %3088
      %3090 = vrot.lane.b32.xlu0 %v2936, 8
      %v3091 = vpop.permute.xlu0 %3090
      %3092 = vrot.lane.b32.xlu0 %v2939, 8
      %v3093 = vpop.permute.xlu0 %3092
      %3094 = vrot.lane.b32.xlu0 %v2941, 8
      %v3095 = vpop.permute.xlu0 %3094
      %3096 = vrot.lane.b32.xlu0 %v2944, 8
      %v3097 = vpop.permute.xlu0 %3096
      %3098 = vrot.lane.b32.xlu0 %v2946, 8
      %v3099 = vpop.permute.xlu0 %3098
      %3100 = vrot.lane.b32.xlu0 %v2949, 8
      %v3101 = vpop.permute.xlu0 %3100
      %3102 = vrot.lane.b32.xlu0 %v2951, 8
      %v3103 = vpop.permute.xlu0 %3102
      %3104 = vrot.lane.b32.xlu0 %v2954, 8
      %v3105 = vpop.permute.xlu0 %3104
      %3106 = vrot.lane.b32.xlu0 %v2956, 8
      %v3107 = vpop.permute.xlu0 %3106
      %3108 = vrot.lane.b32.xlu0 %v2959, 8
      %v3109 = vpop.permute.xlu0 %3108
      %3110 = vrot.lane.b32.xlu0 %v2961, 8
      %v3111 = vpop.permute.xlu0 %3110
      %3112 = vrot.lane.b32.xlu0 %v2964, 8
      %v3113 = vpop.permute.xlu0 %3112
      %3114 = vrot.lane.b32.xlu0 %v2966, 8
      %v3115 = vpop.permute.xlu0 %3114
      %3116 = vrot.lane.b32.xlu0 %v2969, 8
      %v3117 = vpop.permute.xlu0 %3116
      %3118 = vrot.lane.b32.xlu0 %v2971, 8
      %v3119 = vpop.permute.xlu0 %3118
      %3120 = vrot.lane.b32.xlu0 %v2974, 8
      %v3121 = vpop.permute.xlu0 %3120
      %3122 = vrot.lane.b32.xlu0 %v2976, 8
      %v3123 = vpop.permute.xlu0 %3122
      %3154 = vrot.lane.b32.xlu0 %v2979, 16
      %v3155 = vpop.permute.xlu0 %3154
      %3156 = vrot.lane.b32.xlu0 %v2981, 16
      %v3157 = vpop.permute.xlu0 %3156
      %3158 = vrot.lane.b32.xlu0 %v2984, 16
      %v3159 = vpop.permute.xlu0 %3158
      %3160 = vrot.lane.b32.xlu0 %v2986, 16
      %v3161 = vpop.permute.xlu0 %3160
      %3162 = vrot.lane.b32.xlu0 %v2989, 16
      %v3163 = vpop.permute.xlu0 %3162
      %3164 = vrot.lane.b32.xlu0 %v2991, 16
      %v3165 = vpop.permute.xlu0 %3164
      %3166 = vrot.lane.b32.xlu0 %v2994, 16
      %v3167 = vpop.permute.xlu0 %3166
      %3168 = vrot.lane.b32.xlu0 %v2996, 16
      %v3169 = vpop.permute.xlu0 %3168
      %3170 = vrot.lane.b32.xlu0 %v2999, 16
      %v3171 = vpop.permute.xlu0 %3170
      %3172 = vrot.lane.b32.xlu0 %v3001, 16
      %v3173 = vpop.permute.xlu0 %3172
      %3174 = vrot.lane.b32.xlu0 %v3004, 16
      %v3175 = vpop.permute.xlu0 %3174
      %3176 = vrot.lane.b32.xlu0 %v3006, 16
      %v3177 = vpop.permute.xlu0 %3176
      %3178 = vrot.lane.b32.xlu0 %v3009, 16
      %v3179 = vpop.permute.xlu0 %3178
      %3180 = vrot.lane.b32.xlu0 %v3011, 16
      %v3181 = vpop.permute.xlu0 %3180
      %3182 = vrot.lane.b32.xlu0 %v3014, 16
      %v3183 = vpop.permute.xlu0 %3182
      %3184 = vrot.lane.b32.xlu0 %v3016, 16
      %v3185 = vpop.permute.xlu0 %3184
      %3186 = vrot.lane.b32.xlu0 %v3019, 16
      %v3187 = vpop.permute.xlu0 %3186
      %3188 = vrot.lane.b32.xlu0 %v3021, 16
      %v3189 = vpop.permute.xlu0 %3188
      %3190 = vrot.lane.b32.xlu0 %v3024, 16
      %v3191 = vpop.permute.xlu0 %3190
      %3192 = vrot.lane.b32.xlu0 %v3026, 16
      %v3193 = vpop.permute.xlu0 %3192
      %3194 = vrot.lane.b32.xlu0 %v3029, 16
      %v3195 = vpop.permute.xlu0 %3194
      %3196 = vrot.lane.b32.xlu0 %v3031, 16
      %v3197 = vpop.permute.xlu0 %3196
      %3198 = vrot.lane.b32.xlu0 %v3034, 16
      %v3199 = vpop.permute.xlu0 %3198
      %3200 = vrot.lane.b32.xlu0 %v3036, 16
      %v3201 = vpop.permute.xlu0 %3200
      %3202 = vrot.lane.b32.xlu0 %v3039, 16
      %v3203 = vpop.permute.xlu0 %3202
      %3204 = vrot.lane.b32.xlu0 %v3041, 16
      %v3205 = vpop.permute.xlu0 %3204
      %3206 = vrot.lane.b32.xlu0 %v3044, 16
      %v3207 = vpop.permute.xlu0 %3206
      %3208 = vrot.lane.b32.xlu0 %v3046, 16
      %v3209 = vpop.permute.xlu0 %3208
      %3210 = vrot.lane.b32.xlu0 %v3049, 16
      %v3211 = vpop.permute.xlu0 %3210
      %3212 = vrot.lane.b32.xlu0 %v3051, 16
      %v3213 = vpop.permute.xlu0 %3212
      %3244 = vrot.lane.b32.xlu0 %v2841, 24
      %v3245 = vpop.permute.xlu0 %3244
      %3246 = vrot.lane.b32.xlu0 %v2718, 24
      %v3247 = vpop.permute.xlu0 %3246
      %3248 = vrot.lane.b32.xlu0 %v2840, 24
      %v3249 = vpop.permute.xlu0 %3248
      %3250 = vrot.lane.b32.xlu0 %v2715, 24
      %v3251 = vpop.permute.xlu0 %3250
      %3252 = vrot.lane.b32.xlu0 %v2842, 24
      %v3253 = vpop.permute.xlu0 %3252
      %3254 = vrot.lane.b32.xlu0 %v2721, 24
      %v3255 = vpop.permute.xlu0 %3254
      %3256 = vrot.lane.b32.xlu0 %v2843, 24
      %v3257 = vpop.permute.xlu0 %3256
      %3258 = vrot.lane.b32.xlu0 %v2724, 24
      %v3259 = vpop.permute.xlu0 %3258
      %3260 = vrot.lane.b32.xlu0 %v2844, 24
      %v3261 = vpop.permute.xlu0 %3260
      %3262 = vrot.lane.b32.xlu0 %v2727, 24
      %v3263 = vpop.permute.xlu0 %3262
      %3264 = vrot.lane.b32.xlu0 %v2845, 24
      %v3265 = vpop.permute.xlu0 %3264
      %3266 = vrot.lane.b32.xlu0 %v2730, 24
      %v3267 = vpop.permute.xlu0 %3266
      %3268 = vrot.lane.b32.xlu0 %v2846, 24
      %v3269 = vpop.permute.xlu0 %3268
      %3270 = vrot.lane.b32.xlu0 %v2733, 24
      %v3271 = vpop.permute.xlu0 %3270
      %3272 = vrot.lane.b32.xlu0 %v2847, 24
      %v3273 = vpop.permute.xlu0 %3272
      %3274 = vrot.lane.b32.xlu0 %v2736, 24
      %v3275 = vpop.permute.xlu0 %3274
      %3276 = vrot.lane.b32.xlu0 %v2848, 24
      %v3277 = vpop.permute.xlu0 %3276
      %3278 = vrot.lane.b32.xlu0 %v2739, 24
      %v3279 = vpop.permute.xlu0 %3278
      %3280 = vrot.lane.b32.xlu0 %v2849, 24
      %v3281 = vpop.permute.xlu0 %3280
      %3282 = vrot.lane.b32.xlu0 %v2742, 24
      %v3283 = vpop.permute.xlu0 %3282
      %3284 = vrot.lane.b32.xlu0 %v2850, 24
      %v3285 = vpop.permute.xlu0 %3284
      %3286 = vrot.lane.b32.xlu0 %v2745, 24
      %v3287 = vpop.permute.xlu0 %3286
      %3288 = vrot.lane.b32.xlu0 %v2851, 24
      %v3289 = vpop.permute.xlu0 %3288
      %3290 = vrot.lane.b32.xlu0 %v2748, 24
      %v3291 = vpop.permute.xlu0 %3290
      %3292 = vrot.lane.b32.xlu0 %v2852, 24
      %v3293 = vpop.permute.xlu0 %3292
      %3294 = vrot.lane.b32.xlu0 %v2751, 24
      %v3295 = vpop.permute.xlu0 %3294
      %3296 = vrot.lane.b32.xlu0 %v2853, 24
      %v3297 = vpop.permute.xlu0 %3296
      %3298 = vrot.lane.b32.xlu0 %v2754, 24
      %v3299 = vpop.permute.xlu0 %3298
      %3300 = vrot.lane.b32.xlu0 %v2854, 24
      %v3301 = vpop.permute.xlu0 %3300
      %3302 = vrot.lane.b32.xlu0 %v2757, 24
      %v3303 = vpop.permute.xlu0 %3302
      %3304 = vrot.lane.b32.xlu0 %v2855, 24
      %v3305 = vpop.permute.xlu0 %3304
      %3306 = vrot.lane.b32.xlu0 %v2760, 24
      %v3307 = vpop.permute.xlu0 %3306
      %3340 = vrot.lane.b32.xlu0 %v2909, 32
      %v3341 = vpop.permute.xlu0 %3340
      %3342 = vrot.lane.b32.xlu0 %v2911, 32
      %v3343 = vpop.permute.xlu0 %3342
      %3344 = vrot.lane.b32.xlu0 %v2904, 32
      %v3345 = vpop.permute.xlu0 %3344
      %3346 = vrot.lane.b32.xlu0 %v2906, 32
      %v3347 = vpop.permute.xlu0 %3346
      %3348 = vrot.lane.b32.xlu0 %v2914, 32
      %v3349 = vpop.permute.xlu0 %3348
      %3350 = vrot.lane.b32.xlu0 %v2916, 32
      %v3351 = vpop.permute.xlu0 %3350
      %3352 = vrot.lane.b32.xlu0 %v2919, 32
      %v3353 = vpop.permute.xlu0 %3352
      %3354 = vrot.lane.b32.xlu0 %v2921, 32
      %v3355 = vpop.permute.xlu0 %3354
      %3356 = vrot.lane.b32.xlu0 %v2924, 32
      %v3357 = vpop.permute.xlu0 %3356
      %3358 = vrot.lane.b32.xlu0 %v2926, 32
      %v3359 = vpop.permute.xlu0 %3358
      %3360 = vrot.lane.b32.xlu0 %v2929, 32
      %v3361 = vpop.permute.xlu0 %3360
      %3362 = vrot.lane.b32.xlu0 %v2931, 32
      %v3363 = vpop.permute.xlu0 %3362
      %3364 = vrot.lane.b32.xlu0 %v2934, 32
      %v3365 = vpop.permute.xlu0 %3364
      %3366 = vrot.lane.b32.xlu0 %v2936, 32
      %v3367 = vpop.permute.xlu0 %3366
      %3368 = vrot.lane.b32.xlu0 %v2939, 32
      %v3369 = vpop.permute.xlu0 %3368
      %3370 = vrot.lane.b32.xlu0 %v2941, 32
      %v3371 = vpop.permute.xlu0 %3370
      %3372 = vrot.lane.b32.xlu0 %v2944, 32
      %v3373 = vpop.permute.xlu0 %3372
      %3374 = vrot.lane.b32.xlu0 %v2946, 32
      %v3375 = vpop.permute.xlu0 %3374
      %3376 = vrot.lane.b32.xlu0 %v2949, 32
      %v3377 = vpop.permute.xlu0 %3376
      %3378 = vrot.lane.b32.xlu0 %v2951, 32
      %v3379 = vpop.permute.xlu0 %3378
      %3380 = vrot.lane.b32.xlu0 %v2954, 32
      %v3381 = vpop.permute.xlu0 %3380
      %3382 = vrot.lane.b32.xlu0 %v2956, 32
      %v3383 = vpop.permute.xlu0 %3382
      %3384 = vrot.lane.b32.xlu0 %v2959, 32
      %v3385 = vpop.permute.xlu0 %3384
      %3386 = vrot.lane.b32.xlu0 %v2961, 32
      %v3387 = vpop.permute.xlu0 %3386
      %3388 = vrot.lane.b32.xlu0 %v2964, 32
      %v3389 = vpop.permute.xlu0 %3388
      %3390 = vrot.lane.b32.xlu0 %v2966, 32
      %v3391 = vpop.permute.xlu0 %3390
      %3392 = vrot.lane.b32.xlu0 %v2969, 32
      %v3393 = vpop.permute.xlu0 %3392
      %3394 = vrot.lane.b32.xlu0 %v2971, 32
      %v3395 = vpop.permute.xlu0 %3394
      %3396 = vrot.lane.b32.xlu0 %v2974, 32
      %v3397 = vpop.permute.xlu0 %3396
      %3398 = vrot.lane.b32.xlu0 %v2976, 32
      %v3399 = vpop.permute.xlu0 %3398
      %3400 = vrot.lane.b32.xlu0 %v3056, 32
      %v3401 = vpop.permute.xlu0 %3400
      %3402 = vrot.lane.b32.xlu0 %v3058, 32
      %v3403 = vpop.permute.xlu0 %3402
      %3436 = vrot.lane.b32.xlu0 %v2984, 40
      %v3437 = vpop.permute.xlu0 %3436
      %3438 = vrot.lane.b32.xlu0 %v2986, 40
      %v3439 = vpop.permute.xlu0 %3438
      %3440 = vrot.lane.b32.xlu0 %v2979, 40
      %v3441 = vpop.permute.xlu0 %3440
      %3442 = vrot.lane.b32.xlu0 %v2981, 40
      %v3443 = vpop.permute.xlu0 %3442
      %3444 = vrot.lane.b32.xlu0 %v2989, 40
      %v3445 = vpop.permute.xlu0 %3444
      %3446 = vrot.lane.b32.xlu0 %v2991, 40
      %v3447 = vpop.permute.xlu0 %3446
      %3448 = vrot.lane.b32.xlu0 %v2994, 40
      %v3449 = vpop.permute.xlu0 %3448
      %3450 = vrot.lane.b32.xlu0 %v2996, 40
      %v3451 = vpop.permute.xlu0 %3450
      %3452 = vrot.lane.b32.xlu0 %v2999, 40
      %v3453 = vpop.permute.xlu0 %3452
      %3454 = vrot.lane.b32.xlu0 %v3001, 40
      %v3455 = vpop.permute.xlu0 %3454
      %3456 = vrot.lane.b32.xlu0 %v3004, 40
      %v3457 = vpop.permute.xlu0 %3456
      %3458 = vrot.lane.b32.xlu0 %v3006, 40
      %v3459 = vpop.permute.xlu0 %3458
      %3460 = vrot.lane.b32.xlu0 %v3009, 40
      %v3461 = vpop.permute.xlu0 %3460
      %3462 = vrot.lane.b32.xlu0 %v3011, 40
      %v3463 = vpop.permute.xlu0 %3462
      %3464 = vrot.lane.b32.xlu0 %v3014, 40
      %v3465 = vpop.permute.xlu0 %3464
      %3466 = vrot.lane.b32.xlu0 %v3016, 40
      %v3467 = vpop.permute.xlu0 %3466
      %3468 = vrot.lane.b32.xlu0 %v3019, 40
      %v3469 = vpop.permute.xlu0 %3468
      %3470 = vrot.lane.b32.xlu0 %v3021, 40
      %v3471 = vpop.permute.xlu0 %3470
      %3472 = vrot.lane.b32.xlu0 %v3024, 40
      %v3473 = vpop.permute.xlu0 %3472
      %3474 = vrot.lane.b32.xlu0 %v3026, 40
      %v3475 = vpop.permute.xlu0 %3474
      %3476 = vrot.lane.b32.xlu0 %v3029, 40
      %v3477 = vpop.permute.xlu0 %3476
      %3478 = vrot.lane.b32.xlu0 %v3031, 40
      %v3479 = vpop.permute.xlu0 %3478
      %3480 = vrot.lane.b32.xlu0 %v3034, 40
      %v3481 = vpop.permute.xlu0 %3480
      %3482 = vrot.lane.b32.xlu0 %v3036, 40
      %v3483 = vpop.permute.xlu0 %3482
      %3484 = vrot.lane.b32.xlu0 %v3039, 40
      %v3485 = vpop.permute.xlu0 %3484
      %3486 = vrot.lane.b32.xlu0 %v3041, 40
      %v3487 = vpop.permute.xlu0 %3486
      %3488 = vrot.lane.b32.xlu0 %v3044, 40
      %v3489 = vpop.permute.xlu0 %3488
      %3490 = vrot.lane.b32.xlu0 %v3046, 40
      %v3491 = vpop.permute.xlu0 %3490
      %3492 = vrot.lane.b32.xlu0 %v3049, 40
      %v3493 = vpop.permute.xlu0 %3492
      %3494 = vrot.lane.b32.xlu0 %v3051, 40
      %v3495 = vpop.permute.xlu0 %3494
      %3496 = vrot.lane.b32.xlu0 %v3061, 40
      %v3497 = vpop.permute.xlu0 %3496
      %3498 = vrot.lane.b32.xlu0 %v3063, 40
      %v3499 = vpop.permute.xlu0 %3498
      %3532 = vrot.lane.b32.xlu0 %v2840, 48
      %v3533 = vpop.permute.xlu0 %3532
      %3534 = vrot.lane.b32.xlu0 %v2715, 48
      %v3535 = vpop.permute.xlu0 %3534
      %3536 = vrot.lane.b32.xlu0 %v2842, 48
      %v3537 = vpop.permute.xlu0 %3536
      %3538 = vrot.lane.b32.xlu0 %v2721, 48
      %v3539 = vpop.permute.xlu0 %3538
      %3540 = vrot.lane.b32.xlu0 %v2843, 48
      %v3541 = vpop.permute.xlu0 %3540
      %3542 = vrot.lane.b32.xlu0 %v2724, 48
      %v3543 = vpop.permute.xlu0 %3542
      %3544 = vrot.lane.b32.xlu0 %v2844, 48
      %v3545 = vpop.permute.xlu0 %3544
      %3546 = vrot.lane.b32.xlu0 %v2727, 48
      %v3547 = vpop.permute.xlu0 %3546
      %3548 = vrot.lane.b32.xlu0 %v2845, 48
      %v3549 = vpop.permute.xlu0 %3548
      %3550 = vrot.lane.b32.xlu0 %v2730, 48
      %v3551 = vpop.permute.xlu0 %3550
      %3552 = vrot.lane.b32.xlu0 %v2846, 48
      %v3553 = vpop.permute.xlu0 %3552
      %3554 = vrot.lane.b32.xlu0 %v2733, 48
      %v3555 = vpop.permute.xlu0 %3554
      %3556 = vrot.lane.b32.xlu0 %v2847, 48
      %v3557 = vpop.permute.xlu0 %3556
      %3558 = vrot.lane.b32.xlu0 %v2736, 48
      %v3559 = vpop.permute.xlu0 %3558
      %3560 = vrot.lane.b32.xlu0 %v2848, 48
      %v3561 = vpop.permute.xlu0 %3560
      %3562 = vrot.lane.b32.xlu0 %v2739, 48
      %v3563 = vpop.permute.xlu0 %3562
      %3564 = vrot.lane.b32.xlu0 %v2849, 48
      %v3565 = vpop.permute.xlu0 %3564
      %3566 = vrot.lane.b32.xlu0 %v2742, 48
      %v3567 = vpop.permute.xlu0 %3566
      %3568 = vrot.lane.b32.xlu0 %v2850, 48
      %v3569 = vpop.permute.xlu0 %3568
      %3570 = vrot.lane.b32.xlu0 %v2745, 48
      %v3571 = vpop.permute.xlu0 %3570
      %3572 = vrot.lane.b32.xlu0 %v2851, 48
      %v3573 = vpop.permute.xlu0 %3572
      %3574 = vrot.lane.b32.xlu0 %v2748, 48
      %v3575 = vpop.permute.xlu0 %3574
      %3576 = vrot.lane.b32.xlu0 %v2852, 48
      %v3577 = vpop.permute.xlu0 %3576
      %3578 = vrot.lane.b32.xlu0 %v2751, 48
      %v3579 = vpop.permute.xlu0 %3578
      %3580 = vrot.lane.b32.xlu0 %v2853, 48
      %v3581 = vpop.permute.xlu0 %3580
      %3582 = vrot.lane.b32.xlu0 %v2754, 48
      %v3583 = vpop.permute.xlu0 %3582
      %3584 = vrot.lane.b32.xlu0 %v2854, 48
      %v3585 = vpop.permute.xlu0 %3584
      %3586 = vrot.lane.b32.xlu0 %v2757, 48
      %v3587 = vpop.permute.xlu0 %3586
      %3588 = vrot.lane.b32.xlu0 %v2855, 48
      %v3589 = vpop.permute.xlu0 %3588
      %3590 = vrot.lane.b32.xlu0 %v2760, 48
      %v3591 = vpop.permute.xlu0 %3590
      %3622 = vrot.lane.b32.xlu0 %v2904, 56
      %v3623 = vpop.permute.xlu0 %3622
      %3624 = vrot.lane.b32.xlu0 %v2906, 56
      %v3625 = vpop.permute.xlu0 %3624
      %3626 = vrot.lane.b32.xlu0 %v2914, 56
      %v3627 = vpop.permute.xlu0 %3626
      %3628 = vrot.lane.b32.xlu0 %v2916, 56
      %v3629 = vpop.permute.xlu0 %3628
      %3630 = vrot.lane.b32.xlu0 %v2919, 56
      %v3631 = vpop.permute.xlu0 %3630
      %3632 = vrot.lane.b32.xlu0 %v2921, 56
      %v3633 = vpop.permute.xlu0 %3632
      %3634 = vrot.lane.b32.xlu0 %v2924, 56
      %v3635 = vpop.permute.xlu0 %3634
      %3636 = vrot.lane.b32.xlu0 %v2926, 56
      %v3637 = vpop.permute.xlu0 %3636
      %3638 = vrot.lane.b32.xlu0 %v2929, 56
      %v3639 = vpop.permute.xlu0 %3638
      %3640 = vrot.lane.b32.xlu0 %v2931, 56
      %v3641 = vpop.permute.xlu0 %3640
      %3642 = vrot.lane.b32.xlu0 %v2934, 56
      %v3643 = vpop.permute.xlu0 %3642
      %3644 = vrot.lane.b32.xlu0 %v2936, 56
      %v3645 = vpop.permute.xlu0 %3644
      %3646 = vrot.lane.b32.xlu0 %v2939, 56
      %v3647 = vpop.permute.xlu0 %3646
      %3648 = vrot.lane.b32.xlu0 %v2941, 56
      %v3649 = vpop.permute.xlu0 %3648
      %3650 = vrot.lane.b32.xlu0 %v2944, 56
      %v3651 = vpop.permute.xlu0 %3650
      %3652 = vrot.lane.b32.xlu0 %v2946, 56
      %v3653 = vpop.permute.xlu0 %3652
      %3654 = vrot.lane.b32.xlu0 %v2949, 56
      %v3655 = vpop.permute.xlu0 %3654
      %3656 = vrot.lane.b32.xlu0 %v2951, 56
      %v3657 = vpop.permute.xlu0 %3656
      %3658 = vrot.lane.b32.xlu0 %v2954, 56
      %v3659 = vpop.permute.xlu0 %3658
      %3660 = vrot.lane.b32.xlu0 %v2956, 56
      %v3661 = vpop.permute.xlu0 %3660
      %3662 = vrot.lane.b32.xlu0 %v2959, 56
      %v3663 = vpop.permute.xlu0 %3662
      %3664 = vrot.lane.b32.xlu0 %v2961, 56
      %v3665 = vpop.permute.xlu0 %3664
      %3666 = vrot.lane.b32.xlu0 %v2964, 56
      %v3667 = vpop.permute.xlu0 %3666
      %3668 = vrot.lane.b32.xlu0 %v2966, 56
      %v3669 = vpop.permute.xlu0 %3668
      %3670 = vrot.lane.b32.xlu0 %v2969, 56
      %v3671 = vpop.permute.xlu0 %3670
      %3672 = vrot.lane.b32.xlu0 %v2971, 56
      %v3673 = vpop.permute.xlu0 %3672
      %3674 = vrot.lane.b32.xlu0 %v2974, 56
      %v3675 = vpop.permute.xlu0 %3674
      %3676 = vrot.lane.b32.xlu0 %v2976, 56
      %v3677 = vpop.permute.xlu0 %3676
      %3678 = vrot.lane.b32.xlu0 %v3056, 56
      %v3679 = vpop.permute.xlu0 %3678
      %3680 = vrot.lane.b32.xlu0 %v3058, 56
      %v3681 = vpop.permute.xlu0 %3680
      %3712 = vrot.lane.b32.xlu0 %v2979, 64
      %v3713 = vpop.permute.xlu0 %3712
      %3714 = vrot.lane.b32.xlu0 %v2981, 64
      %v3715 = vpop.permute.xlu0 %3714
      %3716 = vrot.lane.b32.xlu0 %v2989, 64
      %v3717 = vpop.permute.xlu0 %3716
      %3718 = vrot.lane.b32.xlu0 %v2991, 64
      %v3719 = vpop.permute.xlu0 %3718
      %3720 = vrot.lane.b32.xlu0 %v2994, 64
      %v3721 = vpop.permute.xlu0 %3720
      %3722 = vrot.lane.b32.xlu0 %v2996, 64
      %v3723 = vpop.permute.xlu0 %3722
      %3724 = vrot.lane.b32.xlu0 %v2999, 64
      %v3725 = vpop.permute.xlu0 %3724
      %3726 = vrot.lane.b32.xlu0 %v3001, 64
      %v3727 = vpop.permute.xlu0 %3726
      %3728 = vrot.lane.b32.xlu0 %v3004, 64
      %v3729 = vpop.permute.xlu0 %3728
      %3730 = vrot.lane.b32.xlu0 %v3006, 64
      %v3731 = vpop.permute.xlu0 %3730
      %3732 = vrot.lane.b32.xlu0 %v3009, 64
      %v3733 = vpop.permute.xlu0 %3732
      %3734 = vrot.lane.b32.xlu0 %v3011, 64
      %v3735 = vpop.permute.xlu0 %3734
      %3736 = vrot.lane.b32.xlu0 %v3014, 64
      %v3737 = vpop.permute.xlu0 %3736
      %3738 = vrot.lane.b32.xlu0 %v3016, 64
      %v3739 = vpop.permute.xlu0 %3738
      %3740 = vrot.lane.b32.xlu0 %v3019, 64
      %v3741 = vpop.permute.xlu0 %3740
      %3742 = vrot.lane.b32.xlu0 %v3021, 64
      %v3743 = vpop.permute.xlu0 %3742
      %3744 = vrot.lane.b32.xlu0 %v3024, 64
      %v3745 = vpop.permute.xlu0 %3744
      %3746 = vrot.lane.b32.xlu0 %v3026, 64
      %v3747 = vpop.permute.xlu0 %3746
      %3748 = vrot.lane.b32.xlu0 %v3029, 64
      %v3749 = vpop.permute.xlu0 %3748
      %3750 = vrot.lane.b32.xlu0 %v3031, 64
      %v3751 = vpop.permute.xlu0 %3750
      %3752 = vrot.lane.b32.xlu0 %v3034, 64
      %v3753 = vpop.permute.xlu0 %3752
      %3754 = vrot.lane.b32.xlu0 %v3036, 64
      %v3755 = vpop.permute.xlu0 %3754
      %3756 = vrot.lane.b32.xlu0 %v3039, 64
      %v3757 = vpop.permute.xlu0 %3756
      %3758 = vrot.lane.b32.xlu0 %v3041, 64
      %v3759 = vpop.permute.xlu0 %3758
      %3760 = vrot.lane.b32.xlu0 %v3044, 64
      %v3761 = vpop.permute.xlu0 %3760
      %3762 = vrot.lane.b32.xlu0 %v3046, 64
      %v3763 = vpop.permute.xlu0 %3762
      %3764 = vrot.lane.b32.xlu0 %v3049, 64
      %v3765 = vpop.permute.xlu0 %3764
      %3766 = vrot.lane.b32.xlu0 %v3051, 64
      %v3767 = vpop.permute.xlu0 %3766
      %3768 = vrot.lane.b32.xlu0 %v3061, 64
      %v3769 = vpop.permute.xlu0 %3768
      %3770 = vrot.lane.b32.xlu0 %v3063, 64
      %v3771 = vpop.permute.xlu0 %3770
      %v3802 = vsel %vm2020, %v2840, %v3065
      %v3803 = vsel %vm2020, %v2715, %v3067
      %v3804 = vsel %vm2020, %v2841, %v3069
      %v3805 = vsel %vm2020, %v2718, %v3071
      %v3806 = vsel %vm2020, %v2842, %v3073
      %v3807 = vsel %vm2020, %v2721, %v3075
      %v3808 = vsel %vm2020, %v2843, %v3077
      %v3809 = vsel %vm2020, %v2724, %v3079
      %v3810 = vsel %vm2020, %v2844, %v3081
      %v3811 = vsel %vm2020, %v2727, %v3083
      %v3812 = vsel %vm2020, %v2845, %v3085
      %v3813 = vsel %vm2020, %v2730, %v3087
      %v3814 = vsel %vm2020, %v2846, %v3089
      %v3815 = vsel %vm2020, %v2733, %v3091
      %v3816 = vsel %vm2020, %v2847, %v3093
      %v3817 = vsel %vm2020, %v2736, %v3095
      %v3818 = vsel %vm2020, %v2848, %v3097
      %v3819 = vsel %vm2020, %v2739, %v3099
      %v3820 = vsel %vm2020, %v2849, %v3101
      %v3821 = vsel %vm2020, %v2742, %v3103
      %v3822 = vsel %vm2020, %v2850, %v3105
      %v3823 = vsel %vm2020, %v2745, %v3107
      %v3824 = vsel %vm2020, %v2851, %v3109
      %v3825 = vsel %vm2020, %v2748, %v3111
      %v3826 = vsel %vm2020, %v2852, %v3113
      %v3827 = vsel %vm2020, %v2751, %v3115
      %v3828 = vsel %vm2020, %v2853, %v3117
      %v3829 = vsel %vm2020, %v2754, %v3119
      %v3830 = vsel %vm2020, %v2854, %v3121
      %v3831 = vsel %vm2020, %v2757, %v3123
      %v3832 = vsel %vm2051, %v3802, %v3155
      %v3833 = vsel %vm2051, %v3803, %v3157
      %v3834 = vsel %vm2051, %v3804, %v3159
      %v3835 = vsel %vm2051, %v3805, %v3161
      %v3836 = vsel %vm2051, %v3806, %v3163
      %v3837 = vsel %vm2051, %v3807, %v3165
      %v3838 = vsel %vm2051, %v3808, %v3167
      %v3839 = vsel %vm2051, %v3809, %v3169
      %v3840 = vsel %vm2051, %v3810, %v3171
      %v3841 = vsel %vm2051, %v3811, %v3173
      %v3842 = vsel %vm2051, %v3812, %v3175
      %v3843 = vsel %vm2051, %v3813, %v3177
      %v3844 = vsel %vm2051, %v3814, %v3179
      %v3845 = vsel %vm2051, %v3815, %v3181
      %v3846 = vsel %vm2051, %v3816, %v3183
      %v3847 = vsel %vm2051, %v3817, %v3185
      %v3848 = vsel %vm2051, %v3818, %v3187
      %v3849 = vsel %vm2051, %v3819, %v3189
      %v3850 = vsel %vm2051, %v3820, %v3191
      %v3851 = vsel %vm2051, %v3821, %v3193
      %v3852 = vsel %vm2051, %v3822, %v3195
      %v3853 = vsel %vm2051, %v3823, %v3197
      %v3854 = vsel %vm2051, %v3824, %v3199
      %v3855 = vsel %vm2051, %v3825, %v3201
      %v3856 = vsel %vm2051, %v3826, %v3203
      %v3857 = vsel %vm2051, %v3827, %v3205
      %v3858 = vsel %vm2051, %v3828, %v3207
      %v3859 = vsel %vm2051, %v3829, %v3209
      %v3860 = vsel %vm2051, %v3830, %v3211
      %v3861 = vsel %vm2051, %v3831, %v3213
      %v3862 = vsel %vm2082, %v3832, %v3245
      %v3863 = vsel %vm2082, %v3833, %v3247
      %v3864 = vsel %vm2082, %v3834, %v3249
      %v3865 = vsel %vm2082, %v3835, %v3251
      %v3866 = vsel %vm2082, %v3832, %v3253
      %v3867 = vsel %vm2082, %v3833, %v3255
      %v3868 = vsel %vm2082, %v3836, %v3257
      %v3869 = vsel %vm2082, %v3837, %v3259
      %v3870 = vsel %vm2082, %v3838, %v3261
      %v3871 = vsel %vm2082, %v3839, %v3263
      %v3872 = vsel %vm2082, %v3840, %v3265
      %v3873 = vsel %vm2082, %v3841, %v3267
      %v3874 = vsel %vm2082, %v3842, %v3269
      %v3875 = vsel %vm2082, %v3843, %v3271
      %v3876 = vsel %vm2082, %v3844, %v3273
      %v3877 = vsel %vm2082, %v3845, %v3275
      %v3878 = vsel %vm2082, %v3846, %v3277
      %v3879 = vsel %vm2082, %v3847, %v3279
      %v3880 = vsel %vm2082, %v3848, %v3281
      %v3881 = vsel %vm2082, %v3849, %v3283
      %v3882 = vsel %vm2082, %v3850, %v3285
      %v3883 = vsel %vm2082, %v3851, %v3287
      %v3884 = vsel %vm2082, %v3852, %v3289
      %v3885 = vsel %vm2082, %v3853, %v3291
      %v3886 = vsel %vm2082, %v3854, %v3293
      %v3887 = vsel %vm2082, %v3855, %v3295
      %v3888 = vsel %vm2082, %v3856, %v3297
      %v3889 = vsel %vm2082, %v3857, %v3299
      %v3890 = vsel %vm2082, %v3858, %v3301
      %v3891 = vsel %vm2082, %v3859, %v3303
      %v3892 = vsel %vm2082, %v3860, %v3305
      %v3893 = vsel %vm2082, %v3861, %v3307
      %v3894 = vsel %vm2115, %v3862, %v3341
      %v3895 = vsel %vm2115, %v3863, %v3343
      %v3896 = vsel %vm2115, %v3864, %v3345
      %v3897 = vsel %vm2115, %v3865, %v3347
      %v3898 = vsel %vm2115, %v3866, %v3349
      %v3899 = vsel %vm2115, %v3867, %v3351
      %v3900 = vsel %vm2115, %v3868, %v3353
      %v3901 = vsel %vm2115, %v3869, %v3355
      %v3902 = vsel %vm2115, %v3870, %v3357
      %v3903 = vsel %vm2115, %v3871, %v3359
      %v3904 = vsel %vm2115, %v3872, %v3361
      %v3905 = vsel %vm2115, %v3873, %v3363
      %v3906 = vsel %vm2115, %v3874, %v3365
      %v3907 = vsel %vm2115, %v3875, %v3367
      %v3908 = vsel %vm2115, %v3876, %v3369
      %v3909 = vsel %vm2115, %v3877, %v3371
      %v3910 = vsel %vm2115, %v3878, %v3373
      %v3911 = vsel %vm2115, %v3879, %v3375
      %v3912 = vsel %vm2115, %v3880, %v3377
      %v3913 = vsel %vm2115, %v3881, %v3379
      %v3914 = vsel %vm2115, %v3882, %v3381
      %v3915 = vsel %vm2115, %v3883, %v3383
      %v3916 = vsel %vm2115, %v3884, %v3385
      %v3917 = vsel %vm2115, %v3885, %v3387
      %v3918 = vsel %vm2115, %v3886, %v3389
      %v3919 = vsel %vm2115, %v3887, %v3391
      %v3920 = vsel %vm2115, %v3888, %v3393
      %v3921 = vsel %vm2115, %v3889, %v3395
      %v3922 = vsel %vm2115, %v3890, %v3397
      %v3923 = vsel %vm2115, %v3891, %v3399
      %v3924 = vsel %vm2115, %v3892, %v3401
      %v3925 = vsel %vm2115, %v3893, %v3403
      %v3926 = vsel %vm2148, %v3894, %v3437
      %v3927 = vsel %vm2148, %v3895, %v3439
      %v3928 = vsel %vm2148, %v3896, %v3441
      %v3929 = vsel %vm2148, %v3897, %v3443
      %v3930 = vsel %vm2148, %v3898, %v3445
      %v3931 = vsel %vm2148, %v3899, %v3447
      %v3932 = vsel %vm2148, %v3900, %v3449
      %v3933 = vsel %vm2148, %v3901, %v3451
      %v3934 = vsel %vm2148, %v3902, %v3453
      %v3935 = vsel %vm2148, %v3903, %v3455
      %v3936 = vsel %vm2148, %v3904, %v3457
      %v3937 = vsel %vm2148, %v3905, %v3459
      %v3938 = vsel %vm2148, %v3906, %v3461
      %v3939 = vsel %vm2148, %v3907, %v3463
      %v3940 = vsel %vm2148, %v3908, %v3465
      %v3941 = vsel %vm2148, %v3909, %v3467
      %v3942 = vsel %vm2148, %v3910, %v3469
      %v3943 = vsel %vm2148, %v3911, %v3471
      %v3944 = vsel %vm2148, %v3912, %v3473
      %v3945 = vsel %vm2148, %v3913, %v3475
      %v3946 = vsel %vm2148, %v3914, %v3477
      %v3947 = vsel %vm2148, %v3915, %v3479
      %v3948 = vsel %vm2148, %v3916, %v3481
      %v3949 = vsel %vm2148, %v3917, %v3483
      %v3950 = vsel %vm2148, %v3918, %v3485
      %v3951 = vsel %vm2148, %v3919, %v3487
      %v3952 = vsel %vm2148, %v3920, %v3489
      %v3953 = vsel %vm2148, %v3921, %v3491
      %v3954 = vsel %vm2148, %v3922, %v3493
      %v3955 = vsel %vm2148, %v3923, %v3495
      %v3956 = vsel %vm2148, %v3924, %v3497
      %v3957 = vsel %vm2148, %v3925, %v3499
      %v3958 = vsel %vm2181, %v3926, %v3533
      %v3959 = vsel %vm2181, %v3927, %v3535
      %v3960 = vsel %vm2181, %v3928, %v3537
      %v3961 = vsel %vm2181, %v3929, %v3539
      %v3962 = vsel %vm2181, %v3930, %v3541
      %v3963 = vsel %vm2181, %v3931, %v3543
      %v3964 = vsel %vm2181, %v3932, %v3545
      %v3965 = vsel %vm2181, %v3933, %v3547
      %v3966 = vsel %vm2181, %v3934, %v3549
      %v3967 = vsel %vm2181, %v3935, %v3551
      %v3968 = vsel %vm2181, %v3936, %v3553
      %v3969 = vsel %vm2181, %v3937, %v3555
      %v3970 = vsel %vm2181, %v3938, %v3557
      %v3971 = vsel %vm2181, %v3939, %v3559
      %v3972 = vsel %vm2181, %v3940, %v3561
      %v3973 = vsel %vm2181, %v3941, %v3563
      %v3974 = vsel %vm2181, %v3942, %v3565
      %v3975 = vsel %vm2181, %v3943, %v3567
      %v3976 = vsel %vm2181, %v3944, %v3569
      %v3977 = vsel %vm2181, %v3945, %v3571
      %v3978 = vsel %vm2181, %v3946, %v3573
      %v3979 = vsel %vm2181, %v3947, %v3575
      %v3980 = vsel %vm2181, %v3948, %v3577
      %v3981 = vsel %vm2181, %v3949, %v3579
      %v3982 = vsel %vm2181, %v3950, %v3581
      %v3983 = vsel %vm2181, %v3951, %v3583
      %v3984 = vsel %vm2181, %v3952, %v3585
      %v3985 = vsel %vm2181, %v3953, %v3587
      %v3986 = vsel %vm2181, %v3954, %v3589
      %v3987 = vsel %vm2181, %v3955, %v3591
      %v3988 = vsel %vm2181, %v3956, %v3585
      %v3989 = vsel %vm2181, %v3957, %v3587
      %v3990 = vsel %vm2214, %v3958, %v3623
      %v3991 = vsel %vm2214, %v3959, %v3625
      %v3992 = vsel %vm2214, %v3960, %v3627
      %v3993 = vsel %vm2214, %v3961, %v3629
      %v3994 = vsel %vm2214, %v3962, %v3631
      %v3995 = vsel %vm2214, %v3963, %v3633
      %v3996 = vsel %vm2214, %v3964, %v3635
      %v3997 = vsel %vm2214, %v3965, %v3637
      %v3998 = vsel %vm2214, %v3966, %v3639
      %v3999 = vsel %vm2214, %v3967, %v3641
      %v4000 = vsel %vm2214, %v3968, %v3643
      %v4001 = vsel %vm2214, %v3969, %v3645
      %v4002 = vsel %vm2214, %v3970, %v3647
      %v4003 = vsel %vm2214, %v3971, %v3649
      %v4004 = vsel %vm2214, %v3972, %v3651
      %v4005 = vsel %vm2214, %v3973, %v3653
      %v4006 = vsel %vm2214, %v3974, %v3655
      %v4007 = vsel %vm2214, %v3975, %v3657
      %v4008 = vsel %vm2214, %v3976, %v3659
      %v4009 = vsel %vm2214, %v3977, %v3661
      %v4010 = vsel %vm2214, %v3978, %v3663
      %v4011 = vsel %vm2214, %v3979, %v3665
      %v4012 = vsel %vm2214, %v3980, %v3667
      %v4013 = vsel %vm2214, %v3981, %v3669
      %v4014 = vsel %vm2214, %v3982, %v3671
      %v4015 = vsel %vm2214, %v3983, %v3673
      %v4016 = vsel %vm2214, %v3984, %v3675
      %v4017 = vsel %vm2214, %v3985, %v3677
      %v4018 = vsel %vm2214, %v3986, %v3679
      %v4019 = vsel %vm2214, %v3987, %v3681
      %v4020 = vsel %vm2214, %v3988, %v3675
      %v4021 = vsel %vm2214, %v3989, %v3677
      %v4022 = vsel %vm339, %v3990, %v3713
      %v4023 = vsel %vm339, %v3991, %v3715
      %v4024 = vsel %vm339, %v3992, %v3717
      %v4025 = vsel %vm339, %v3993, %v3719
      %v4026 = vsel %vm339, %v3994, %v3721
      %v4027 = vsel %vm339, %v3995, %v3723
      %v4028 = vsel %vm339, %v3996, %v3725
      %v4029 = vsel %vm339, %v3997, %v3727
      %v4030 = vsel %vm339, %v3998, %v3729
      %v4031 = vsel %vm339, %v3999, %v3731
      %v4032 = vsel %vm339, %v4000, %v3733
      %v4033 = vsel %vm339, %v4001, %v3735
      %v4034 = vsel %vm339, %v4002, %v3737
      %v4035 = vsel %vm339, %v4003, %v3739
      %v4036 = vsel %vm339, %v4004, %v3741
      %v4037 = vsel %vm339, %v4005, %v3743
      %v4038 = vsel %vm339, %v4006, %v3745
      %v4039 = vsel %vm339, %v4007, %v3747
      %v4040 = vsel %vm339, %v4008, %v3749
      %v4041 = vsel %vm339, %v4009, %v3751
      %v4042 = vsel %vm339, %v4010, %v3753
      %v4043 = vsel %vm339, %v4011, %v3755
      %v4044 = vsel %vm339, %v4012, %v3757
      %v4045 = vsel %vm339, %v4013, %v3759
      %v4046 = vsel %vm339, %v4014, %v3761
      %v4047 = vsel %vm339, %v4015, %v3763
      %v4048 = vsel %vm339, %v4016, %v3765
      %v4049 = vsel %vm339, %v4017, %v3767
      %v4050 = vsel %vm339, %v4018, %v3769
      %v4051 = vsel %vm339, %v4019, %v3771
      %v4052 = vsel %vm339, %v4020, %v3765
      %v4053 = vsel %vm339, %v4021, %v3767
      %v4055 = vlaneseq
      %v4056 = vshrl.u32 %v4055, 7
      %v4057 = vsub.s32 0, %v4056
      %v4058 = vrot.slane %v2648, %v4057
      %v4061 = vsel %vm2285, %v4022, 0
      %v4064 = vsel %vm2285, %v4023, 0
      %v4067 = vsel %vm2285, %v4024, 0
      %v4070 = vsel %vm2285, %v4025, 0
      %v4073 = vsel %vm2285, %v4026, 0
      %v4076 = vsel %vm2285, %v4027, 0
      %v4079 = vsel %vm2285, %v4028, 0
      %v4082 = vsel %vm2285, %v4029, 0
      %v4085 = vsel %vm2285, %v4030, 0
      %v4088 = vsel %vm2285, %v4031, 0
      %v4091 = vsel %vm2285, %v4032, 0
      %v4094 = vsel %vm2285, %v4033, 0
      %v4097 = vsel %vm2285, %v4034, 0
      %v4100 = vsel %vm2285, %v4035, 0
      %v4103 = vsel %vm2285, %v4036, 0
      %v4106 = vsel %vm2285, %v4037, 0
      %v4109 = vsel %vm2285, %v4038, 0
      %v4112 = vsel %vm2285, %v4039, 0
      %v4115 = vsel %vm2285, %v4040, 0
      %v4118 = vsel %vm2285, %v4041, 0
      %v4121 = vsel %vm2285, %v4042, 0
      %v4124 = vsel %vm2285, %v4043, 0
      %v4127 = vsel %vm2285, %v4044, 0
      %v4130 = vsel %vm2285, %v4045, 0
      %v4133 = vsel %vm2285, %v4046, 0
      %v4136 = vsel %vm2285, %v4047, 0
      %v4139 = vsel %vm2285, %v4048, 0
      %v4142 = vsel %vm2285, %v4049, 0
      %v4145 = vsel %vm2285, %v4050, 0
      %v4148 = vsel %vm2285, %v4051, 0
      %v4151 = vsel %vm2285, %v4052, 0
      %v4154 = vsel %vm2285, %v4053, 0
      %4156 = vmatprep.subr.mxu0 0.0
      %4157 = vmatpush1.msra.mxu0 %v2639
      %4158 = vmatprep.subr.mxu0 0.0
      %4159 = vmatpush1.msra.mxu0 %v2640
      %4160 = vmatprep.subr.mxu0 0.0
      %4161 = vmatpush1.msra.mxu0 %v2641
      %4162 = vmatprep.subr.mxu0 0.0
      %4163 = vmatpush1.msra.mxu0 %v2642
      %4164 = vmatprep.subr.mxu0 0.0
      %4165 = vmatpush1.msra.mxu0 %v2643
      %4166 = vmatprep.subr.mxu0 0.0
      %4167 = vmatpush1.msra.mxu0 %v2644
      %4168 = vmatprep.subr.mxu0 0.0
      %4169 = vmatpush1.msra.mxu0 %v2645
      %4170 = vmatprep.subr.mxu0 0.0
      %4171 = vmatpush1.msra.mxu0 %v2646
      %4172 = vmatprep.subr.mxu0 0.0
      %4173 = vmatpush1.msra.mxu0 %v2647
      %4174 = vmatprep.subr.mxu0 0.0
      %4175 = vmatpush1.msra.mxu0 0.0
      %4176 = vmatprep.subr.mxu0 0.0
      %4177 = vmatpush1.msra.mxu0 0.0
      %4178 = vmatprep.subr.mxu0 0.0
      %4179 = vmatpush1.msra.mxu0 0.0
      %4180 = vmatprep.subr.mxu0 0.0
      %4181 = vmatpush1.msra.mxu0 0.0
      %4182 = vmatprep.subr.mxu0 0.0
      %4183 = vmatpush1.msra.mxu0 0.0
      %4184 = vmatprep.subr.mxu0 0.0
      %4185 = vmatpush1.msra.mxu0 0.0
      %4186 = vmatprep.subr.mxu0 0.0
      %4187 = vmatpush1.msra.mxu0 0.0
      %4188 = vmatprep.subr.mxu0 0.0
      %4189 = vmatpush1.msra.mxu0 0.0
      %4190 = vmatprep.subr.mxu0 0.0
      %4191 = vmatpush1.msra.mxu0 0.0
      %4192 = vmatprep.subr.mxu0 0.0
      %4193 = vmatpush1.msra.mxu0 0.0
      %4194 = vmatprep.subr.mxu0 0.0
      %4195 = vmatpush1.msra.mxu0 0.0
      %4196 = vmatprep.subr.mxu0 0.0
      %4197 = vmatpush1.msra.mxu0 0.0
      %4198 = vmatprep.subr.mxu0 0.0
      %4199 = vmatpush1.msra.mxu0 0.0
      %4200 = vmatprep.subr.mxu0 0.0
      %4201 = vmatpush1.msra.mxu0 0.0
      %4202 = vmatprep.subr.mxu0 0.0
      %4203 = vmatpush1.msra.mxu0 0.0
      %4204 = vmatprep.subr.mxu0 0.0
      %4205 = vmatpush1.msra.mxu0 0.0
      %4206 = vmatprep.subr.mxu0 0.0
      %4207 = vmatpush1.msra.mxu0 0.0
      %4208 = vmatprep.subr.mxu0 0.0
      %4209 = vmatpush1.msra.mxu0 0.0
      %4210 = vmatprep.subr.mxu0 0.0
      %4211 = vmatpush1.msra.mxu0 0.0
      %4212 = vmatprep.subr.mxu0 0.0
      %4213 = vmatpush1.msra.mxu0 0.0
      %4214 = vmatprep.subr.mxu0 0.0
      %4215 = vmatpush1.msra.mxu0 0.0
      %4216 = vmatprep.subr.mxu0 0.0
      %4217 = vmatpush1.msra.mxu0 0.0
      %4218 = vmatprep.subr.mxu0 0.0
      %4219 = vmatpush1.msra.mxu0 0.0
      %4220 = vmatprep.mubr.f32.mxu0 0.0
      %4221 = vmatmul.mubr.f32.gmra.mrb[0].mxu0 %v4061
      %v4222 = vpop.f32.mrb[0].mxu0
      %v4223 = vadd.f32 %v4058, %v4222
      %v4224 = vpop.f32.mrb[0].mxu0
      %4225 = vmatprep.mubr.f32.mxu0 0.0
      %4226 = vmatmul.mubr.f32.gmra.mrb[0].mxu0 %v4064
      %v4227 = vpop.f32.mrb[0].mxu0
      %v4228 = vadd.f32 %v4058, %v4227
      %v4229 = vpop.f32.mrb[0].mxu0
      %4230 = vmatprep.mubr.f32.mxu0 0.0
      %4231 = vmatmul.mubr.f32.gmra.mrb[0].mxu0 %v4067
      %v4232 = vpop.f32.mrb[0].mxu0
      %v4233 = vadd.f32 %v4058, %v4232
      %v4234 = vpop.f32.mrb[0].mxu0
      %4235 = vmatprep.mubr.f32.mxu0 0.0
      %4236 = vmatmul.mubr.f32.gmra.mrb[0].mxu0 %v4070
      %v4237 = vpop.f32.mrb[0].mxu0
      %v4238 = vadd.f32 %v4058, %v4237
      %v4239 = vpop.f32.mrb[0].mxu0
      %4240 = vmatprep.mubr.f32.mxu0 0.0
      %4241 = vmatmul.mubr.f32.gmra.mrb[0].mxu0 %v4073
      %v4242 = vpop.f32.mrb[0].mxu0
      %v4243 = vadd.f32 %v4058, %v4242
      %v4244 = vpop.f32.mrb[0].mxu0
      %4245 = vmatprep.mubr.f32.mxu0 0.0
      %4246 = vmatmul.mubr.f32.gmra.mrb[0].mxu0 %v4076
      %v4247 = vpop.f32.mrb[0].mxu0
      %v4248 = vadd.f32 %v4058, %v4247
      %v4249 = vpop.f32.mrb[0].mxu0
      %4250 = vmatprep.mubr.f32.mxu0 0.0
      %4251 = vmatmul.mubr.f32.gmra.mrb[0].mxu0 %v4079
      %v4252 = vpop.f32.mrb[0].mxu0
      %v4253 = vadd.f32 %v4058, %v4252
      %v4254 = vpop.f32.mrb[0].mxu0
      %4255 = vmatprep.mubr.f32.mxu0 0.0
      %4256 = vmatmul.mubr.f32.gmra.mrb[0].mxu0 %v4082
      %v4257 = vpop.f32.mrb[0].mxu0
      %v4258 = vadd.f32 %v4058, %v4257
      %v4259 = vpop.f32.mrb[0].mxu0
      %4260 = vmatprep.mubr.f32.mxu0 0.0
      %4261 = vmatmul.mubr.f32.gmra.mrb[0].mxu0 %v4085
      %v4262 = vpop.f32.mrb[0].mxu0
      %v4263 = vadd.f32 %v4058, %v4262
      %v4264 = vpop.f32.mrb[0].mxu0
      %4265 = vmatprep.mubr.f32.mxu0 0.0
      %4266 = vmatmul.mubr.f32.gmra.mrb[0].mxu0 %v4088
      %v4267 = vpop.f32.mrb[0].mxu0
      %v4268 = vadd.f32 %v4058, %v4267
      %v4269 = vpop.f32.mrb[0].mxu0
      %4270 = vmatprep.mubr.f32.mxu0 0.0
      %4271 = vmatmul.mubr.f32.gmra.mrb[0].mxu0 %v4091
      %v4272 = vpop.f32.mrb[0].mxu0
      %v4273 = vadd.f32 %v4058, %v4272
      %v4274 = vpop.f32.mrb[0].mxu0
      %4275 = vmatprep.mubr.f32.mxu0 0.0
      %4276 = vmatmul.mubr.f32.gmra.mrb[0].mxu0 %v4094
      %v4277 = vpop.f32.mrb[0].mxu0
      %v4278 = vadd.f32 %v4058, %v4277
      %v4279 = vpop.f32.mrb[0].mxu0
      %4280 = vmatprep.mubr.f32.mxu0 0.0
      %4281 = vmatmul.mubr.f32.gmra.mrb[0].mxu0 %v4097
      %v4282 = vpop.f32.mrb[0].mxu0
      %v4283 = vadd.f32 %v4058, %v4282
      %v4284 = vpop.f32.mrb[0].mxu0
      %4285 = vmatprep.mubr.f32.mxu0 0.0
      %4286 = vmatmul.mubr.f32.gmra.mrb[0].mxu0 %v4100
      %v4287 = vpop.f32.mrb[0].mxu0
      %v4288 = vadd.f32 %v4058, %v4287
      %v4289 = vpop.f32.mrb[0].mxu0
      %4290 = vmatprep.mubr.f32.mxu0 0.0
      %4291 = vmatmul.mubr.f32.gmra.mrb[0].mxu0 %v4103
      %v4292 = vpop.f32.mrb[0].mxu0
      %v4293 = vadd.f32 %v4058, %v4292
      %v4294 = vpop.f32.mrb[0].mxu0
      %4295 = vmatprep.mubr.f32.mxu0 0.0
      %4296 = vmatmul.mubr.f32.gmra.mrb[0].mxu0 %v4106
      %v4297 = vpop.f32.mrb[0].mxu0
      %v4298 = vadd.f32 %v4058, %v4297
      %v4299 = vpop.f32.mrb[0].mxu0
      %4300 = vmatprep.mubr.f32.mxu0 0.0
      %4301 = vmatmul.mubr.f32.gmra.mrb[0].mxu0 %v4109
      %v4302 = vpop.f32.mrb[0].mxu0
      %v4303 = vadd.f32 %v4058, %v4302
      %v4304 = vpop.f32.mrb[0].mxu0
      %4305 = vmatprep.mubr.f32.mxu0 0.0
      %4306 = vmatmul.mubr.f32.gmra.mrb[0].mxu0 %v4112
      %v4307 = vpop.f32.mrb[0].mxu0
      %v4308 = vadd.f32 %v4058, %v4307
      %v4309 = vpop.f32.mrb[0].mxu0
      %4310 = vmatprep.mubr.f32.mxu0 0.0
      %4311 = vmatmul.mubr.f32.gmra.mrb[0].mxu0 %v4115
      %v4312 = vpop.f32.mrb[0].mxu0
      %v4313 = vadd.f32 %v4058, %v4312
      %v4314 = vpop.f32.mrb[0].mxu0
      %4315 = vmatprep.mubr.f32.mxu0 0.0
      %4316 = vmatmul.mubr.f32.gmra.mrb[0].mxu0 %v4118
      %v4317 = vpop.f32.mrb[0].mxu0
      %v4318 = vadd.f32 %v4058, %v4317
      %v4319 = vpop.f32.mrb[0].mxu0
      %4320 = vmatprep.mubr.f32.mxu0 0.0
      %4321 = vmatmul.mubr.f32.gmra.mrb[0].mxu0 %v4121
      %v4322 = vpop.f32.mrb[0].mxu0
      %v4323 = vadd.f32 %v4058, %v4322
      %v4324 = vpop.f32.mrb[0].mxu0
      %4325 = vmatprep.mubr.f32.mxu0 0.0
      %4326 = vmatmul.mubr.f32.gmra.mrb[0].mxu0 %v4124
      %v4327 = vpop.f32.mrb[0].mxu0
      %v4328 = vadd.f32 %v4058, %v4327
      %v4329 = vpop.f32.mrb[0].mxu0
      %4330 = vmatprep.mubr.f32.mxu0 0.0
      %4331 = vmatmul.mubr.f32.gmra.mrb[0].mxu0 %v4127
      %v4332 = vpop.f32.mrb[0].mxu0
      %v4333 = vadd.f32 %v4058, %v4332
      %v4334 = vpop.f32.mrb[0].mxu0
      %4335 = vmatprep.mubr.f32.mxu0 0.0
      %4336 = vmatmul.mubr.f32.gmra.mrb[0].mxu0 %v4130
      %v4337 = vpop.f32.mrb[0].mxu0
      %v4338 = vadd.f32 %v4058, %v4337
      %v4339 = vpop.f32.mrb[0].mxu0
      %4340 = vmatprep.mubr.f32.mxu0 0.0
      %4341 = vmatmul.mubr.f32.gmra.mrb[0].mxu0 %v4133
      %v4342 = vpop.f32.mrb[0].mxu0
      %v4343 = vadd.f32 %v4058, %v4342
      %v4344 = vpop.f32.mrb[0].mxu0
      %4345 = vmatprep.mubr.f32.mxu0 0.0
      %4346 = vmatmul.mubr.f32.gmra.mrb[0].mxu0 %v4136
      %v4347 = vpop.f32.mrb[0].mxu0
      %v4348 = vadd.f32 %v4058, %v4347
      %v4349 = vpop.f32.mrb[0].mxu0
      %4350 = vmatprep.mubr.f32.mxu0 0.0
      %4351 = vmatmul.mubr.f32.gmra.mrb[0].mxu0 %v4139
      %v4352 = vpop.f32.mrb[0].mxu0
      %v4353 = vadd.f32 %v4058, %v4352
      %v4354 = vpop.f32.mrb[0].mxu0
      %4355 = vmatprep.mubr.f32.mxu0 0.0
      %4356 = vmatmul.mubr.f32.gmra.mrb[0].mxu0 %v4142
      %v4357 = vpop.f32.mrb[0].mxu0
      %v4358 = vadd.f32 %v4058, %v4357
      %v4359 = vpop.f32.mrb[0].mxu0
      %4360 = vmatprep.mubr.f32.mxu0 0.0
      %4361 = vmatmul.mubr.f32.gmra.mrb[0].mxu0 %v4145
      %v4362 = vpop.f32.mrb[0].mxu0
      %v4363 = vadd.f32 %v4058, %v4362
      %v4364 = vpop.f32.mrb[0].mxu0
      %4365 = vmatprep.mubr.f32.mxu0 0.0
      %4366 = vmatmul.mubr.f32.gmra.mrb[0].mxu0 %v4148
      %v4367 = vpop.f32.mrb[0].mxu0
      %v4368 = vadd.f32 %v4058, %v4367
      %v4369 = vpop.f32.mrb[0].mxu0
      %4370 = vmatprep.mubr.f32.mxu0 0.0
      %4371 = vmatmul.mubr.f32.gmra.mrb[0].mxu0 %v4151
      %v4372 = vpop.f32.mrb[0].mxu0
      %v4373 = vadd.f32 %v4058, %v4372
      %v4374 = vpop.f32.mrb[0].mxu0
      %4375 = vmatprep.mubr.f32.mxu0 0.0
      %4376 = vmatmul.mubr.f32.gmra.mrb[0].mxu0 %v4154
      %v4377 = vpop.f32.mrb[0].mxu0
      %v4378 = vadd.f32 %v4058, %v4377
      %v4379 = vpop.f32.mrb[0].mxu0
      %4380 = vdwg.mxu0
      %v4381 = vmax.f32 %v4223, 0.0
      %v4382 = vmax.f32 %v4228, 0.0
      %v4383 = vmax.f32 %v4233, 0.0
      %v4384 = vmax.f32 %v4238, 0.0
      %v4385 = vmax.f32 %v4243, 0.0
      %v4386 = vmax.f32 %v4248, 0.0
      %v4387 = vmax.f32 %v4253, 0.0
      %v4388 = vmax.f32 %v4258, 0.0
      %v4389 = vmax.f32 %v4263, 0.0
      %v4390 = vmax.f32 %v4268, 0.0
      %v4391 = vmax.f32 %v4273, 0.0
      %v4392 = vmax.f32 %v4278, 0.0
      %v4393 = vmax.f32 %v4283, 0.0
      %v4394 = vmax.f32 %v4288, 0.0
      %v4395 = vmax.f32 %v4293, 0.0
      %v4396 = vmax.f32 %v4298, 0.0
      %v4397 = vmax.f32 %v4303, 0.0
      %v4398 = vmax.f32 %v4308, 0.0
      %v4399 = vmax.f32 %v4313, 0.0
      %v4400 = vmax.f32 %v4318, 0.0
      %v4401 = vmax.f32 %v4323, 0.0
      %v4402 = vmax.f32 %v4328, 0.0
      %v4403 = vmax.f32 %v4333, 0.0
      %v4404 = vmax.f32 %v4338, 0.0
      %v4405 = vmax.f32 %v4343, 0.0
      %v4406 = vmax.f32 %v4348, 0.0
      %v4407 = vmax.f32 %v4353, 0.0
      %v4408 = vmax.f32 %v4358, 0.0
      %v4409 = vmax.f32 %v4363, 0.0
      %v4410 = vmax.f32 %v4368, 0.0
      %v4411 = vmax.f32 %v4373, 0.0
      %v4412 = vmax.f32 %v4378, 0.0
      %4413 = vst.msk [vmem:[%s298] sm:$0xff] %vm2020, %v4381
      %4414 = vst.msk [vmem:[%s298 + $0x8] sm:$0xff] %vm2020, %v4382
      %4415 = vst.msk [vmem:[%s298 + $0x10] sm:$0xff] %vm2020, %v4383
      %4416 = vst.msk [vmem:[%s298 + $0x18] sm:$0xff] %vm2020, %v4384
      %4417 = vst.msk [vmem:[%s298 + $0x20] sm:$0xff] %vm2020, %v4385
      %4418 = vst.msk [vmem:[%s298 + $0x28] sm:$0xff] %vm2020, %v4386
      %4419 = vst.msk [vmem:[%s298 + $0x30] sm:$0xff] %vm2020, %v4387
      %4420 = vst.msk [vmem:[%s298 + $0x38] sm:$0xff] %vm2020, %v4388
      %4421 = vst.msk [vmem:[%s298 + $0x40] sm:$0xff] %vm2020, %v4389
      %4422 = vst.msk [vmem:[%s298 + $0x48] sm:$0xff] %vm2020, %v4390
      %4423 = vst.msk [vmem:[%s298 + $0x50] sm:$0xff] %vm2020, %v4391
      %4424 = vst.msk [vmem:[%s298 + $0x58] sm:$0xff] %vm2020, %v4392
      %4425 = vst.msk [vmem:[%s298 + $0x60] sm:$0xff] %vm2020, %v4393
      %4426 = vst.msk [vmem:[%s298 + $0x68] sm:$0xff] %vm2020, %v4394
      %4427 = vst.msk [vmem:[%s298 + $0x70] sm:$0xff] %vm2020, %v4395
      %4428 = vst.msk [vmem:[%s298 + $0x78] sm:$0xff] %vm2020, %v4396
      %4429 = vst.msk [vmem:[%s298 + $0x80] sm:$0xff] %vm2020, %v4397
      %4430 = vst.msk [vmem:[%s298 + $0x88] sm:$0xff] %vm2020, %v4398
      %4431 = vst.msk [vmem:[%s298 + $0x90] sm:$0xff] %vm2020, %v4399
      %4432 = vst.msk [vmem:[%s298 + $0x98] sm:$0xff] %vm2020, %v4400
      %4433 = vst.msk [vmem:[%s298 + $0xa0] sm:$0xff] %vm2020, %v4401
      %4434 = vst.msk [vmem:[%s298 + $0xa8] sm:$0xff] %vm2020, %v4402
      %4435 = vst.msk [vmem:[%s298 + $0xb0] sm:$0xff] %vm2020, %v4403
      %4436 = vst.msk [vmem:[%s298 + $0xb8] sm:$0xff] %vm2020, %v4404
      %4437 = vst.msk [vmem:[%s298 + $0xc0] sm:$0xff] %vm2020, %v4405
      %4438 = vst.msk [vmem:[%s298 + $0xc8] sm:$0xff] %vm2020, %v4406
      %4439 = vst.msk [vmem:[%s298 + $0xd0] sm:$0xff] %vm2020, %v4407
      %4440 = vst.msk [vmem:[%s298 + $0xd8] sm:$0xff] %vm2020, %v4408
      %4441 = vst.msk [vmem:[%s298 + $0xe0] sm:$0xff] %vm2020, %v4409
      %4442 = vst.msk [vmem:[%s298 + $0xe8] sm:$0xff] %vm2020, %v4410
      %4443 = vst.msk [vmem:[%s298 + $0xf0] sm:$0xff] %vm2020, %v4411
      %4444 = vst.msk [vmem:[%s298 + $0xf8] sm:$0xff] %vm2020, %v4412
      %p4445 = scmp.lt.s32.totalorder %s18, 1
      %s4446 = scalar_select %p4445, %s18, 1
      %s4447 = smul.addr %s4446, 32
      %s4448 = smul.addr %s4447, 8
      %s4449 = scalar_lea.vmem %s7, %s4448
      // Predicated region
      $region49: #{tpu_custom_call.1} parent=47 // pred_check
        %p4450 = pneg %p193
      $region50: #{tpu_custom_call.1} parent=47 // pred_check_branch
        %4452 = sbr.rel (%p4450) target = $region52
      $region51: #{tpu_custom_call.1} parent=47 // pred_region
        _
      $region52: #{tpu_custom_call.1} parent=47 // pred_fallthru
        _
    $region48: #{tpu_custom_call.1} parent=5 // pred_fallthru
      _
    %p4453 = scmp.le.s32.totalorder 2, %s13
    // Predicated region
    $region53: #{tpu_custom_call.1} parent=5 // pred_check
      %p4454 = pneg %p4453
    $region54: #{tpu_custom_call.1} parent=5 // pred_check_branch
      %4456 = sbr.rel (%p4454) target = $region56
    $region55: #{tpu_custom_call.1} parent=5 // pred_region
      %s4457 = ssub.s32 %s13, 2
      // Predicated region
      $region57: #{tpu_custom_call.1} parent=55 // pred_check
        %p4458 = pneg %p199
      $region58: #{tpu_custom_call.1} parent=55 // pred_check_branch
        %4460 = sbr.rel (%p4458) target = $region60
      $region59: #{tpu_custom_call.1} parent=55 // pred_region
        %p4461 = scmp.lt.s32.totalorder %s19, 1
        %s4462 = scalar_select %p4461, %s19, 1
        %s4463 = smul.addr %s4462, 32
        %s4464 = smul.addr %s4463, 8
        %s4465 = scalar_lea.vmem %s7, %s4464
      $region60: #{tpu_custom_call.1} parent=55 // pred_fallthru
        _
    $region56: #{tpu_custom_call.1} parent=5 // pred_fallthru
      _
  $region6: #{tpu_custom_call.1} parent=0 // loop_footer
    %s17 = sadd.s32 1, %s13
  $region7: #{tpu_custom_call.1} parent=0 // loop_footer_branch
    %12 = sbr.rel target = $region3
  $region8: #{tpu_custom_call.1} parent=0 // loop_exit
    _

</llo_original>
